<compile_context>
chip_gen: v5e
topology: v5e:2x2
jax: 0.10.0
libtpu: 0.0.40
codegen_flags: <defaults>
</compile_context>

<pallas_src>
import functools

import jax
import jax.numpy as jnp
from jax.experimental import pallas as pl
from jax.experimental.pallas import tpu as pltpu

EPS = 1e-5  # nn.BatchNorm2d default eps


def _round_up(x, m):
    return ((x + m - 1) // m) * m


def _vmem_specs(n):
    return [pl.BlockSpec(memory_space=pltpu.MemorySpace.VMEM) for _ in range(n)]


# ----------------------------- Pallas kernels ------------------------------

def _convt_phase_matmul_kernel(x_ref, w_ref, b_ref, o_ref):
    # Sub-pixel phase decomposition of ConvTranspose2d:
    #   o[(ki*k + kj)*Co + co, m] = sum_ci w[p, ci] * x[ci, m] + b[p]
    # Channels on sublanes, flattened spatial (N*H*W) on lanes: lane-dense.
    o_ref[...] = (
        jnp.dot(w_ref[...], x_ref[...], preferred_element_type=jnp.float32)
        + b_ref[...]
    )


def _fused_conv_chain_kernel(mask_ref, a0_ref, w1_ref, g1_ref, b1_ref,
                             wm_ref, gm_ref, bm_ref, wf_ref, gf_ref, bf_ref,
                             o_ref, *, Co, G, WP, L_comp, n_mid, count,
                             out_act):
    """All [Conv3x3 + BatchNorm(train) + activation] layers fused in VMEM.

    Activation layout: (Cmax channels, LB flat padded spatial lanes); o_ref
    doubles as the working buffer.  Flat lane of padded position (n, y, x) is
    G + (n*HP + y)*WP + x, so a 3x3 tap (dy, dx) is a lane shift of dy*WP+dx.
    Guard lanes (width G >= WP+1, multiple of 128) keep every shifted window
    in-bounds; padding/guard lanes are re-zeroed via `mask` after each layer.
    """
    o_ref[...] = a0_ref[...]          # (Cmax, LB) working activation buffer
    m = mask_ref[...]                 # (1, L_comp): 1.0 at interior positions
    inv_count = 1.0 / count

    def layer(w_ref, g_ref, be_ref, act):
        acc = None
        t = 0
        for dy in (-1, 0, 1):
            for dx in (-1, 0, 1):
                off = dy * WP + dx
                xs = o_ref[:, G + off:G + off + L_comp]   # (Cmax, L_comp)
                wt = w_ref[t * Co:(t + 1) * Co, :]        # (Co, Cmax)
                d = jnp.dot(wt, xs, preferred_element_type=jnp.float32)
                acc = d if acc is None else acc + d
                t += 1
        # Training-mode BatchNorm: masked single-pass stats over N*Ho*Wo.
        s1 = jnp.sum(acc * m, axis=1, keepdims=True)        # (Co, 1)
        s2 = jnp.sum(acc * acc * m, axis=1, keepdims=True)  # (Co, 1)
        mean = s1 * inv_count
        var = jnp.maximum(s2 * inv_count - mean * mean, 0.0)
        y = (acc - mean) * jax.lax.rsqrt(var + EPS) * g_ref[...] + be_ref[...]
        if act == "relu":
            y = jnp.maximum(y, 0.0)
        else:  # sigmoid: exp (EUP) + approximate reciprocal (EUP slot)
            y = pl.reciprocal(1.0 + jnp.exp(-y), approx=True)
        # Re-zero padding/guard lanes so the next layer sees clean zero padding.
        o_ref[0:Co, G:G + L_comp] = y * m   # 128-lane aligned full-width store

    layer(w1_ref, g1_ref, b1_ref, "relu")
    for _ in range(n_mid):            # shared-parameter middle block, repeated
        layer(wm_ref, gm_ref, bm_ref, "relu")
    layer(wf_ref, gf_ref, bf_ref, out_act)


# --------------------------- pallas_call wrappers ---------------------------

def convt_phase_matmul(x_cm, w_mat, b_vec):
    P, Cin = w_mat.shape
    M0 = x_cm.shape[1]
    return pl.pallas_call(
        _convt_phase_matmul_kernel,
        out_shape=jax.ShapeDtypeStruct((P, M0), jnp.float32),
        in_specs=_vmem_specs(3),
        out_specs=pl.BlockSpec(memory_space=pltpu.MemorySpace.VMEM),
        compiler_params=pltpu.CompilerParams(vmem_limit_bytes=32 * 1024 * 1024),
        cost_estimate=pl.CostEstimate(
            flops=2 * P * Cin * M0, transcendentals=0,
            bytes_accessed=4 * (x_cm.size + w_mat.size + b_vec.size + P * M0)),
    )(x_cm, w_mat, b_vec)


def fused_conv_chain(mask, a0, prep, *, Co, G, WP, L_comp, n_mid, count,
                     out_act):
    Cmax, LB = a0.shape
    kern = functools.partial(_fused_conv_chain_kernel, Co=Co, G=G, WP=WP,
                             L_comp=L_comp, n_mid=n_mid, count=count,
                             out_act=out_act)
    n_layers = 2 + n_mid
    flops = 2 * 9 * Co * Cmax * L_comp * n_layers
    bytes_accessed = 4 * (mask.size + a0.size + Cmax * LB
                          + 3 * 9 * Co * Cmax + 6 * Co)
    return pl.pallas_call(
        kern,
        out_shape=jax.ShapeDtypeStruct((Cmax, LB), jnp.float32),
        in_specs=_vmem_specs(11),
        out_specs=pl.BlockSpec(memory_space=pltpu.MemorySpace.VMEM),
        compiler_params=pltpu.CompilerParams(vmem_limit_bytes=32 * 1024 * 1024),
        cost_estimate=pl.CostEstimate(flops=flops,
                                      transcendentals=Co * L_comp,
                                      bytes_accessed=bytes_accessed),
    )(mask, a0, prep["c1_w"], prep["bn1_g"], prep["bn1_b"],
      prep["cm_w"], prep["bnm_g"], prep["bnm_b"],
      prep["cf_w"], prep["bnf_g"], prep["bnf_b"])


# ------------------------------ parameters ---------------------------------

def init_params(key, in_channels, out_channels, kernel_size):
    ks = jax.random.split(key, 8)

    def uni(k, shape, fan_in):
        b = 1.0 / (fan_in ** 0.5)
        return jax.random.uniform(k, shape, jnp.float32, -b, b)

    Ci, Co, K = in_channels, out_channels, kernel_size
    return {
        "ct_w": uni(ks[0], (Ci, Ci, K, K), Ci * K * K),  # ConvTranspose2d(Ci,Ci)
        "ct_b": uni(ks[1], (Ci,), Ci * K * K),
        "c1_w": uni(ks[2], (Co, Ci, 3, 3), Ci * 9),      # Conv2d(Ci, Co, 3, p=1)
        "c1_b": uni(ks[3], (Co,), Ci * 9),
        "bn1_g": jnp.ones((Co,), jnp.float32),
        "bn1_b": jnp.zeros((Co,), jnp.float32),
        "cm_w": uni(ks[4], (Co, Co, 3, 3), Co * 9),      # shared middle block
        "cm_b": uni(ks[5], (Co,), Co * 9),
        "bnm_g": jnp.ones((Co,), jnp.float32),
        "bnm_b": jnp.zeros((Co,), jnp.float32),
        "cf_w": uni(ks[6], (Co, Co, 3, 3), Co * 9),      # final conv
        "cf_b": uni(ks[7], (Co,), Co * 9),
        "bnf_g": jnp.ones((Co,), jnp.float32),
        "bnf_b": jnp.zeros((Co,), jnp.float32),
    }


def prepare_params(params, kernel_size):
    """One-time re-layout of weights into kernel/matmul form (hoisted out of
    the forward pass and out of the repeated middle-block loop)."""
    Ci = params["ct_w"].shape[0]
    Co = params["c1_w"].shape[0]
    K = kernel_size
    Cmax = max(Ci, Co)

    def conv_to_taps(w):
        co, ci = w.shape[0], w.shape[1]
        # row index = (ky*3 + kx)*co + o ; columns = input channel (padded)
        w9 = jnp.transpose(w, (2, 3, 0, 1)).reshape(9 * co, ci)
        if ci < Cmax:
            w9 = jnp.pad(w9, ((0, 0), (0, Cmax - ci)))
        return w9

    return {
        # ConvTranspose2d weight -> (K*K*Ci, Ci) phase matrix; bias per phase.
        "ct_w": jnp.transpose(params["ct_w"], (2, 3, 1, 0)).reshape(K * K * Ci,
                                                                    Ci),
        "ct_b": jnp.tile(params["ct_b"], K * K).reshape(K * K * Ci, 1),
        # Conv biases (c1_b/cm_b/cf_b) are intentionally dropped: a per-channel
        # bias before training-mode BatchNorm cancels exactly in (y - mean(y)).
        "c1_w": conv_to_taps(params["c1_w"]),
        "cm_w": conv_to_taps(params["cm_w"]),
        "cf_w": conv_to_taps(params["cf_w"]),
        "bn1_g": params["bn1_g"].reshape(Co, 1),
        "bn1_b": params["bn1_b"].reshape(Co, 1),
        "bnm_g": params["bnm_g"].reshape(Co, 1),
        "bnm_b": params["bnm_b"].reshape(Co, 1),
        "bnf_g": params["bnf_g"].reshape(Co, 1),
        "bnf_b": params["bnf_b"].reshape(Co, 1),
    }


# ------------------------------ the module ---------------------------------

def same_decoder_forward(x_nchw, prep, *, kernel_size, stride, num_layers,
                         out_activation="relu"):
    N, Ci, Hin, Win = x_nchw.shape
    K, s = kernel_size, stride
    Co = prep["bn1_g"].shape[0]
    Cmax = prep["c1_w"].shape[1]
    x = x_nchw.astype(jnp.float32)

    # --- ConvTranspose2d(Ci, Ci, K, s): Pallas phase matmul + sub-pixel fold.
    x_cm = jnp.transpose(x, (1, 0, 2, 3)).reshape(Ci, N * Hin * Win)
    bias_in_kernel = (K == s)  # every output position covered by exactly 1 phase
    ct_b = prep["ct_b"] if bias_in_kernel else jnp.zeros_like(prep["ct_b"])
    yp = convt_phase_matmul(x_cm, prep["ct_w"], ct_b)  # (K*K*Ci, N*Hin*Win)

    Ho = (Hin - 1) * s + K
    Wo = (Win - 1) * s + K
    y6 = yp.reshape(K, K, Ci, N, Hin, Win)
    ct = jnp.zeros((Ci, N, Ho, Wo), jnp.float32)
    for ki in range(K):        # sub-pixel interleave: XLA layout plumbing only
        for kj in range(K):
            ct = ct.at[:, :, ki:ki + (Hin - 1) * s + 1:s,
                       kj:kj + (Win - 1) * s + 1:s].add(y6[ki, kj])
    if not bias_in_kernel:     # general k != s: add bias once, after the fold
        ct = ct + prep["ct_b"][:Ci].reshape(Ci, 1, 1, 1)

    # --- flat, lane-dense, zero-padded layout for the fused conv chain ---
    HP, WP = Ho + 2, Wo + 2                    # +1 zero-pad ring for 3x3 convs
    L_core = N * HP * WP
    G = _round_up(WP + 1, 128)                 # guard >= max tap shift, aligned
    L_comp = _round_up(L_core, 128)            # lane-aligned compute width
    LB = G + L_comp + G
    a = jnp.pad(ct, ((0, Cmax - Ci), (0, 0), (1, 1), (1, 1)))  # (Cmax,N,HP,WP)
    a0 = jnp.pad(a.reshape(Cmax, L_core), ((0, 0), (G, LB - G - L_core)))
    mask = jnp.pad(jnp.ones((N, Ho, Wo), jnp.float32), ((0, 0), (1, 1), (1, 1)))
    mask = jnp.pad(mask.reshape(1, L_core), ((0, 0), (0, L_comp - L_core)))

    out_act = "relu" if out_activation == "relu" else "sigmoid"
    out_buf = fused_conv_chain(mask, a0, prep, Co=Co, G=G, WP=WP,
                               L_comp=L_comp, n_mid=num_layers - 2,
                               count=N * Ho * Wo, out_act=out_act)

    y = out_buf[:Co, G:G + L_core].reshape(Co, N, HP, WP)
    y = y[:, :, 1:HP - 1, 1:WP - 1]            # drop the zero-pad ring
    return jnp.transpose(y, (1, 0, 2, 3))      # -> NCHW


# ------------------------- pure-XLA reference (no Pallas) -------------------

def reference_forward(x, params, kernel_size, stride, num_layers,
                      out_activation):
    K, s = kernel_size, stride
    w_conv = jnp.transpose(jnp.flip(params["ct_w"], (2, 3)), (1, 0, 2, 3))
    y = jax.lax.conv_general_dilated(
        x.astype(jnp.float32), w_conv, window_strides=(1, 1),
        padding=[(K - 1, K - 1), (K - 1, K - 1)], lhs_dilation=(s, s),
        dimension_numbers=("NCHW", "OIHW", "NCHW"))
    y = y + params["ct_b"].reshape(1, -1, 1, 1)

    def block(y, w, b, g, be, act):
        z = jax.lax.conv_general_dilated(
            y, w, window_strides=(1, 1), padding=[(1, 1), (1, 1)],
            dimension_numbers=("NCHW", "OIHW", "NCHW"))
        z = z + b.reshape(1, -1, 1, 1)
        mean = jnp.mean(z, axis=(0, 2, 3), keepdims=True)
        var = jnp.mean((z - mean) ** 2, axis=(0, 2, 3), keepdims=True)
        z = (z - mean) * jax.lax.rsqrt(var + EPS)
        z = z * g.reshape(1, -1, 1, 1) + be.reshape(1, -1, 1, 1)
        return jnp.maximum(z, 0.0) if act == "relu" else jax.nn.sigmoid(z)

    y = block(y, params["c1_w"], params["c1_b"], params["bn1_g"],
              params["bn1_b"], "relu")
    for _ in range(num_layers - 2):
        y = block(y, params["cm_w"], params["cm_b"], params["bnm_g"],
                  params["bnm_b"], "relu")
    act = "relu" if out_activation == "relu" else "sigmoid"
    return block(y, params["cf_w"], params["cf_b"], params["bnf_g"],
                 params["bnf_b"], act)


# --------------------------------- main -------------------------------------

if __name__ == "__main__":
    in_channels, out_channels = 4, 8
    kernel_size, stride, num_layers = 2, 2, 3
    out_activation = "sigmoid"

    key = jax.random.PRNGKey(0)
    kx, kp = jax.random.split(key)
    x = jax.random.normal(kx, (2, in_channels, 8, 8), jnp.float32)  # NCHW
    params = init_params(kp, in_channels, out_channels, kernel_size)
    prep = prepare_params(params, kernel_size)   # weight re-layouts hoisted

    fwd = jax.jit(functools.partial(
        same_decoder_forward, kernel_size=kernel_size, stride=stride,
        num_layers=num_layers, out_activation=out_activation))
    out = fwd(x, prep)
    jax.block_until_ready(out)
    # ConvT(k=2, s=2): 8 -> 16 ; subsequent 3x3 pad=1 convs keep 16x16.
    assert out.shape == (2, out_channels, 16, 16), out.shape

    ref = reference_forward(x, params, kernel_size, stride, num_layers,
                            out_activation)
    err = float(jnp.max(jnp.abs(out - ref)))
    assert err < 5e-2, f"kernel/reference mismatch: max abs err = {err}"
    print("KERNEL_OK")
</pallas_src>

<mosaic_0001>
module attributes {stable_mosaic.version = 11 : i64} {
  func.func @_convt_phase_matmul_kernel(%arg0: memref<4x128xf32, #tpu.memory_space<vmem>>, %arg1: memref<16x4xf32, #tpu.memory_space<vmem>>, %arg2: memref<16x1xf32, #tpu.memory_space<vmem>>, %arg3: memref<16x128xf32, #tpu.memory_space<vmem>>) attributes {dimension_semantics = [], scalar_prefetch = 0 : i64, scratch_operands = 0 : i64, tpu.core_type = #tpu.core_type<tc>} {
    %c0 = arith.constant 0 : index
    %c0_0 = arith.constant 0 : index
    %0 = vector.load %arg1[%c0, %c0_0] : memref<16x4xf32, #tpu.memory_space<vmem>>, vector<16x4xf32>
    %c0_1 = arith.constant 0 : index
    %c0_2 = arith.constant 0 : index
    %1 = vector.load %arg0[%c0_1, %c0_2] : memref<4x128xf32, #tpu.memory_space<vmem>>, vector<4x128xf32>
    %cst = arith.constant dense<0.000000e+00> : vector<16x128xf32>
    %2 = tpu.matmul %0, %1, %cst {dimension_numbers = #tpu.dot_dimension_numbers<[1], [0], [0], [1], [0, 0, 1, 1], [], []>} : vector<16x4xf32>, vector<4x128xf32>, vector<16x128xf32> -> vector<16x128xf32>
    %c0_3 = arith.constant 0 : index
    %c0_4 = arith.constant 0 : index
    %3 = vector.load %arg2[%c0_3, %c0_4] : memref<16x1xf32, #tpu.memory_space<vmem>>, vector<16x1xf32>
    %4 = vector.broadcast %3 : vector<16x1xf32> to vector<16x128xf32>
    %5 = arith.addf %2, %4 : vector<16x128xf32>
    %c0_5 = arith.constant 0 : index
    %c0_6 = arith.constant 0 : index
    %6 = vector.load %arg3[%c0_5, %c0_6] : memref<16x128xf32, #tpu.memory_space<vmem>>, vector<16x128xf32>
    tpu.vector_store %arg3[%c0_5, %c0_6], %5 {strides = array<i32>} : memref<16x128xf32, #tpu.memory_space<vmem>>, vector<16x128xf32>,
    return
  }
}

module attributes {stable_mosaic.version = 11 : i64} {
  func.func @_fused_conv_chain_kernel(%arg0: memref<1x768xf32, #tpu.memory_space<vmem>>, %arg1: memref<8x1024xf32, #tpu.memory_space<vmem>>, %arg2: memref<72x8xf32, #tpu.memory_space<vmem>>, %arg3: memref<8x1xf32, #tpu.memory_space<vmem>>, %arg4: memref<8x1xf32, #tpu.memory_space<vmem>>, %arg5: memref<72x8xf32, #tpu.memory_space<vmem>>, %arg6: memref<8x1xf32, #tpu.memory_space<vmem>>, %arg7: memref<8x1xf32, #tpu.memory_space<vmem>>, %arg8: memref<72x8xf32, #tpu.memory_space<vmem>>, %arg9: memref<8x1xf32, #tpu.memory_space<vmem>>, %arg10: memref<8x1xf32, #tpu.memory_space<vmem>>, %arg11: memref<8x1024xf32, #tpu.memory_space<vmem>>) attributes {dimension_semantics = [], scalar_prefetch = 0 : i64, scratch_operands = 0 : i64, tpu.core_type = #tpu.core_type<tc>} {
    %c0 = arith.constant 0 : index
    %c0_0 = arith.constant 0 : index
    %0 = vector.load %arg1[%c0, %c0_0] : memref<8x1024xf32, #tpu.memory_space<vmem>>, vector<8x1024xf32>
    %c0_1 = arith.constant 0 : index
    %c0_2 = arith.constant 0 : index
    %1 = vector.load %arg11[%c0_1, %c0_2] : memref<8x1024xf32, #tpu.memory_space<vmem>>, vector<8x1024xf32>
    tpu.vector_store %arg11[%c0_1, %c0_2], %0 {strides = array<i32>} : memref<8x1024xf32, #tpu.memory_space<vmem>>, vector<8x1024xf32>,
    %c0_3 = arith.constant 0 : index
    %c0_4 = arith.constant 0 : index
    %2 = vector.load %arg0[%c0_3, %c0_4] : memref<1x768xf32, #tpu.memory_space<vmem>>, vector<1x768xf32>
    %c0_5 = arith.constant 0 : index
    %c109 = arith.constant 109 : index
    %3 = vector.load %arg11[%c0_5, %c109] : memref<8x1024xf32, #tpu.memory_space<vmem>>, vector<8x768xf32>
    %c0_6 = arith.constant 0 : index
    %c0_7 = arith.constant 0 : index
    %4 = vector.load %arg2[%c0_6, %c0_7] : memref<72x8xf32, #tpu.memory_space<vmem>>, vector<8x8xf32>
    %cst = arith.constant dense<0.000000e+00> : vector<8x768xf32>
    %5 = tpu.matmul %4, %3, %cst {dimension_numbers = #tpu.dot_dimension_numbers<[1], [0], [0], [1], [0, 0, 1, 1], [], []>} : vector<8x8xf32>, vector<8x768xf32>, vector<8x768xf32> -> vector<8x768xf32>
    %c0_8 = arith.constant 0 : index
    %c110 = arith.constant 110 : index
    %6 = vector.load %arg11[%c0_8, %c110] : memref<8x1024xf32, #tpu.memory_space<vmem>>, vector<8x768xf32>
    %c8 = arith.constant 8 : index
    %c0_9 = arith.constant 0 : index
    %7 = vector.load %arg2[%c8, %c0_9] : memref<72x8xf32, #tpu.memory_space<vmem>>, vector<8x8xf32>
    %cst_10 = arith.constant dense<0.000000e+00> : vector<8x768xf32>
    %8 = tpu.matmul %7, %6, %cst_10 {dimension_numbers = #tpu.dot_dimension_numbers<[1], [0], [0], [1], [0, 0, 1, 1], [], []>} : vector<8x8xf32>, vector<8x768xf32>, vector<8x768xf32> -> vector<8x768xf32>
    %9 = arith.addf %5, %8 : vector<8x768xf32>
    %c0_11 = arith.constant 0 : index
    %c111 = arith.constant 111 : index
    %10 = vector.load %arg11[%c0_11, %c111] : memref<8x1024xf32, #tpu.memory_space<vmem>>, vector<8x768xf32>
    %c16 = arith.constant 16 : index
    %c0_12 = arith.constant 0 : index
    %11 = vector.load %arg2[%c16, %c0_12] : memref<72x8xf32, #tpu.memory_space<vmem>>, vector<8x8xf32>
    %cst_13 = arith.constant dense<0.000000e+00> : vector<8x768xf32>
    %12 = tpu.matmul %11, %10, %cst_13 {dimension_numbers = #tpu.dot_dimension_numbers<[1], [0], [0], [1], [0, 0, 1, 1], [], []>} : vector<8x8xf32>, vector<8x768xf32>, vector<8x768xf32> -> vector<8x768xf32>
    %13 = arith.addf %9, %12 : vector<8x768xf32>
    %c0_14 = arith.constant 0 : index
    %c127 = arith.constant 127 : index
    %14 = vector.load %arg11[%c0_14, %c127] : memref<8x1024xf32, #tpu.memory_space<vmem>>, vector<8x768xf32>
    %c24 = arith.constant 24 : index
    %c0_15 = arith.constant 0 : index
    %15 = vector.load %arg2[%c24, %c0_15] : memref<72x8xf32, #tpu.memory_space<vmem>>, vector<8x8xf32>
    %cst_16 = arith.constant dense<0.000000e+00> : vector<8x768xf32>
    %16 = tpu.matmul %15, %14, %cst_16 {dimension_numbers = #tpu.dot_dimension_numbers<[1], [0], [0], [1], [0, 0, 1, 1], [], []>} : vector<8x8xf32>, vector<8x768xf32>, vector<8x768xf32> -> vector<8x768xf32>
    %17 = arith.addf %13, %16 : vector<8x768xf32>
    %c0_17 = arith.constant 0 : index
    %c128 = arith.constant 128 : index
    %18 = vector.load %arg11[%c0_17, %c128] : memref<8x1024xf32, #tpu.memory_space<vmem>>, vector<8x768xf32>
    %c32 = arith.constant 32 : index
    %c0_18 = arith.constant 0 : index
    %19 = vector.load %arg2[%c32, %c0_18] : memref<72x8xf32, #tpu.memory_space<vmem>>, vector<8x8xf32>
    %cst_19 = arith.constant dense<0.000000e+00> : vector<8x768xf32>
    %20 = tpu.matmul %19, %18, %cst_19 {dimension_numbers = #tpu.dot_dimension_numbers<[1], [0], [0], [1], [0, 0, 1, 1], [], []>} : vector<8x8xf32>, vector<8x768xf32>, vector<8x768xf32> -> vector<8x768xf32>
    %21 = arith.addf %17, %20 : vector<8x768xf32>
    %c0_20 = arith.constant 0 : index
    %c129 = arith.constant 129 : index
    %22 = vector.load %arg11[%c0_20, %c129] : memref<8x1024xf32, #tpu.memory_space<vmem>>, vector<8x768xf32>
    %c40 = arith.constant 40 : index
    %c0_21 = arith.constant 0 : index
    %23 = vector.load %arg2[%c40, %c0_21] : memref<72x8xf32, #tpu.memory_space<vmem>>, vector<8x8xf32>
    %cst_22 = arith.constant dense<0.000000e+00> : vector<8x768xf32>
    %24 = tpu.matmul %23, %22, %cst_22 {dimension_numbers = #tpu.dot_dimension_numbers<[1], [0], [0], [1], [0, 0, 1, 1], [], []>} : vector<8x8xf32>, vector<8x768xf32>, vector<8x768xf32> -> vector<8x768xf32>
    %25 = arith.addf %21, %24 : vector<8x768xf32>
    %c0_23 = arith.constant 0 : index
    %c145 = arith.constant 145 : index
    %26 = vector.load %arg11[%c0_23, %c145] : memref<8x1024xf32, #tpu.memory_space<vmem>>, vector<8x768xf32>
    %c48 = arith.constant 48 : index
    %c0_24 = arith.constant 0 : index
    %27 = vector.load %arg2[%c48, %c0_24] : memref<72x8xf32, #tpu.memory_space<vmem>>, vector<8x8xf32>
    %cst_25 = arith.constant dense<0.000000e+00> : vector<8x768xf32>
    %28 = tpu.matmul %27, %26, %cst_25 {dimension_numbers = #tpu.dot_dimension_numbers<[1], [0], [0], [1], [0, 0, 1, 1], [], []>} : vector<8x8xf32>, vector<8x768xf32>, vector<8x768xf32> -> vector<8x768xf32>
    %29 = arith.addf %25, %28 : vector<8x768xf32>
    %c0_26 = arith.constant 0 : index
    %c146 = arith.constant 146 : index
    %30 = vector.load %arg11[%c0_26, %c146] : memref<8x1024xf32, #tpu.memory_space<vmem>>, vector<8x768xf32>
    %c56 = arith.constant 56 : index
    %c0_27 = arith.constant 0 : index
    %31 = vector.load %arg2[%c56, %c0_27] : memref<72x8xf32, #tpu.memory_space<vmem>>, vector<8x8xf32>
    %cst_28 = arith.constant dense<0.000000e+00> : vector<8x768xf32>
    %32 = tpu.matmul %31, %30, %cst_28 {dimension_numbers = #tpu.dot_dimension_numbers<[1], [0], [0], [1], [0, 0, 1, 1], [], []>} : vector<8x8xf32>, vector<8x768xf32>, vector<8x768xf32> -> vector<8x768xf32>
    %33 = arith.addf %29, %32 : vector<8x768xf32>
    %c0_29 = arith.constant 0 : index
    %c147 = arith.constant 147 : index
    %34 = vector.load %arg11[%c0_29, %c147] : memref<8x1024xf32, #tpu.memory_space<vmem>>, vector<8x768xf32>
    %c64 = arith.constant 64 : index
    %c0_30 = arith.constant 0 : index
    %35 = vector.load %arg2[%c64, %c0_30] : memref<72x8xf32, #tpu.memory_space<vmem>>, vector<8x8xf32>
    %cst_31 = arith.constant dense<0.000000e+00> : vector<8x768xf32>
    %36 = tpu.matmul %35, %34, %cst_31 {dimension_numbers = #tpu.dot_dimension_numbers<[1], [0], [0], [1], [0, 0, 1, 1], [], []>} : vector<8x8xf32>, vector<8x768xf32>, vector<8x768xf32> -> vector<8x768xf32>
    %37 = arith.addf %33, %36 : vector<8x768xf32>
    %38 = vector.broadcast %2 : vector<1x768xf32> to vector<8x768xf32>
    %39 = arith.mulf %37, %38 : vector<8x768xf32>
    %cst_32 = arith.constant dense<0.000000e+00> : vector<8xf32>
    %40 = vector.multi_reduction <add>, %39, %cst_32 [1] : vector<8x768xf32> to vector<8xf32>
    %41 = vector.shape_cast %40 : vector<8xf32> to vector<8x1xf32>
    %42 = arith.mulf %37, %37 : vector<8x768xf32>
    %43 = vector.broadcast %2 : vector<1x768xf32> to vector<8x768xf32>
    %44 = arith.mulf %42, %43 : vector<8x768xf32>
    %cst_33 = arith.constant dense<0.000000e+00> : vector<8xf32>
    %45 = vector.multi_reduction <add>, %44, %cst_33 [1] : vector<8x768xf32> to vector<8xf32>
    %46 = vector.shape_cast %45 : vector<8xf32> to vector<8x1xf32>
    %cst_34 = arith.constant 0.001953125 : f32
    %47 = vector.broadcast %cst_34 : f32 to vector<8x1xf32>
    %48 = arith.mulf %41, %47 : vector<8x1xf32>
    %cst_35 = arith.constant 0.001953125 : f32
    %49 = vector.broadcast %cst_35 : f32 to vector<8x1xf32>
    %50 = arith.mulf %46, %49 : vector<8x1xf32>
    %51 = arith.mulf %48, %48 : vector<8x1xf32>
    %52 = arith.subf %50, %51 : vector<8x1xf32>
    %cst_36 = arith.constant 0.000000e+00 : f32
    %53 = vector.broadcast %cst_36 : f32 to vector<8x1xf32>
    %54 = arith.maximumf %52, %53 : vector<8x1xf32>
    %55 = vector.broadcast %48 : vector<8x1xf32> to vector<8x768xf32>
    %56 = arith.subf %37, %55 : vector<8x768xf32>
    %cst_37 = arith.constant 9.99999974E-6 : f32
    %57 = vector.broadcast %cst_37 : f32 to vector<8x1xf32>
    %58 = arith.addf %54, %57 : vector<8x1xf32>
    %59 = math.rsqrt %58 : vector<8x1xf32>
    %60 = vector.broadcast %59 : vector<8x1xf32> to vector<8x768xf32>
    %61 = arith.mulf %56, %60 : vector<8x768xf32>
    %c0_38 = arith.constant 0 : index
    %c0_39 = arith.constant 0 : index
    %62 = vector.load %arg3[%c0_38, %c0_39] : memref<8x1xf32, #tpu.memory_space<vmem>>, vector<8x1xf32>
    %63 = vector.broadcast %62 : vector<8x1xf32> to vector<8x768xf32>
    %64 = arith.mulf %61, %63 : vector<8x768xf32>
    %c0_40 = arith.constant 0 : index
    %c0_41 = arith.constant 0 : index
    %65 = vector.load %arg4[%c0_40, %c0_41] : memref<8x1xf32, #tpu.memory_space<vmem>>, vector<8x1xf32>
    %66 = vector.broadcast %65 : vector<8x1xf32> to vector<8x768xf32>
    %67 = arith.addf %64, %66 : vector<8x768xf32>
    %cst_42 = arith.constant 0.000000e+00 : f32
    %68 = vector.broadcast %cst_42 : f32 to vector<8x768xf32>
    %69 = arith.maximumf %67, %68 : vector<8x768xf32>
    %70 = vector.broadcast %2 : vector<1x768xf32> to vector<8x768xf32>
    %71 = arith.mulf %69, %70 : vector<8x768xf32>
    %c0_43 = arith.constant 0 : index
    %c128_44 = arith.constant 128 : index
    %72 = vector.load %arg11[%c0_43, %c128_44] : memref<8x1024xf32, #tpu.memory_space<vmem>>, vector<8x768xf32>
    tpu.vector_store %arg11[%c0_43, %c128_44], %71 {strides = array<i32>} : memref<8x1024xf32, #tpu.memory_space<vmem>>, vector<8x768xf32>,
    %c0_45 = arith.constant 0 : index
    %c109_46 = arith.constant 109 : index
    %73 = vector.load %arg11[%c0_45, %c109_46] : memref<8x1024xf32, #tpu.memory_space<vmem>>, vector<8x768xf32>
    %c0_47 = arith.constant 0 : index
    %c0_48 = arith.constant 0 : index
    %74 = vector.load %arg5[%c0_47, %c0_48] : memref<72x8xf32, #tpu.memory_space<vmem>>, vector<8x8xf32>
    %cst_49 = arith.constant dense<0.000000e+00> : vector<8x768xf32>
    %75 = tpu.matmul %74, %73, %cst_49 {dimension_numbers = #tpu.dot_dimension_numbers<[1], [0], [0], [1], [0, 0, 1, 1], [], []>} : vector<8x8xf32>, vector<8x768xf32>, vector<8x768xf32> -> vector<8x768xf32>
    %c0_50 = arith.constant 0 : index
    %c110_51 = arith.constant 110 : index
    %76 = vector.load %arg11[%c0_50, %c110_51] : memref<8x1024xf32, #tpu.memory_space<vmem>>, vector<8x768xf32>
    %c8_52 = arith.constant 8 : index
    %c0_53 = arith.constant 0 : index
    %77 = vector.load %arg5[%c8_52, %c0_53] : memref<72x8xf32, #tpu.memory_space<vmem>>, vector<8x8xf32>
    %cst_54 = arith.constant dense<0.000000e+00> : vector<8x768xf32>
    %78 = tpu.matmul %77, %76, %cst_54 {dimension_numbers = #tpu.dot_dimension_numbers<[1], [0], [0], [1], [0, 0, 1, 1], [], []>} : vector<8x8xf32>, vector<8x768xf32>, vector<8x768xf32> -> vector<8x768xf32>
    %79 = arith.addf %75, %78 : vector<8x768xf32>
    %c0_55 = arith.constant 0 : index
    %c111_56 = arith.constant 111 : index
    %80 = vector.load %arg11[%c0_55, %c111_56] : memref<8x1024xf32, #tpu.memory_space<vmem>>, vector<8x768xf32>
    %c16_57 = arith.constant 16 : index
    %c0_58 = arith.constant 0 : index
    %81 = vector.load %arg5[%c16_57, %c0_58] : memref<72x8xf32, #tpu.memory_space<vmem>>, vector<8x8xf32>
    %cst_59 = arith.constant dense<0.000000e+00> : vector<8x768xf32>
    %82 = tpu.matmul %81, %80, %cst_59 {dimension_numbers = #tpu.dot_dimension_numbers<[1], [0], [0], [1], [0, 0, 1, 1], [], []>} : vector<8x8xf32>, vector<8x768xf32>, vector<8x768xf32> -> vector<8x768xf32>
    %83 = arith.addf %79, %82 : vector<8x768xf32>
    %c0_60 = arith.constant 0 : index
    %c127_61 = arith.constant 127 : index
    %84 = vector.load %arg11[%c0_60, %c127_61] : memref<8x1024xf32, #tpu.memory_space<vmem>>, vector<8x768xf32>
    %c24_62 = arith.constant 24 : index
    %c0_63 = arith.constant 0 : index
    %85 = vector.load %arg5[%c24_62, %c0_63] : memref<72x8xf32, #tpu.memory_space<vmem>>, vector<8x8xf32>
    %cst_64 = arith.constant dense<0.000000e+00> : vector<8x768xf32>
    %86 = tpu.matmul %85, %84, %cst_64 {dimension_numbers = #tpu.dot_dimension_numbers<[1], [0], [0], [1], [0, 0, 1, 1], [], []>} : vector<8x8xf32>, vector<8x768xf32>, vector<8x768xf32> -> vector<8x768xf32>
    %87 = arith.addf %83, %86 : vector<8x768xf32>
    %c0_65 = arith.constant 0 : index
    %c128_66 = arith.constant 128 : index
    %88 = vector.load %arg11[%c0_65, %c128_66] : memref<8x1024xf32, #tpu.memory_space<vmem>>, vector<8x768xf32>
    %c32_67 = arith.constant 32 : index
    %c0_68 = arith.constant 0 : index
    %89 = vector.load %arg5[%c32_67, %c0_68] : memref<72x8xf32, #tpu.memory_space<vmem>>, vector<8x8xf32>
    %cst_69 = arith.constant dense<0.000000e+00> : vector<8x768xf32>
    %90 = tpu.matmul %89, %88, %cst_69 {dimension_numbers = #tpu.dot_dimension_numbers<[1], [0], [0], [1], [0, 0, 1, 1], [], []>} : vector<8x8xf32>, vector<8x768xf32>, vector<8x768xf32> -> vector<8x768xf32>
    %91 = arith.addf %87, %90 : vector<8x768xf32>
    %c0_70 = arith.constant 0 : index
    %c129_71 = arith.constant 129 : index
    %92 = vector.load %arg11[%c0_70, %c129_71] : memref<8x1024xf32, #tpu.memory_space<vmem>>, vector<8x768xf32>
    %c40_72 = arith.constant 40 : index
    %c0_73 = arith.constant 0 : index
    %93 = vector.load %arg5[%c40_72, %c0_73] : memref<72x8xf32, #tpu.memory_space<vmem>>, vector<8x8xf32>
    %cst_74 = arith.constant dense<0.000000e+00> : vector<8x768xf32>
    %94 = tpu.matmul %93, %92, %cst_74 {dimension_numbers = #tpu.dot_dimension_numbers<[1], [0], [0], [1], [0, 0, 1, 1], [], []>} : vector<8x8xf32>, vector<8x768xf32>, vector<8x768xf32> -> vector<8x768xf32>
    %95 = arith.addf %91, %94 : vector<8x768xf32>
    %c0_75 = arith.constant 0 : index
    %c145_76 = arith.constant 145 : index
    %96 = vector.load %arg11[%c0_75, %c145_76] : memref<8x1024xf32, #tpu.memory_space<vmem>>, vector<8x768xf32>
    %c48_77 = arith.constant 48 : index
    %c0_78 = arith.constant 0 : index
    %97 = vector.load %arg5[%c48_77, %c0_78] : memref<72x8xf32, #tpu.memory_space<vmem>>, vector<8x8xf32>
    %cst_79 = arith.constant dense<0.000000e+00> : vector<8x768xf32>
    %98 = tpu.matmul %97, %96, %cst_79 {dimension_numbers = #tpu.dot_dimension_numbers<[1], [0], [0], [1], [0, 0, 1, 1], [], []>} : vector<8x8xf32>, vector<8x768xf32>, vector<8x768xf32> -> vector<8x768xf32>
    %99 = arith.addf %95, %98 : vector<8x768xf32>
    %c0_80 = arith.constant 0 : index
    %c146_81 = arith.constant 146 : index
    %100 = vector.load %arg11[%c0_80, %c146_81] : memref<8x1024xf32, #tpu.memory_space<vmem>>, vector<8x768xf32>
    %c56_82 = arith.constant 56 : index
    %c0_83 = arith.constant 0 : index
    %101 = vector.load %arg5[%c56_82, %c0_83] : memref<72x8xf32, #tpu.memory_space<vmem>>, vector<8x8xf32>
    %cst_84 = arith.constant dense<0.000000e+00> : vector<8x768xf32>
    %102 = tpu.matmul %101, %100, %cst_84 {dimension_numbers = #tpu.dot_dimension_numbers<[1], [0], [0], [1], [0, 0, 1, 1], [], []>} : vector<8x8xf32>, vector<8x768xf32>, vector<8x768xf32> -> vector<8x768xf32>
    %103 = arith.addf %99, %102 : vector<8x768xf32>
    %c0_85 = arith.constant 0 : index
    %c147_86 = arith.constant 147 : index
    %104 = vector.load %arg11[%c0_85, %c147_86] : memref<8x1024xf32, #tpu.memory_space<vmem>>, vector<8x768xf32>
    %c64_87 = arith.constant 64 : index
    %c0_88 = arith.constant 0 : index
    %105 = vector.load %arg5[%c64_87, %c0_88] : memref<72x8xf32, #tpu.memory_space<vmem>>, vector<8x8xf32>
    %cst_89 = arith.constant dense<0.000000e+00> : vector<8x768xf32>
    %106 = tpu.matmul %105, %104, %cst_89 {dimension_numbers = #tpu.dot_dimension_numbers<[1], [0], [0], [1], [0, 0, 1, 1], [], []>} : vector<8x8xf32>, vector<8x768xf32>, vector<8x768xf32> -> vector<8x768xf32>
    %107 = arith.addf %103, %106 : vector<8x768xf32>
    %108 = vector.broadcast %2 : vector<1x768xf32> to vector<8x768xf32>
    %109 = arith.mulf %107, %108 : vector<8x768xf32>
    %cst_90 = arith.constant dense<0.000000e+00> : vector<8xf32>
    %110 = vector.multi_reduction <add>, %109, %cst_90 [1] : vector<8x768xf32> to vector<8xf32>
    %111 = vector.shape_cast %110 : vector<8xf32> to vector<8x1xf32>
    %112 = arith.mulf %107, %107 : vector<8x768xf32>
    %113 = vector.broadcast %2 : vector<1x768xf32> to vector<8x768xf32>
    %114 = arith.mulf %112, %113 : vector<8x768xf32>
    %cst_91 = arith.constant dense<0.000000e+00> : vector<8xf32>
    %115 = vector.multi_reduction <add>, %114, %cst_91 [1] : vector<8x768xf32> to vector<8xf32>
    %116 = vector.shape_cast %115 : vector<8xf32> to vector<8x1xf32>
    %cst_92 = arith.constant 0.001953125 : f32
    %117 = vector.broadcast %cst_92 : f32 to vector<8x1xf32>
    %118 = arith.mulf %111, %117 : vector<8x1xf32>
    %cst_93 = arith.constant 0.001953125 : f32
    %119 = vector.broadcast %cst_93 : f32 to vector<8x1xf32>
    %120 = arith.mulf %116, %119 : vector<8x1xf32>
    %121 = arith.mulf %118, %118 : vector<8x1xf32>
    %122 = arith.subf %120, %121 : vector<8x1xf32>
    %cst_94 = arith.constant 0.000000e+00 : f32
    %123 = vector.broadcast %cst_94 : f32 to vector<8x1xf32>
    %124 = arith.maximumf %122, %123 : vector<8x1xf32>
    %125 = vector.broadcast %118 : vector<8x1xf32> to vector<8x768xf32>
    %126 = arith.subf %107, %125 : vector<8x768xf32>
    %cst_95 = arith.constant 9.99999974E-6 : f32
    %127 = vector.broadcast %cst_95 : f32 to vector<8x1xf32>
    %128 = arith.addf %124, %127 : vector<8x1xf32>
    %129 = math.rsqrt %128 : vector<8x1xf32>
    %130 = vector.broadcast %129 : vector<8x1xf32> to vector<8x768xf32>
    %131 = arith.mulf %126, %130 : vector<8x768xf32>
    %c0_96 = arith.constant 0 : index
    %c0_97 = arith.constant 0 : index
    %132 = vector.load %arg6[%c0_96, %c0_97] : memref<8x1xf32, #tpu.memory_space<vmem>>, vector<8x1xf32>
    %133 = vector.broadcast %132 : vector<8x1xf32> to vector<8x768xf32>
    %134 = arith.mulf %131, %133 : vector<8x768xf32>
    %c0_98 = arith.constant 0 : index
    %c0_99 = arith.constant 0 : index
    %135 = vector.load %arg7[%c0_98, %c0_99] : memref<8x1xf32, #tpu.memory_space<vmem>>, vector<8x1xf32>
    %136 = vector.broadcast %135 : vector<8x1xf32> to vector<8x768xf32>
    %137 = arith.addf %134, %136 : vector<8x768xf32>
    %cst_100 = arith.constant 0.000000e+00 : f32
    %138 = vector.broadcast %cst_100 : f32 to vector<8x768xf32>
    %139 = arith.maximumf %137, %138 : vector<8x768xf32>
    %140 = vector.broadcast %2 : vector<1x768xf32> to vector<8x768xf32>
    %141 = arith.mulf %139, %140 : vector<8x768xf32>
    %c0_101 = arith.constant 0 : index
    %c128_102 = arith.constant 128 : index
    %142 = vector.load %arg11[%c0_101, %c128_102] : memref<8x1024xf32, #tpu.memory_space<vmem>>, vector<8x768xf32>
    tpu.vector_store %arg11[%c0_101, %c128_102], %141 {strides = array<i32>} : memref<8x1024xf32, #tpu.memory_space<vmem>>, vector<8x768xf32>,
    %c0_103 = arith.constant 0 : index
    %c109_104 = arith.constant 109 : index
    %143 = vector.load %arg11[%c0_103, %c109_104] : memref<8x1024xf32, #tpu.memory_space<vmem>>, vector<8x768xf32>
    %c0_105 = arith.constant 0 : index
    %c0_106 = arith.constant 0 : index
    %144 = vector.load %arg8[%c0_105, %c0_106] : memref<72x8xf32, #tpu.memory_space<vmem>>, vector<8x8xf32>
    %cst_107 = arith.constant dense<0.000000e+00> : vector<8x768xf32>
    %145 = tpu.matmul %144, %143, %cst_107 {dimension_numbers = #tpu.dot_dimension_numbers<[1], [0], [0], [1], [0, 0, 1, 1], [], []>} : vector<8x8xf32>, vector<8x768xf32>, vector<8x768xf32> -> vector<8x768xf32>
    %c0_108 = arith.constant 0 : index
    %c110_109 = arith.constant 110 : index
    %146 = vector.load %arg11[%c0_108, %c110_109] : memref<8x1024xf32, #tpu.memory_space<vmem>>, vector<8x768xf32>
    %c8_110 = arith.constant 8 : index
    %c0_111 = arith.constant 0 : index
    %147 = vector.load %arg8[%c8_110, %c0_111] : memref<72x8xf32, #tpu.memory_space<vmem>>, vector<8x8xf32>
    %cst_112 = arith.constant dense<0.000000e+00> : vector<8x768xf32>
    %148 = tpu.matmul %147, %146, %cst_112 {dimension_numbers = #tpu.dot_dimension_numbers<[1], [0], [0], [1], [0, 0, 1, 1], [], []>} : vector<8x8xf32>, vector<8x768xf32>, vector<8x768xf32> -> vector<8x768xf32>
    %149 = arith.addf %145, %148 : vector<8x768xf32>
    %c0_113 = arith.constant 0 : index
    %c111_114 = arith.constant 111 : index
    %150 = vector.load %arg11[%c0_113, %c111_114] : memref<8x1024xf32, #tpu.memory_space<vmem>>, vector<8x768xf32>
    %c16_115 = arith.constant 16 : index
    %c0_116 = arith.constant 0 : index
    %151 = vector.load %arg8[%c16_115, %c0_116] : memref<72x8xf32, #tpu.memory_space<vmem>>, vector<8x8xf32>
    %cst_117 = arith.constant dense<0.000000e+00> : vector<8x768xf32>
    %152 = tpu.matmul %151, %150, %cst_117 {dimension_numbers = #tpu.dot_dimension_numbers<[1], [0], [0], [1], [0, 0, 1, 1], [], []>} : vector<8x8xf32>, vector<8x768xf32>, vector<8x768xf32> -> vector<8x768xf32>
    %153 = arith.addf %149, %152 : vector<8x768xf32>
    %c0_118 = arith.constant 0 : index
    %c127_119 = arith.constant 127 : index
    %154 = vector.load %arg11[%c0_118, %c127_119] : memref<8x1024xf32, #tpu.memory_space<vmem>>, vector<8x768xf32>
    %c24_120 = arith.constant 24 : index
    %c0_121 = arith.constant 0 : index
    %155 = vector.load %arg8[%c24_120, %c0_121] : memref<72x8xf32, #tpu.memory_space<vmem>>, vector<8x8xf32>
    %cst_122 = arith.constant dense<0.000000e+00> : vector<8x768xf32>
    %156 = tpu.matmul %155, %154, %cst_122 {dimension_numbers = #tpu.dot_dimension_numbers<[1], [0], [0], [1], [0, 0, 1, 1], [], []>} : vector<8x8xf32>, vector<8x768xf32>, vector<8x768xf32> -> vector<8x768xf32>
    %157 = arith.addf %153, %156 : vector<8x768xf32>
    %c0_123 = arith.constant 0 : index
    %c128_124 = arith.constant 128 : index
    %158 = vector.load %arg11[%c0_123, %c128_124] : memref<8x1024xf32, #tpu.memory_space<vmem>>, vector<8x768xf32>
    %c32_125 = arith.constant 32 : index
    %c0_126 = arith.constant 0 : index
    %159 = vector.load %arg8[%c32_125, %c0_126] : memref<72x8xf32, #tpu.memory_space<vmem>>, vector<8x8xf32>
    %cst_127 = arith.constant dense<0.000000e+00> : vector<8x768xf32>
    %160 = tpu.matmul %159, %158, %cst_127 {dimension_numbers = #tpu.dot_dimension_numbers<[1], [0], [0], [1], [0, 0, 1, 1], [], []>} : vector<8x8xf32>, vector<8x768xf32>, vector<8x768xf32> -> vector<8x768xf32>
    %161 = arith.addf %157, %160 : vector<8x768xf32>
    %c0_128 = arith.constant 0 : index
    %c129_129 = arith.constant 129 : index
    %162 = vector.load %arg11[%c0_128, %c129_129] : memref<8x1024xf32, #tpu.memory_space<vmem>>, vector<8x768xf32>
    %c40_130 = arith.constant 40 : index
    %c0_131 = arith.constant 0 : index
    %163 = vector.load %arg8[%c40_130, %c0_131] : memref<72x8xf32, #tpu.memory_space<vmem>>, vector<8x8xf32>
    %cst_132 = arith.constant dense<0.000000e+00> : vector<8x768xf32>
    %164 = tpu.matmul %163, %162, %cst_132 {dimension_numbers = #tpu.dot_dimension_numbers<[1], [0], [0], [1], [0, 0, 1, 1], [], []>} : vector<8x8xf32>, vector<8x768xf32>, vector<8x768xf32> -> vector<8x768xf32>
    %165 = arith.addf %161, %164 : vector<8x768xf32>
    %c0_133 = arith.constant 0 : index
    %c145_134 = arith.constant 145 : index
    %166 = vector.load %arg11[%c0_133, %c145_134] : memref<8x1024xf32, #tpu.memory_space<vmem>>, vector<8x768xf32>
    %c48_135 = arith.constant 48 : index
    %c0_136 = arith.constant 0 : index
    %167 = vector.load %arg8[%c48_135, %c0_136] : memref<72x8xf32, #tpu.memory_space<vmem>>, vector<8x8xf32>
    %cst_137 = arith.constant dense<0.000000e+00> : vector<8x768xf32>
    %168 = tpu.matmul %167, %166, %cst_137 {dimension_numbers = #tpu.dot_dimension_numbers<[1], [0], [0], [1], [0, 0, 1, 1], [], []>} : vector<8x8xf32>, vector<8x768xf32>, vector<8x768xf32> -> vector<8x768xf32>
    %169 = arith.addf %165, %168 : vector<8x768xf32>
    %c0_138 = arith.constant 0 : index
    %c146_139 = arith.constant 146 : index
    %170 = vector.load %arg11[%c0_138, %c146_139] : memref<8x1024xf32, #tpu.memory_space<vmem>>, vector<8x768xf32>
    %c56_140 = arith.constant 56 : index
    %c0_141 = arith.constant 0 : index
    %171 = vector.load %arg8[%c56_140, %c0_141] : memref<72x8xf32, #tpu.memory_space<vmem>>, vector<8x8xf32>
    %cst_142 = arith.constant dense<0.000000e+00> : vector<8x768xf32>
    %172 = tpu.matmul %171, %170, %cst_142 {dimension_numbers = #tpu.dot_dimension_numbers<[1], [0], [0], [1], [0, 0, 1, 1], [], []>} : vector<8x8xf32>, vector<8x768xf32>, vector<8x768xf32> -> vector<8x768xf32>
    %173 = arith.addf %169, %172 : vector<8x768xf32>
    %c0_143 = arith.constant 0 : index
    %c147_144 = arith.constant 147 : index
    %174 = vector.load %arg11[%c0_143, %c147_144] : memref<8x1024xf32, #tpu.memory_space<vmem>>, vector<8x768xf32>
    %c64_145 = arith.constant 64 : index
    %c0_146 = arith.constant 0 : index
    %175 = vector.load %arg8[%c64_145, %c0_146] : memref<72x8xf32, #tpu.memory_space<vmem>>, vector<8x8xf32>
    %cst_147 = arith.constant dense<0.000000e+00> : vector<8x768xf32>
    %176 = tpu.matmul %175, %174, %cst_147 {dimension_numbers = #tpu.dot_dimension_numbers<[1], [0], [0], [1], [0, 0, 1, 1], [], []>} : vector<8x8xf32>, vector<8x768xf32>, vector<8x768xf32> -> vector<8x768xf32>
    %177 = arith.addf %173, %176 : vector<8x768xf32>
    %178 = vector.broadcast %2 : vector<1x768xf32> to vector<8x768xf32>
    %179 = arith.mulf %177, %178 : vector<8x768xf32>
    %cst_148 = arith.constant dense<0.000000e+00> : vector<8xf32>
    %180 = vector.multi_reduction <add>, %179, %cst_148 [1] : vector<8x768xf32> to vector<8xf32>
    %181 = vector.shape_cast %180 : vector<8xf32> to vector<8x1xf32>
    %182 = arith.mulf %177, %177 : vector<8x768xf32>
    %183 = vector.broadcast %2 : vector<1x768xf32> to vector<8x768xf32>
    %184 = arith.mulf %182, %183 : vector<8x768xf32>
    %cst_149 = arith.constant dense<0.000000e+00> : vector<8xf32>
    %185 = vector.multi_reduction <add>, %184, %cst_149 [1] : vector<8x768xf32> to vector<8xf32>
    %186 = vector.shape_cast %185 : vector<8xf32> to vector<8x1xf32>
    %cst_150 = arith.constant 0.001953125 : f32
    %187 = vector.broadcast %cst_150 : f32 to vector<8x1xf32>
    %188 = arith.mulf %181, %187 : vector<8x1xf32>
    %cst_151 = arith.constant 0.001953125 : f32
    %189 = vector.broadcast %cst_151 : f32 to vector<8x1xf32>
    %190 = arith.mulf %186, %189 : vector<8x1xf32>
    %191 = arith.mulf %188, %188 : vector<8x1xf32>
    %192 = arith.subf %190, %191 : vector<8x1xf32>
    %cst_152 = arith.constant 0.000000e+00 : f32
    %193 = vector.broadcast %cst_152 : f32 to vector<8x1xf32>
    %194 = arith.maximumf %192, %193 : vector<8x1xf32>
    %195 = vector.broadcast %188 : vector<8x1xf32> to vector<8x768xf32>
    %196 = arith.subf %177, %195 : vector<8x768xf32>
    %cst_153 = arith.constant 9.99999974E-6 : f32
    %197 = vector.broadcast %cst_153 : f32 to vector<8x1xf32>
    %198 = arith.addf %194, %197 : vector<8x1xf32>
    %199 = math.rsqrt %198 : vector<8x1xf32>
    %200 = vector.broadcast %199 : vector<8x1xf32> to vector<8x768xf32>
    %201 = arith.mulf %196, %200 : vector<8x768xf32>
    %c0_154 = arith.constant 0 : index
    %c0_155 = arith.constant 0 : index
    %202 = vector.load %arg9[%c0_154, %c0_155] : memref<8x1xf32, #tpu.memory_space<vmem>>, vector<8x1xf32>
    %203 = vector.broadcast %202 : vector<8x1xf32> to vector<8x768xf32>
    %204 = arith.mulf %201, %203 : vector<8x768xf32>
    %c0_156 = arith.constant 0 : index
    %c0_157 = arith.constant 0 : index
    %205 = vector.load %arg10[%c0_156, %c0_157] : memref<8x1xf32, #tpu.memory_space<vmem>>, vector<8x1xf32>
    %206 = vector.broadcast %205 : vector<8x1xf32> to vector<8x768xf32>
    %207 = arith.addf %204, %206 : vector<8x768xf32>
    %cst_158 = arith.constant 0.000000e+00 : f32
    %208 = vector.broadcast %cst_158 : f32 to vector<8x768xf32>
    %209 = arith.subf %208, %207 : vector<8x768xf32>
    %210 = math.exp %209 : vector<8x768xf32>
    %cst_159 = arith.constant 1.000000e+00 : f32
    %211 = vector.broadcast %cst_159 : f32 to vector<8x768xf32>
    %212 = arith.addf %211, %210 : vector<8x768xf32>
    %213 = tpu.reciprocal %212 {approx = true} : vector<8x768xf32> -> vector<8x768xf32>
    %214 = vector.broadcast %2 : vector<1x768xf32> to vector<8x768xf32>
    %215 = arith.mulf %213, %214 : vector<8x768xf32>
    %c0_160 = arith.constant 0 : index
    %c128_161 = arith.constant 128 : index
    %216 = vector.load %arg11[%c0_160, %c128_161] : memref<8x1024xf32, #tpu.memory_space<vmem>>, vector<8x768xf32>
    tpu.vector_store %arg11[%c0_160, %c128_161], %215 {strides = array<i32>} : memref<8x1024xf32, #tpu.memory_space<vmem>>, vector<8x768xf32>,
    return
  }
}

</mosaic_0001>

<llo_original>
// kernel: same_decoder_forward.2
$region0: #{same_decoder_forward.2}
  #allocation0 [shape = 'u32[]', space=smem, size = 0x4, offset = 0x4, fixed_abs, tag = 'smem constant byte address 0x4 - core index']
  #allocation1 [shape = 'u32[72,128]{1,0:T(1,128)}', space=vmem, size = 0x9000, scoped, tag = 'internal scratch']
  %s0 = inlined_call_operand.vmem [shape: f32[4,128], index: 0, kind: input, shape index: {}]
  %s1 = inlined_call_operand.vmem [shape: f32[16,4], index: 1, kind: input, shape index: {}]
  %s2 = inlined_call_operand.vmem [shape: f32[16,1], index: 2, kind: input, shape index: {}]
  %s3 = inlined_call_operand.vmem [shape: f32[16,128], index: 3, kind: output, shape index: {}]
  %s4 = sld [smem:[#allocation0]]
  $region22: #{same_decoder_forward.2} parent=0
    _
  %s6 = ssub.s32 1, %s4
  %s7 = scalar_select 0, %s6, %s4
  // Predicated region
  $region2: #{same_decoder_forward.2} parent=0 // pred_check
    _
  $region3: #{same_decoder_forward.2} parent=0 // pred_check_branch
    %9 = sbr.rel (0) target = $region5
  $region4: #{same_decoder_forward.2} parent=0 // pred_region
    _
  $region5: #{same_decoder_forward.2} parent=0 // pred_fallthru
    _
  // Predicated region
  $region6: #{same_decoder_forward.2} parent=0 // pred_check
    _
  $region7: #{same_decoder_forward.2} parent=0 // pred_check_branch
    %11 = sbr.rel (0) target = $region9
  $region8: #{same_decoder_forward.2} parent=0 // pred_region
    _
  $region9: #{same_decoder_forward.2} parent=0 // pred_fallthru
    _
  // Predicated region
  $region10: #{same_decoder_forward.2} parent=0 // pred_check
    _
  $region11: #{same_decoder_forward.2} parent=0 // pred_check_branch
    %13 = sbr.rel (0) target = $region13
  $region12: #{same_decoder_forward.2} parent=0 // pred_region
    _
  $region13: #{same_decoder_forward.2} parent=0 // pred_fallthru
    _
  %v14 = vld [vmem:[%s1] sm:$0xff]
  %v15 = vld [vmem:[%s1 + $0x8] sm:$0xff]
  %v16 = vld [vmem:[%s0] sm:$0xf]
  %v17 = vld [vmem:[%s2] sm:$0xff]
  %v18 = vld [vmem:[%s2 + $0x8] sm:$0xff]
  %20 = vset.pattern.permute.xlu0 0
  %21 = vperm.xlu0 %20, %v17
  %v22 = vpop.permute.xlu0 %21
  %25 = vset.pattern.permute.xlu0 0
  %26 = vperm.xlu0 %25, %v18
  %v27 = vpop.permute.xlu0 %26
  %vm29 = vcmask 31744
  %v31 = vsel %vm29, %v14, 0
  %v34 = vsel %vm29, %v15, 0
  %vm36 = vcmask 1043456
  %v38 = vsel %vm36, %v16, 0
  %40 = vmatpush.msra.mxu0 0.0
  %41 = vmatpush.msra.mxu0 0.0
  %42 = vmatpush.msra.mxu0 0.0
  %43 = vmatpush.msra.mxu0 0.0
  %44 = vmatpush.msra.mxu0 0.0
  %45 = vmatpush.msra.mxu0 0.0
  %46 = vmatpush.msra.mxu0 0.0
  %47 = vmatpush.msra.mxu0 0.0
  %48 = vmatpush.msra.mxu0 0.0
  %49 = vmatpush.msra.mxu0 0.0
  %50 = vmatpush.msra.mxu0 0.0
  %51 = vmatpush.msra.mxu0 0.0
  %52 = vmatpush.msra.mxu0 0.0
  %53 = vmatpush.msra.mxu0 0.0
  %54 = vmatpush.msra.mxu0 0.0
  %55 = vmatpush.msra.mxu0 %v38
  %56 = vmatmul.f32.gmra.mxu0 %v31
  %v57 = vpop.f32.mrf.mxu0
  %v58 = vadd.f32 %v22, %v57
  %59 = vmatmul.f32.gmra.mxu0 %v34
  %v60 = vpop.f32.mrf.mxu0
  %v61 = vadd.f32 %v27, %v60
  %62 = vdwg.mxu0
  %63 = vst [vmem:[%s3] sm:$0xff] %v58
  %64 = vst [vmem:[%s3 + $0x8] sm:$0xff] %v61
  // Predicated region
  $region14: #{same_decoder_forward.2} parent=0 // pred_check
    _
  $region15: #{same_decoder_forward.2} parent=0 // pred_check_branch
    %66 = sbr.rel (0) target = $region17
  $region16: #{same_decoder_forward.2} parent=0 // pred_region
    _
  $region17: #{same_decoder_forward.2} parent=0 // pred_fallthru
    _
  // Predicated region
  $region18: #{same_decoder_forward.2} parent=0 // pred_check
    _
  $region19: #{same_decoder_forward.2} parent=0 // pred_check_branch
    %68 = sbr.rel (0) target = $region21
  $region20: #{same_decoder_forward.2} parent=0 // pred_region
    _
  $region21: #{same_decoder_forward.2} parent=0 // pred_fallthru
    _

// kernel: same_decoder_forward.3
$region0: #{same_decoder_forward.3}
  #allocation0 [shape = 'u32[]', space=smem, size = 0x4, offset = 0x4, fixed_abs, tag = 'smem constant byte address 0x4 - core index']
  #allocation1 [shape = 'u32[72,128]{1,0:T(1,128)}', space=vmem, size = 0x9000, scoped, tag = 'internal scratch']
  %s0 = inlined_call_operand.vmem [shape: f32[1,768], index: 0, kind: input, shape index: {}]
  %s1 = inlined_call_operand.vmem [shape: f32[8,1024], index: 1, kind: input, shape index: {}]
  %s2 = inlined_call_operand.vmem [shape: f32[72,8], index: 2, kind: input, shape index: {}]
  %s3 = inlined_call_operand.vmem [shape: f32[8,1], index: 3, kind: input, shape index: {}]
  %s4 = inlined_call_operand.vmem [shape: f32[8,1], index: 4, kind: input, shape index: {}]
  %s5 = inlined_call_operand.vmem [shape: f32[72,8], index: 5, kind: input, shape index: {}]
  %s6 = inlined_call_operand.vmem [shape: f32[8,1], index: 6, kind: input, shape index: {}]
  %s7 = inlined_call_operand.vmem [shape: f32[8,1], index: 7, kind: input, shape index: {}]
  %s8 = inlined_call_operand.vmem [shape: f32[72,8], index: 8, kind: input, shape index: {}]
  %s9 = inlined_call_operand.vmem [shape: f32[8,1], index: 9, kind: input, shape index: {}]
  %s10 = inlined_call_operand.vmem [shape: f32[8,1], index: 10, kind: input, shape index: {}]
  %s11 = inlined_call_operand.vmem [shape: f32[8,1024], index: 11, kind: output, shape index: {}]
  %s12 = sld [smem:[#allocation0]]
  $region54: #{same_decoder_forward.3} parent=0
    _
  %s14 = ssub.s32 1, %s12
  %s15 = scalar_select 0, %s14, %s12
  // Predicated region
  $region2: #{same_decoder_forward.3} parent=0 // pred_check
    _
  $region3: #{same_decoder_forward.3} parent=0 // pred_check_branch
    %17 = sbr.rel (0) target = $region5
  $region4: #{same_decoder_forward.3} parent=0 // pred_region
    _
  $region5: #{same_decoder_forward.3} parent=0 // pred_fallthru
    _
  // Predicated region
  $region6: #{same_decoder_forward.3} parent=0 // pred_check
    _
  $region7: #{same_decoder_forward.3} parent=0 // pred_check_branch
    %19 = sbr.rel (0) target = $region9
  $region8: #{same_decoder_forward.3} parent=0 // pred_region
    _
  $region9: #{same_decoder_forward.3} parent=0 // pred_fallthru
    _
  // Predicated region
  $region10: #{same_decoder_forward.3} parent=0 // pred_check
    _
  $region11: #{same_decoder_forward.3} parent=0 // pred_check_branch
    %21 = sbr.rel (0) target = $region13
  $region12: #{same_decoder_forward.3} parent=0 // pred_region
    _
  $region13: #{same_decoder_forward.3} parent=0 // pred_fallthru
    _
  // Predicated region
  $region14: #{same_decoder_forward.3} parent=0 // pred_check
    _
  $region15: #{same_decoder_forward.3} parent=0 // pred_check_branch
    %23 = sbr.rel (0) target = $region17
  $region16: #{same_decoder_forward.3} parent=0 // pred_region
    _
  $region17: #{same_decoder_forward.3} parent=0 // pred_fallthru
    _
  // Predicated region
  $region18: #{same_decoder_forward.3} parent=0 // pred_check
    _
  $region19: #{same_decoder_forward.3} parent=0 // pred_check_branch
    %25 = sbr.rel (0) target = $region21
  $region20: #{same_decoder_forward.3} parent=0 // pred_region
    _
  $region21: #{same_decoder_forward.3} parent=0 // pred_fallthru
    _
  // Predicated region
  $region22: #{same_decoder_forward.3} parent=0 // pred_check
    _
  $region23: #{same_decoder_forward.3} parent=0 // pred_check_branch
    %27 = sbr.rel (0) target = $region25
  $region24: #{same_decoder_forward.3} parent=0 // pred_region
    _
  $region25: #{same_decoder_forward.3} parent=0 // pred_fallthru
    _
  // Predicated region
  $region26: #{same_decoder_forward.3} parent=0 // pred_check
    _
  $region27: #{same_decoder_forward.3} parent=0 // pred_check_branch
    %29 = sbr.rel (0) target = $region29
  $region28: #{same_decoder_forward.3} parent=0 // pred_region
    _
  $region29: #{same_decoder_forward.3} parent=0 // pred_fallthru
    _
  // Predicated region
  $region30: #{same_decoder_forward.3} parent=0 // pred_check
    _
  $region31: #{same_decoder_forward.3} parent=0 // pred_check_branch
    %31 = sbr.rel (0) target = $region33
  $region32: #{same_decoder_forward.3} parent=0 // pred_region
    _
  $region33: #{same_decoder_forward.3} parent=0 // pred_fallthru
    _
  // Predicated region
  $region34: #{same_decoder_forward.3} parent=0 // pred_check
    _
  $region35: #{same_decoder_forward.3} parent=0 // pred_check_branch
    %33 = sbr.rel (0) target = $region37
  $region36: #{same_decoder_forward.3} parent=0 // pred_region
    _
  $region37: #{same_decoder_forward.3} parent=0 // pred_fallthru
    _
  // Predicated region
  $region38: #{same_decoder_forward.3} parent=0 // pred_check
    _
  $region39: #{same_decoder_forward.3} parent=0 // pred_check_branch
    %35 = sbr.rel (0) target = $region41
  $region40: #{same_decoder_forward.3} parent=0 // pred_region
    _
  $region41: #{same_decoder_forward.3} parent=0 // pred_fallthru
    _
  // Predicated region
  $region42: #{same_decoder_forward.3} parent=0 // pred_check
    _
  $region43: #{same_decoder_forward.3} parent=0 // pred_check_branch
    %37 = sbr.rel (0) target = $region45
  $region44: #{same_decoder_forward.3} parent=0 // pred_region
    _
  $region45: #{same_decoder_forward.3} parent=0 // pred_fallthru
    _
  %v38 = vld [vmem:[%s1] sm:$0xff]
  %v39 = vld [vmem:[%s1 + $0x8] sm:$0xff]
  %v40 = vld [vmem:[%s1 + $0x10] sm:$0xff]
  %v41 = vld [vmem:[%s1 + $0x18] sm:$0xff]
  %v42 = vld [vmem:[%s1 + $0x20] sm:$0xff]
  %v43 = vld [vmem:[%s1 + $0x28] sm:$0xff]
  %v44 = vld [vmem:[%s1 + $0x30] sm:$0xff]
  %v45 = vld [vmem:[%s1 + $0x38] sm:$0xff]
  %46 = vst [vmem:[%s11] sm:$0xff] %v38
  %47 = vst [vmem:[%s11 + $0x8] sm:$0xff] %v39
  %48 = vst [vmem:[%s11 + $0x10] sm:$0xff] %v40
  %49 = vst [vmem:[%s11 + $0x18] sm:$0xff] %v41
  %50 = vst [vmem:[%s11 + $0x20] sm:$0xff] %v42
  %51 = vst [vmem:[%s11 + $0x28] sm:$0xff] %v43
  %52 = vst [vmem:[%s11 + $0x30] sm:$0xff] %v44
  %53 = vst [vmem:[%s11 + $0x38] sm:$0xff] %v45
  %v54 = vld [vmem:[%s0] sm:$0x3f]
  %v55 = vld [vmem:[%s11] sm:$0xff]
  %v56 = vld [vmem:[%s11 + $0x8] sm:$0xff]
  %v57 = vld [vmem:[%s11 + $0x10] sm:$0xff]
  %v58 = vld [vmem:[%s11 + $0x18] sm:$0xff]
  %v59 = vld [vmem:[%s11 + $0x20] sm:$0xff]
  %v60 = vld [vmem:[%s11 + $0x28] sm:$0xff]
  %v61 = vld [vmem:[%s11 + $0x30] sm:$0xff]
  %v62 = vld [vmem:[%s2] sm:$0xff]
  %v63 = vld [vmem:[%s2 + $0x8] sm:$0xff]
  %71 = vrot.lane.b32.xlu0 %v55, 18
  %v72 = vpop.permute.xlu0 %71
  %73 = vrot.lane.b32.xlu0 %v56, 18
  %v74 = vpop.permute.xlu0 %73
  %75 = vrot.lane.b32.xlu0 %v57, 18
  %v76 = vpop.permute.xlu0 %75
  %77 = vrot.lane.b32.xlu0 %v58, 18
  %v78 = vpop.permute.xlu0 %77
  %79 = vrot.lane.b32.xlu0 %v59, 18
  %v80 = vpop.permute.xlu0 %79
  %81 = vrot.lane.b32.xlu0 %v60, 18
  %v82 = vpop.permute.xlu0 %81
  %83 = vrot.lane.b32.xlu0 %v61, 18
  %v84 = vpop.permute.xlu0 %83
  %vm85 = vcmask 146432
  %v86 = vsel %vm85, %v72, %v74
  %v87 = vsel %vm85, %v74, %v76
  %v88 = vsel %vm85, %v76, %v78
  %v89 = vsel %vm85, %v78, %v80
  %v90 = vsel %vm85, %v80, %v82
  %v91 = vsel %vm85, %v82, %v84
  %vm98 = vcmask 64512
  %v100 = vsel %vm98, %v63, 0
  %102 = vmatpush.msra.mxu0 0.0
  %103 = vmatpush.msra.mxu0 0.0
  %104 = vmatpush.msra.mxu0 0.0
  %105 = vmatpush.msra.mxu0 0.0
  %106 = vmatpush.msra.mxu0 0.0
  %107 = vmatpush.msra.mxu0 0.0
  %108 = vmatpush.msra.mxu0 0.0
  %109 = vmatpush.msra.mxu0 0.0
  %110 = vmatpush.msra.mxu0 0.0
  %111 = vmatpush.msra.mxu0 0.0
  %112 = vmatpush.msra.mxu0 0.0
  %113 = vmatpush.msra.mxu0 0.0
  %114 = vmatpush.msra.mxu0 0.0
  %115 = vmatpush.msra.mxu0 0.0
  %116 = vmatpush.msra.mxu0 0.0
  %117 = vmatpush.msra.mxu0 %v86
  %118 = vmatmul.f32.gmra.mxu0 %v100
  %v119 = vpop.f32.mrf.mxu0
  %v120 = vadd.f32 0.0, %v119
  %121 = vdwg.mxu0
  %122 = vmatpush.msra.mxu0 0.0
  %123 = vmatpush.msra.mxu0 0.0
  %124 = vmatpush.msra.mxu0 0.0
  %125 = vmatpush.msra.mxu0 0.0
  %126 = vmatpush.msra.mxu0 0.0
  %127 = vmatpush.msra.mxu0 0.0
  %128 = vmatpush.msra.mxu0 0.0
  %129 = vmatpush.msra.mxu0 0.0
  %130 = vmatpush.msra.mxu0 0.0
  %131 = vmatpush.msra.mxu0 0.0
  %132 = vmatpush.msra.mxu0 0.0
  %133 = vmatpush.msra.mxu0 0.0
  %134 = vmatpush.msra.mxu0 0.0
  %135 = vmatpush.msra.mxu0 0.0
  %136 = vmatpush.msra.mxu0 0.0
  %137 = vmatpush.msra.mxu0 %v87
  %138 = vmatmul.f32.gmra.mxu0 %v100
  %v139 = vpop.f32.mrf.mxu0
  %v140 = vadd.f32 0.0, %v139
  %141 = vdwg.mxu0
  %142 = vmatpush.msra.mxu0 0.0
  %143 = vmatpush.msra.mxu0 0.0
  %144 = vmatpush.msra.mxu0 0.0
  %145 = vmatpush.msra.mxu0 0.0
  %146 = vmatpush.msra.mxu0 0.0
  %147 = vmatpush.msra.mxu0 0.0
  %148 = vmatpush.msra.mxu0 0.0
  %149 = vmatpush.msra.mxu0 0.0
  %150 = vmatpush.msra.mxu0 0.0
  %151 = vmatpush.msra.mxu0 0.0
  %152 = vmatpush.msra.mxu0 0.0
  %153 = vmatpush.msra.mxu0 0.0
  %154 = vmatpush.msra.mxu0 0.0
  %155 = vmatpush.msra.mxu0 0.0
  %156 = vmatpush.msra.mxu0 0.0
  %157 = vmatpush.msra.mxu0 %v88
  %158 = vmatmul.f32.gmra.mxu0 %v100
  %v159 = vpop.f32.mrf.mxu0
  %v160 = vadd.f32 0.0, %v159
  %161 = vdwg.mxu0
  %162 = vmatpush.msra.mxu0 0.0
  %163 = vmatpush.msra.mxu0 0.0
  %164 = vmatpush.msra.mxu0 0.0
  %165 = vmatpush.msra.mxu0 0.0
  %166 = vmatpush.msra.mxu0 0.0
  %167 = vmatpush.msra.mxu0 0.0
  %168 = vmatpush.msra.mxu0 0.0
  %169 = vmatpush.msra.mxu0 0.0
  %170 = vmatpush.msra.mxu0 0.0
  %171 = vmatpush.msra.mxu0 0.0
  %172 = vmatpush.msra.mxu0 0.0
  %173 = vmatpush.msra.mxu0 0.0
  %174 = vmatpush.msra.mxu0 0.0
  %175 = vmatpush.msra.mxu0 0.0
  %176 = vmatpush.msra.mxu0 0.0
  %177 = vmatpush.msra.mxu0 %v89
  %178 = vmatmul.f32.gmra.mxu0 %v100
  %v179 = vpop.f32.mrf.mxu0
  %v180 = vadd.f32 0.0, %v179
  %181 = vdwg.mxu0
  %182 = vmatpush.msra.mxu0 0.0
  %183 = vmatpush.msra.mxu0 0.0
  %184 = vmatpush.msra.mxu0 0.0
  %185 = vmatpush.msra.mxu0 0.0
  %186 = vmatpush.msra.mxu0 0.0
  %187 = vmatpush.msra.mxu0 0.0
  %188 = vmatpush.msra.mxu0 0.0
  %189 = vmatpush.msra.mxu0 0.0
  %190 = vmatpush.msra.mxu0 0.0
  %191 = vmatpush.msra.mxu0 0.0
  %192 = vmatpush.msra.mxu0 0.0
  %193 = vmatpush.msra.mxu0 0.0
  %194 = vmatpush.msra.mxu0 0.0
  %195 = vmatpush.msra.mxu0 0.0
  %196 = vmatpush.msra.mxu0 0.0
  %197 = vmatpush.msra.mxu0 %v90
  %198 = vmatmul.f32.gmra.mxu0 %v100
  %v199 = vpop.f32.mrf.mxu0
  %v200 = vadd.f32 0.0, %v199
  %201 = vdwg.mxu0
  %202 = vmatpush.msra.mxu0 0.0
  %203 = vmatpush.msra.mxu0 0.0
  %204 = vmatpush.msra.mxu0 0.0
  %205 = vmatpush.msra.mxu0 0.0
  %206 = vmatpush.msra.mxu0 0.0
  %207 = vmatpush.msra.mxu0 0.0
  %208 = vmatpush.msra.mxu0 0.0
  %209 = vmatpush.msra.mxu0 0.0
  %210 = vmatpush.msra.mxu0 0.0
  %211 = vmatpush.msra.mxu0 0.0
  %212 = vmatpush.msra.mxu0 0.0
  %213 = vmatpush.msra.mxu0 0.0
  %214 = vmatpush.msra.mxu0 0.0
  %215 = vmatpush.msra.mxu0 0.0
  %216 = vmatpush.msra.mxu0 0.0
  %217 = vmatpush.msra.mxu0 %v91
  %218 = vmatmul.f32.gmra.mxu0 %v100
  %v219 = vpop.f32.mrf.mxu0
  %v220 = vadd.f32 0.0, %v219
  %221 = vdwg.mxu0
  %222 = vrot.lane.b32.xlu0 %v55, 19
  %v223 = vpop.permute.xlu0 %222
  %224 = vrot.lane.b32.xlu0 %v56, 19
  %v225 = vpop.permute.xlu0 %224
  %226 = vrot.lane.b32.xlu0 %v57, 19
  %v227 = vpop.permute.xlu0 %226
  %228 = vrot.lane.b32.xlu0 %v58, 19
  %v229 = vpop.permute.xlu0 %228
  %230 = vrot.lane.b32.xlu0 %v59, 19
  %v231 = vpop.permute.xlu0 %230
  %232 = vrot.lane.b32.xlu0 %v60, 19
  %v233 = vpop.permute.xlu0 %232
  %234 = vrot.lane.b32.xlu0 %v61, 19
  %v235 = vpop.permute.xlu0 %234
  %vm236 = vcmask 154624
  %v237 = vsel %vm236, %v223, %v225
  %v238 = vsel %vm236, %v225, %v227
  %v239 = vsel %vm236, %v227, %v229
  %v240 = vsel %vm236, %v229, %v231
  %v241 = vsel %vm236, %v231, %v233
  %v242 = vsel %vm236, %v233, %v235
  %v250 = vsel %vm98, %v62, 0
  %252 = vmatpush.msra.mxu0 0.0
  %253 = vmatpush.msra.mxu0 0.0
  %254 = vmatpush.msra.mxu0 0.0
  %255 = vmatpush.msra.mxu0 0.0
  %256 = vmatpush.msra.mxu0 0.0
  %257 = vmatpush.msra.mxu0 0.0
  %258 = vmatpush.msra.mxu0 0.0
  %259 = vmatpush.msra.mxu0 0.0
  %260 = vmatpush.msra.mxu0 0.0
  %261 = vmatpush.msra.mxu0 0.0
  %262 = vmatpush.msra.mxu0 0.0
  %263 = vmatpush.msra.mxu0 0.0
  %264 = vmatpush.msra.mxu0 0.0
  %265 = vmatpush.msra.mxu0 0.0
  %266 = vmatpush.msra.mxu0 0.0
  %267 = vmatpush.msra.mxu0 %v237
  %268 = vmatmul.f32.gmra.mxu0 %v250
  %v269 = vpop.f32.mrf.mxu0
  %v270 = vadd.f32 %v120, %v269
  %271 = vdwg.mxu0
  %272 = vmatpush.msra.mxu0 0.0
  %273 = vmatpush.msra.mxu0 0.0
  %274 = vmatpush.msra.mxu0 0.0
  %275 = vmatpush.msra.mxu0 0.0
  %276 = vmatpush.msra.mxu0 0.0
  %277 = vmatpush.msra.mxu0 0.0
  %278 = vmatpush.msra.mxu0 0.0
  %279 = vmatpush.msra.mxu0 0.0
  %280 = vmatpush.msra.mxu0 0.0
  %281 = vmatpush.msra.mxu0 0.0
  %282 = vmatpush.msra.mxu0 0.0
  %283 = vmatpush.msra.mxu0 0.0
  %284 = vmatpush.msra.mxu0 0.0
  %285 = vmatpush.msra.mxu0 0.0
  %286 = vmatpush.msra.mxu0 0.0
  %287 = vmatpush.msra.mxu0 %v238
  %288 = vmatmul.f32.gmra.mxu0 %v250
  %v289 = vpop.f32.mrf.mxu0
  %v290 = vadd.f32 %v140, %v289
  %291 = vdwg.mxu0
  %292 = vmatpush.msra.mxu0 0.0
  %293 = vmatpush.msra.mxu0 0.0
  %294 = vmatpush.msra.mxu0 0.0
  %295 = vmatpush.msra.mxu0 0.0
  %296 = vmatpush.msra.mxu0 0.0
  %297 = vmatpush.msra.mxu0 0.0
  %298 = vmatpush.msra.mxu0 0.0
  %299 = vmatpush.msra.mxu0 0.0
  %300 = vmatpush.msra.mxu0 0.0
  %301 = vmatpush.msra.mxu0 0.0
  %302 = vmatpush.msra.mxu0 0.0
  %303 = vmatpush.msra.mxu0 0.0
  %304 = vmatpush.msra.mxu0 0.0
  %305 = vmatpush.msra.mxu0 0.0
  %306 = vmatpush.msra.mxu0 0.0
  %307 = vmatpush.msra.mxu0 %v239
  %308 = vmatmul.f32.gmra.mxu0 %v250
  %v309 = vpop.f32.mrf.mxu0
  %v310 = vadd.f32 %v160, %v309
  %311 = vdwg.mxu0
  %312 = vmatpush.msra.mxu0 0.0
  %313 = vmatpush.msra.mxu0 0.0
  %314 = vmatpush.msra.mxu0 0.0
  %315 = vmatpush.msra.mxu0 0.0
  %316 = vmatpush.msra.mxu0 0.0
  %317 = vmatpush.msra.mxu0 0.0
  %318 = vmatpush.msra.mxu0 0.0
  %319 = vmatpush.msra.mxu0 0.0
  %320 = vmatpush.msra.mxu0 0.0
  %321 = vmatpush.msra.mxu0 0.0
  %322 = vmatpush.msra.mxu0 0.0
  %323 = vmatpush.msra.mxu0 0.0
  %324 = vmatpush.msra.mxu0 0.0
  %325 = vmatpush.msra.mxu0 0.0
  %326 = vmatpush.msra.mxu0 0.0
  %327 = vmatpush.msra.mxu0 %v240
  %328 = vmatmul.f32.gmra.mxu0 %v250
  %v329 = vpop.f32.mrf.mxu0
  %v330 = vadd.f32 %v180, %v329
  %331 = vdwg.mxu0
  %332 = vmatpush.msra.mxu0 0.0
  %333 = vmatpush.msra.mxu0 0.0
  %334 = vmatpush.msra.mxu0 0.0
  %335 = vmatpush.msra.mxu0 0.0
  %336 = vmatpush.msra.mxu0 0.0
  %337 = vmatpush.msra.mxu0 0.0
  %338 = vmatpush.msra.mxu0 0.0
  %339 = vmatpush.msra.mxu0 0.0
  %340 = vmatpush.msra.mxu0 0.0
  %341 = vmatpush.msra.mxu0 0.0
  %342 = vmatpush.msra.mxu0 0.0
  %343 = vmatpush.msra.mxu0 0.0
  %344 = vmatpush.msra.mxu0 0.0
  %345 = vmatpush.msra.mxu0 0.0
  %346 = vmatpush.msra.mxu0 0.0
  %347 = vmatpush.msra.mxu0 %v241
  %348 = vmatmul.f32.gmra.mxu0 %v250
  %v349 = vpop.f32.mrf.mxu0
  %v350 = vadd.f32 %v200, %v349
  %351 = vdwg.mxu0
  %352 = vmatpush.msra.mxu0 0.0
  %353 = vmatpush.msra.mxu0 0.0
  %354 = vmatpush.msra.mxu0 0.0
  %355 = vmatpush.msra.mxu0 0.0
  %356 = vmatpush.msra.mxu0 0.0
  %357 = vmatpush.msra.mxu0 0.0
  %358 = vmatpush.msra.mxu0 0.0
  %359 = vmatpush.msra.mxu0 0.0
  %360 = vmatpush.msra.mxu0 0.0
  %361 = vmatpush.msra.mxu0 0.0
  %362 = vmatpush.msra.mxu0 0.0
  %363 = vmatpush.msra.mxu0 0.0
  %364 = vmatpush.msra.mxu0 0.0
  %365 = vmatpush.msra.mxu0 0.0
  %366 = vmatpush.msra.mxu0 0.0
  %367 = vmatpush.msra.mxu0 %v242
  %368 = vmatmul.f32.gmra.mxu0 %v250
  %v369 = vpop.f32.mrf.mxu0
  %v370 = vadd.f32 %v220, %v369
  %371 = vdwg.mxu0
  %v372 = vld [vmem:[%s2 + $0x10] sm:$0xff]
  %373 = vrot.lane.b32.xlu0 %v55, 17
  %v374 = vpop.permute.xlu0 %373
  %375 = vrot.lane.b32.xlu0 %v56, 17
  %v376 = vpop.permute.xlu0 %375
  %377 = vrot.lane.b32.xlu0 %v57, 17
  %v378 = vpop.permute.xlu0 %377
  %379 = vrot.lane.b32.xlu0 %v58, 17
  %v380 = vpop.permute.xlu0 %379
  %381 = vrot.lane.b32.xlu0 %v59, 17
  %v382 = vpop.permute.xlu0 %381
  %383 = vrot.lane.b32.xlu0 %v60, 17
  %v384 = vpop.permute.xlu0 %383
  %385 = vrot.lane.b32.xlu0 %v61, 17
  %v386 = vpop.permute.xlu0 %385
  %vm387 = vcmask 138240
  %v388 = vsel %vm387, %v374, %v376
  %v389 = vsel %vm387, %v376, %v378
  %v390 = vsel %vm387, %v378, %v380
  %v391 = vsel %vm387, %v380, %v382
  %v392 = vsel %vm387, %v382, %v384
  %v393 = vsel %vm387, %v384, %v386
  %v401 = vsel %vm98, %v372, 0
  %403 = vmatpush.msra.mxu0 0.0
  %404 = vmatpush.msra.mxu0 0.0
  %405 = vmatpush.msra.mxu0 0.0
  %406 = vmatpush.msra.mxu0 0.0
  %407 = vmatpush.msra.mxu0 0.0
  %408 = vmatpush.msra.mxu0 0.0
  %409 = vmatpush.msra.mxu0 0.0
  %410 = vmatpush.msra.mxu0 0.0
  %411 = vmatpush.msra.mxu0 0.0
  %412 = vmatpush.msra.mxu0 0.0
  %413 = vmatpush.msra.mxu0 0.0
  %414 = vmatpush.msra.mxu0 0.0
  %415 = vmatpush.msra.mxu0 0.0
  %416 = vmatpush.msra.mxu0 0.0
  %417 = vmatpush.msra.mxu0 0.0
  %418 = vmatpush.msra.mxu0 %v388
  %419 = vmatmul.f32.gmra.mxu0 %v401
  %v420 = vpop.f32.mrf.mxu0
  %v421 = vadd.f32 0.0, %v420
  %422 = vdwg.mxu0
  %423 = vmatpush.msra.mxu0 0.0
  %424 = vmatpush.msra.mxu0 0.0
  %425 = vmatpush.msra.mxu0 0.0
  %426 = vmatpush.msra.mxu0 0.0
  %427 = vmatpush.msra.mxu0 0.0
  %428 = vmatpush.msra.mxu0 0.0
  %429 = vmatpush.msra.mxu0 0.0
  %430 = vmatpush.msra.mxu0 0.0
  %431 = vmatpush.msra.mxu0 0.0
  %432 = vmatpush.msra.mxu0 0.0
  %433 = vmatpush.msra.mxu0 0.0
  %434 = vmatpush.msra.mxu0 0.0
  %435 = vmatpush.msra.mxu0 0.0
  %436 = vmatpush.msra.mxu0 0.0
  %437 = vmatpush.msra.mxu0 0.0
  %438 = vmatpush.msra.mxu0 %v389
  %439 = vmatmul.f32.gmra.mxu0 %v401
  %v440 = vpop.f32.mrf.mxu0
  %v441 = vadd.f32 0.0, %v440
  %442 = vdwg.mxu0
  %443 = vmatpush.msra.mxu0 0.0
  %444 = vmatpush.msra.mxu0 0.0
  %445 = vmatpush.msra.mxu0 0.0
  %446 = vmatpush.msra.mxu0 0.0
  %447 = vmatpush.msra.mxu0 0.0
  %448 = vmatpush.msra.mxu0 0.0
  %449 = vmatpush.msra.mxu0 0.0
  %450 = vmatpush.msra.mxu0 0.0
  %451 = vmatpush.msra.mxu0 0.0
  %452 = vmatpush.msra.mxu0 0.0
  %453 = vmatpush.msra.mxu0 0.0
  %454 = vmatpush.msra.mxu0 0.0
  %455 = vmatpush.msra.mxu0 0.0
  %456 = vmatpush.msra.mxu0 0.0
  %457 = vmatpush.msra.mxu0 0.0
  %458 = vmatpush.msra.mxu0 %v390
  %459 = vmatmul.f32.gmra.mxu0 %v401
  %v460 = vpop.f32.mrf.mxu0
  %v461 = vadd.f32 0.0, %v460
  %462 = vdwg.mxu0
  %463 = vmatpush.msra.mxu0 0.0
  %464 = vmatpush.msra.mxu0 0.0
  %465 = vmatpush.msra.mxu0 0.0
  %466 = vmatpush.msra.mxu0 0.0
  %467 = vmatpush.msra.mxu0 0.0
  %468 = vmatpush.msra.mxu0 0.0
  %469 = vmatpush.msra.mxu0 0.0
  %470 = vmatpush.msra.mxu0 0.0
  %471 = vmatpush.msra.mxu0 0.0
  %472 = vmatpush.msra.mxu0 0.0
  %473 = vmatpush.msra.mxu0 0.0
  %474 = vmatpush.msra.mxu0 0.0
  %475 = vmatpush.msra.mxu0 0.0
  %476 = vmatpush.msra.mxu0 0.0
  %477 = vmatpush.msra.mxu0 0.0
  %478 = vmatpush.msra.mxu0 %v391
  %479 = vmatmul.f32.gmra.mxu0 %v401
  %v480 = vpop.f32.mrf.mxu0
  %v481 = vadd.f32 0.0, %v480
  %482 = vdwg.mxu0
  %483 = vmatpush.msra.mxu0 0.0
  %484 = vmatpush.msra.mxu0 0.0
  %485 = vmatpush.msra.mxu0 0.0
  %486 = vmatpush.msra.mxu0 0.0
  %487 = vmatpush.msra.mxu0 0.0
  %488 = vmatpush.msra.mxu0 0.0
  %489 = vmatpush.msra.mxu0 0.0
  %490 = vmatpush.msra.mxu0 0.0
  %491 = vmatpush.msra.mxu0 0.0
  %492 = vmatpush.msra.mxu0 0.0
  %493 = vmatpush.msra.mxu0 0.0
  %494 = vmatpush.msra.mxu0 0.0
  %495 = vmatpush.msra.mxu0 0.0
  %496 = vmatpush.msra.mxu0 0.0
  %497 = vmatpush.msra.mxu0 0.0
  %498 = vmatpush.msra.mxu0 %v392
  %499 = vmatmul.f32.gmra.mxu0 %v401
  %v500 = vpop.f32.mrf.mxu0
  %v501 = vadd.f32 0.0, %v500
  %502 = vdwg.mxu0
  %503 = vmatpush.msra.mxu0 0.0
  %504 = vmatpush.msra.mxu0 0.0
  %505 = vmatpush.msra.mxu0 0.0
  %506 = vmatpush.msra.mxu0 0.0
  %507 = vmatpush.msra.mxu0 0.0
  %508 = vmatpush.msra.mxu0 0.0
  %509 = vmatpush.msra.mxu0 0.0
  %510 = vmatpush.msra.mxu0 0.0
  %511 = vmatpush.msra.mxu0 0.0
  %512 = vmatpush.msra.mxu0 0.0
  %513 = vmatpush.msra.mxu0 0.0
  %514 = vmatpush.msra.mxu0 0.0
  %515 = vmatpush.msra.mxu0 0.0
  %516 = vmatpush.msra.mxu0 0.0
  %517 = vmatpush.msra.mxu0 0.0
  %518 = vmatpush.msra.mxu0 %v393
  %519 = vmatmul.f32.gmra.mxu0 %v401
  %v520 = vpop.f32.mrf.mxu0
  %v521 = vadd.f32 0.0, %v520
  %522 = vdwg.mxu0
  %v523 = vadd.f32 %v270, %v421
  %v524 = vadd.f32 %v290, %v441
  %v525 = vadd.f32 %v310, %v461
  %v526 = vadd.f32 %v330, %v481
  %v527 = vadd.f32 %v350, %v501
  %v528 = vadd.f32 %v370, %v521
  %v529 = vld [vmem:[%s2 + $0x18] sm:$0xff]
  %530 = vrot.lane.b32.xlu0 %v55, 1
  %v531 = vpop.permute.xlu0 %530
  %532 = vrot.lane.b32.xlu0 %v56, 1
  %v533 = vpop.permute.xlu0 %532
  %534 = vrot.lane.b32.xlu0 %v57, 1
  %v535 = vpop.permute.xlu0 %534
  %536 = vrot.lane.b32.xlu0 %v58, 1
  %v537 = vpop.permute.xlu0 %536
  %538 = vrot.lane.b32.xlu0 %v59, 1
  %v539 = vpop.permute.xlu0 %538
  %540 = vrot.lane.b32.xlu0 %v60, 1
  %v541 = vpop.permute.xlu0 %540
  %542 = vrot.lane.b32.xlu0 %v61, 1
  %v543 = vpop.permute.xlu0 %542
  %vm544 = vcmask 7168
  %v545 = vsel %vm544, %v531, %v533
  %v546 = vsel %vm544, %v533, %v535
  %v547 = vsel %vm544, %v535, %v537
  %v548 = vsel %vm544, %v537, %v539
  %v549 = vsel %vm544, %v539, %v541
  %v550 = vsel %vm544, %v541, %v543
  %v558 = vsel %vm98, %v529, 0
  %560 = vmatpush.msra.mxu0 0.0
  %561 = vmatpush.msra.mxu0 0.0
  %562 = vmatpush.msra.mxu0 0.0
  %563 = vmatpush.msra.mxu0 0.0
  %564 = vmatpush.msra.mxu0 0.0
  %565 = vmatpush.msra.mxu0 0.0
  %566 = vmatpush.msra.mxu0 0.0
  %567 = vmatpush.msra.mxu0 0.0
  %568 = vmatpush.msra.mxu0 0.0
  %569 = vmatpush.msra.mxu0 0.0
  %570 = vmatpush.msra.mxu0 0.0
  %571 = vmatpush.msra.mxu0 0.0
  %572 = vmatpush.msra.mxu0 0.0
  %573 = vmatpush.msra.mxu0 0.0
  %574 = vmatpush.msra.mxu0 0.0
  %575 = vmatpush.msra.mxu0 %v545
  %576 = vmatmul.f32.gmra.mxu0 %v558
  %v577 = vpop.f32.mrf.mxu0
  %v578 = vadd.f32 0.0, %v577
  %579 = vdwg.mxu0
  %580 = vmatpush.msra.mxu0 0.0
  %581 = vmatpush.msra.mxu0 0.0
  %582 = vmatpush.msra.mxu0 0.0
  %583 = vmatpush.msra.mxu0 0.0
  %584 = vmatpush.msra.mxu0 0.0
  %585 = vmatpush.msra.mxu0 0.0
  %586 = vmatpush.msra.mxu0 0.0
  %587 = vmatpush.msra.mxu0 0.0
  %588 = vmatpush.msra.mxu0 0.0
  %589 = vmatpush.msra.mxu0 0.0
  %590 = vmatpush.msra.mxu0 0.0
  %591 = vmatpush.msra.mxu0 0.0
  %592 = vmatpush.msra.mxu0 0.0
  %593 = vmatpush.msra.mxu0 0.0
  %594 = vmatpush.msra.mxu0 0.0
  %595 = vmatpush.msra.mxu0 %v546
  %596 = vmatmul.f32.gmra.mxu0 %v558
  %v597 = vpop.f32.mrf.mxu0
  %v598 = vadd.f32 0.0, %v597
  %599 = vdwg.mxu0
  %600 = vmatpush.msra.mxu0 0.0
  %601 = vmatpush.msra.mxu0 0.0
  %602 = vmatpush.msra.mxu0 0.0
  %603 = vmatpush.msra.mxu0 0.0
  %604 = vmatpush.msra.mxu0 0.0
  %605 = vmatpush.msra.mxu0 0.0
  %606 = vmatpush.msra.mxu0 0.0
  %607 = vmatpush.msra.mxu0 0.0
  %608 = vmatpush.msra.mxu0 0.0
  %609 = vmatpush.msra.mxu0 0.0
  %610 = vmatpush.msra.mxu0 0.0
  %611 = vmatpush.msra.mxu0 0.0
  %612 = vmatpush.msra.mxu0 0.0
  %613 = vmatpush.msra.mxu0 0.0
  %614 = vmatpush.msra.mxu0 0.0
  %615 = vmatpush.msra.mxu0 %v547
  %616 = vmatmul.f32.gmra.mxu0 %v558
  %v617 = vpop.f32.mrf.mxu0
  %v618 = vadd.f32 0.0, %v617
  %619 = vdwg.mxu0
  %620 = vmatpush.msra.mxu0 0.0
  %621 = vmatpush.msra.mxu0 0.0
  %622 = vmatpush.msra.mxu0 0.0
  %623 = vmatpush.msra.mxu0 0.0
  %624 = vmatpush.msra.mxu0 0.0
  %625 = vmatpush.msra.mxu0 0.0
  %626 = vmatpush.msra.mxu0 0.0
  %627 = vmatpush.msra.mxu0 0.0
  %628 = vmatpush.msra.mxu0 0.0
  %629 = vmatpush.msra.mxu0 0.0
  %630 = vmatpush.msra.mxu0 0.0
  %631 = vmatpush.msra.mxu0 0.0
  %632 = vmatpush.msra.mxu0 0.0
  %633 = vmatpush.msra.mxu0 0.0
  %634 = vmatpush.msra.mxu0 0.0
  %635 = vmatpush.msra.mxu0 %v548
  %636 = vmatmul.f32.gmra.mxu0 %v558
  %v637 = vpop.f32.mrf.mxu0
  %v638 = vadd.f32 0.0, %v637
  %639 = vdwg.mxu0
  %640 = vmatpush.msra.mxu0 0.0
  %641 = vmatpush.msra.mxu0 0.0
  %642 = vmatpush.msra.mxu0 0.0
  %643 = vmatpush.msra.mxu0 0.0
  %644 = vmatpush.msra.mxu0 0.0
  %645 = vmatpush.msra.mxu0 0.0
  %646 = vmatpush.msra.mxu0 0.0
  %647 = vmatpush.msra.mxu0 0.0
  %648 = vmatpush.msra.mxu0 0.0
  %649 = vmatpush.msra.mxu0 0.0
  %650 = vmatpush.msra.mxu0 0.0
  %651 = vmatpush.msra.mxu0 0.0
  %652 = vmatpush.msra.mxu0 0.0
  %653 = vmatpush.msra.mxu0 0.0
  %654 = vmatpush.msra.mxu0 0.0
  %655 = vmatpush.msra.mxu0 %v549
  %656 = vmatmul.f32.gmra.mxu0 %v558
  %v657 = vpop.f32.mrf.mxu0
  %v658 = vadd.f32 0.0, %v657
  %659 = vdwg.mxu0
  %660 = vmatpush.msra.mxu0 0.0
  %661 = vmatpush.msra.mxu0 0.0
  %662 = vmatpush.msra.mxu0 0.0
  %663 = vmatpush.msra.mxu0 0.0
  %664 = vmatpush.msra.mxu0 0.0
  %665 = vmatpush.msra.mxu0 0.0
  %666 = vmatpush.msra.mxu0 0.0
  %667 = vmatpush.msra.mxu0 0.0
  %668 = vmatpush.msra.mxu0 0.0
  %669 = vmatpush.msra.mxu0 0.0
  %670 = vmatpush.msra.mxu0 0.0
  %671 = vmatpush.msra.mxu0 0.0
  %672 = vmatpush.msra.mxu0 0.0
  %673 = vmatpush.msra.mxu0 0.0
  %674 = vmatpush.msra.mxu0 0.0
  %675 = vmatpush.msra.mxu0 %v550
  %676 = vmatmul.f32.gmra.mxu0 %v558
  %v677 = vpop.f32.mrf.mxu0
  %v678 = vadd.f32 0.0, %v677
  %679 = vdwg.mxu0
  %v680 = vadd.f32 %v523, %v578
  %v681 = vadd.f32 %v524, %v598
  %v682 = vadd.f32 %v525, %v618
  %v683 = vadd.f32 %v526, %v638
  %v684 = vadd.f32 %v527, %v658
  %v685 = vadd.f32 %v528, %v678
  %v686 = vld [vmem:[%s2 + $0x20] sm:$0xff]
  %v688 = vsel %vm98, %v686, 0
  %690 = vmatpush.msra.mxu0 0.0
  %691 = vmatpush.msra.mxu0 0.0
  %692 = vmatpush.msra.mxu0 0.0
  %693 = vmatpush.msra.mxu0 0.0
  %694 = vmatpush.msra.mxu0 0.0
  %695 = vmatpush.msra.mxu0 0.0
  %696 = vmatpush.msra.mxu0 0.0
  %697 = vmatpush.msra.mxu0 0.0
  %698 = vmatpush.msra.mxu0 0.0
  %699 = vmatpush.msra.mxu0 0.0
  %700 = vmatpush.msra.mxu0 0.0
  %701 = vmatpush.msra.mxu0 0.0
  %702 = vmatpush.msra.mxu0 0.0
  %703 = vmatpush.msra.mxu0 0.0
  %704 = vmatpush.msra.mxu0 0.0
  %705 = vmatpush.msra.mxu0 %v56
  %706 = vmatmul.f32.gmra.mxu0 %v688
  %v707 = vpop.f32.mrf.mxu0
  %v708 = vadd.f32 0.0, %v707
  %709 = vdwg.mxu0
  %710 = vmatpush.msra.mxu0 0.0
  %711 = vmatpush.msra.mxu0 0.0
  %712 = vmatpush.msra.mxu0 0.0
  %713 = vmatpush.msra.mxu0 0.0
  %714 = vmatpush.msra.mxu0 0.0
  %715 = vmatpush.msra.mxu0 0.0
  %716 = vmatpush.msra.mxu0 0.0
  %717 = vmatpush.msra.mxu0 0.0
  %718 = vmatpush.msra.mxu0 0.0
  %719 = vmatpush.msra.mxu0 0.0
  %720 = vmatpush.msra.mxu0 0.0
  %721 = vmatpush.msra.mxu0 0.0
  %722 = vmatpush.msra.mxu0 0.0
  %723 = vmatpush.msra.mxu0 0.0
  %724 = vmatpush.msra.mxu0 0.0
  %725 = vmatpush.msra.mxu0 %v57
  %726 = vmatmul.f32.gmra.mxu0 %v688
  %v727 = vpop.f32.mrf.mxu0
  %v728 = vadd.f32 0.0, %v727
  %729 = vdwg.mxu0
  %730 = vmatpush.msra.mxu0 0.0
  %731 = vmatpush.msra.mxu0 0.0
  %732 = vmatpush.msra.mxu0 0.0
  %733 = vmatpush.msra.mxu0 0.0
  %734 = vmatpush.msra.mxu0 0.0
  %735 = vmatpush.msra.mxu0 0.0
  %736 = vmatpush.msra.mxu0 0.0
  %737 = vmatpush.msra.mxu0 0.0
  %738 = vmatpush.msra.mxu0 0.0
  %739 = vmatpush.msra.mxu0 0.0
  %740 = vmatpush.msra.mxu0 0.0
  %741 = vmatpush.msra.mxu0 0.0
  %742 = vmatpush.msra.mxu0 0.0
  %743 = vmatpush.msra.mxu0 0.0
  %744 = vmatpush.msra.mxu0 0.0
  %745 = vmatpush.msra.mxu0 %v58
  %746 = vmatmul.f32.gmra.mxu0 %v688
  %v747 = vpop.f32.mrf.mxu0
  %v748 = vadd.f32 0.0, %v747
  %749 = vdwg.mxu0
  %750 = vmatpush.msra.mxu0 0.0
  %751 = vmatpush.msra.mxu0 0.0
  %752 = vmatpush.msra.mxu0 0.0
  %753 = vmatpush.msra.mxu0 0.0
  %754 = vmatpush.msra.mxu0 0.0
  %755 = vmatpush.msra.mxu0 0.0
  %756 = vmatpush.msra.mxu0 0.0
  %757 = vmatpush.msra.mxu0 0.0
  %758 = vmatpush.msra.mxu0 0.0
  %759 = vmatpush.msra.mxu0 0.0
  %760 = vmatpush.msra.mxu0 0.0
  %761 = vmatpush.msra.mxu0 0.0
  %762 = vmatpush.msra.mxu0 0.0
  %763 = vmatpush.msra.mxu0 0.0
  %764 = vmatpush.msra.mxu0 0.0
  %765 = vmatpush.msra.mxu0 %v59
  %766 = vmatmul.f32.gmra.mxu0 %v688
  %v767 = vpop.f32.mrf.mxu0
  %v768 = vadd.f32 0.0, %v767
  %769 = vdwg.mxu0
  %770 = vmatpush.msra.mxu0 0.0
  %771 = vmatpush.msra.mxu0 0.0
  %772 = vmatpush.msra.mxu0 0.0
  %773 = vmatpush.msra.mxu0 0.0
  %774 = vmatpush.msra.mxu0 0.0
  %775 = vmatpush.msra.mxu0 0.0
  %776 = vmatpush.msra.mxu0 0.0
  %777 = vmatpush.msra.mxu0 0.0
  %778 = vmatpush.msra.mxu0 0.0
  %779 = vmatpush.msra.mxu0 0.0
  %780 = vmatpush.msra.mxu0 0.0
  %781 = vmatpush.msra.mxu0 0.0
  %782 = vmatpush.msra.mxu0 0.0
  %783 = vmatpush.msra.mxu0 0.0
  %784 = vmatpush.msra.mxu0 0.0
  %785 = vmatpush.msra.mxu0 %v60
  %786 = vmatmul.f32.gmra.mxu0 %v688
  %v787 = vpop.f32.mrf.mxu0
  %v788 = vadd.f32 0.0, %v787
  %789 = vdwg.mxu0
  %790 = vmatpush.msra.mxu0 0.0
  %791 = vmatpush.msra.mxu0 0.0
  %792 = vmatpush.msra.mxu0 0.0
  %793 = vmatpush.msra.mxu0 0.0
  %794 = vmatpush.msra.mxu0 0.0
  %795 = vmatpush.msra.mxu0 0.0
  %796 = vmatpush.msra.mxu0 0.0
  %797 = vmatpush.msra.mxu0 0.0
  %798 = vmatpush.msra.mxu0 0.0
  %799 = vmatpush.msra.mxu0 0.0
  %800 = vmatpush.msra.mxu0 0.0
  %801 = vmatpush.msra.mxu0 0.0
  %802 = vmatpush.msra.mxu0 0.0
  %803 = vmatpush.msra.mxu0 0.0
  %804 = vmatpush.msra.mxu0 0.0
  %805 = vmatpush.msra.mxu0 %v61
  %806 = vmatmul.f32.gmra.mxu0 %v688
  %v807 = vpop.f32.mrf.mxu0
  %v808 = vadd.f32 0.0, %v807
  %809 = vdwg.mxu0
  %v810 = vadd.f32 %v680, %v708
  %v811 = vadd.f32 %v681, %v728
  %v812 = vadd.f32 %v682, %v748
  %v813 = vadd.f32 %v683, %v768
  %v814 = vadd.f32 %v684, %v788
  %v815 = vadd.f32 %v685, %v808
  %v816 = vld [vmem:[%s11 + $0x8] sm:$0xff]
  %v817 = vld [vmem:[%s11 + $0x10] sm:$0xff]
  %v818 = vld [vmem:[%s11 + $0x18] sm:$0xff]
  %v819 = vld [vmem:[%s11 + $0x20] sm:$0xff]
  %v820 = vld [vmem:[%s11 + $0x28] sm:$0xff]
  %v821 = vld [vmem:[%s11 + $0x30] sm:$0xff]
  %v822 = vld [vmem:[%s11 + $0x38] sm:$0xff]
  %v823 = vld [vmem:[%s2 + $0x28] sm:$0xff]
  %831 = vrot.lane.b32.xlu0 %v816, 127
  %v832 = vpop.permute.xlu0 %831
  %833 = vrot.lane.b32.xlu0 %v817, 127
  %v834 = vpop.permute.xlu0 %833
  %835 = vrot.lane.b32.xlu0 %v818, 127
  %v836 = vpop.permute.xlu0 %835
  %837 = vrot.lane.b32.xlu0 %v819, 127
  %v838 = vpop.permute.xlu0 %837
  %839 = vrot.lane.b32.xlu0 %v820, 127
  %v840 = vpop.permute.xlu0 %839
  %841 = vrot.lane.b32.xlu0 %v821, 127
  %v842 = vpop.permute.xlu0 %841
  %843 = vrot.lane.b32.xlu0 %v822, 127
  %v844 = vpop.permute.xlu0 %843
  %vm845 = vcmask 1039360
  %v846 = vsel %vm845, %v832, %v834
  %v847 = vsel %vm845, %v834, %v836
  %v848 = vsel %vm845, %v836, %v838
  %v849 = vsel %vm845, %v838, %v840
  %v850 = vsel %vm845, %v840, %v842
  %v851 = vsel %vm845, %v842, %v844
  %v859 = vsel %vm98, %v823, 0
  %861 = vmatpush.msra.mxu0 0.0
  %862 = vmatpush.msra.mxu0 0.0
  %863 = vmatpush.msra.mxu0 0.0
  %864 = vmatpush.msra.mxu0 0.0
  %865 = vmatpush.msra.mxu0 0.0
  %866 = vmatpush.msra.mxu0 0.0
  %867 = vmatpush.msra.mxu0 0.0
  %868 = vmatpush.msra.mxu0 0.0
  %869 = vmatpush.msra.mxu0 0.0
  %870 = vmatpush.msra.mxu0 0.0
  %871 = vmatpush.msra.mxu0 0.0
  %872 = vmatpush.msra.mxu0 0.0
  %873 = vmatpush.msra.mxu0 0.0
  %874 = vmatpush.msra.mxu0 0.0
  %875 = vmatpush.msra.mxu0 0.0
  %876 = vmatpush.msra.mxu0 %v846
  %877 = vmatmul.f32.gmra.mxu0 %v859
  %v878 = vpop.f32.mrf.mxu0
  %v879 = vadd.f32 0.0, %v878
  %880 = vdwg.mxu0
  %881 = vmatpush.msra.mxu0 0.0
  %882 = vmatpush.msra.mxu0 0.0
  %883 = vmatpush.msra.mxu0 0.0
  %884 = vmatpush.msra.mxu0 0.0
  %885 = vmatpush.msra.mxu0 0.0
  %886 = vmatpush.msra.mxu0 0.0
  %887 = vmatpush.msra.mxu0 0.0
  %888 = vmatpush.msra.mxu0 0.0
  %889 = vmatpush.msra.mxu0 0.0
  %890 = vmatpush.msra.mxu0 0.0
  %891 = vmatpush.msra.mxu0 0.0
  %892 = vmatpush.msra.mxu0 0.0
  %893 = vmatpush.msra.mxu0 0.0
  %894 = vmatpush.msra.mxu0 0.0
  %895 = vmatpush.msra.mxu0 0.0
  %896 = vmatpush.msra.mxu0 %v847
  %897 = vmatmul.f32.gmra.mxu0 %v859
  %v898 = vpop.f32.mrf.mxu0
  %v899 = vadd.f32 0.0, %v898
  %900 = vdwg.mxu0
  %901 = vmatpush.msra.mxu0 0.0
  %902 = vmatpush.msra.mxu0 0.0
  %903 = vmatpush.msra.mxu0 0.0
  %904 = vmatpush.msra.mxu0 0.0
  %905 = vmatpush.msra.mxu0 0.0
  %906 = vmatpush.msra.mxu0 0.0
  %907 = vmatpush.msra.mxu0 0.0
  %908 = vmatpush.msra.mxu0 0.0
  %909 = vmatpush.msra.mxu0 0.0
  %910 = vmatpush.msra.mxu0 0.0
  %911 = vmatpush.msra.mxu0 0.0
  %912 = vmatpush.msra.mxu0 0.0
  %913 = vmatpush.msra.mxu0 0.0
  %914 = vmatpush.msra.mxu0 0.0
  %915 = vmatpush.msra.mxu0 0.0
  %916 = vmatpush.msra.mxu0 %v848
  %917 = vmatmul.f32.gmra.mxu0 %v859
  %v918 = vpop.f32.mrf.mxu0
  %v919 = vadd.f32 0.0, %v918
  %920 = vdwg.mxu0
  %921 = vmatpush.msra.mxu0 0.0
  %922 = vmatpush.msra.mxu0 0.0
  %923 = vmatpush.msra.mxu0 0.0
  %924 = vmatpush.msra.mxu0 0.0
  %925 = vmatpush.msra.mxu0 0.0
  %926 = vmatpush.msra.mxu0 0.0
  %927 = vmatpush.msra.mxu0 0.0
  %928 = vmatpush.msra.mxu0 0.0
  %929 = vmatpush.msra.mxu0 0.0
  %930 = vmatpush.msra.mxu0 0.0
  %931 = vmatpush.msra.mxu0 0.0
  %932 = vmatpush.msra.mxu0 0.0
  %933 = vmatpush.msra.mxu0 0.0
  %934 = vmatpush.msra.mxu0 0.0
  %935 = vmatpush.msra.mxu0 0.0
  %936 = vmatpush.msra.mxu0 %v849
  %937 = vmatmul.f32.gmra.mxu0 %v859
  %v938 = vpop.f32.mrf.mxu0
  %v939 = vadd.f32 0.0, %v938
  %940 = vdwg.mxu0
  %941 = vmatpush.msra.mxu0 0.0
  %942 = vmatpush.msra.mxu0 0.0
  %943 = vmatpush.msra.mxu0 0.0
  %944 = vmatpush.msra.mxu0 0.0
  %945 = vmatpush.msra.mxu0 0.0
  %946 = vmatpush.msra.mxu0 0.0
  %947 = vmatpush.msra.mxu0 0.0
  %948 = vmatpush.msra.mxu0 0.0
  %949 = vmatpush.msra.mxu0 0.0
  %950 = vmatpush.msra.mxu0 0.0
  %951 = vmatpush.msra.mxu0 0.0
  %952 = vmatpush.msra.mxu0 0.0
  %953 = vmatpush.msra.mxu0 0.0
  %954 = vmatpush.msra.mxu0 0.0
  %955 = vmatpush.msra.mxu0 0.0
  %956 = vmatpush.msra.mxu0 %v850
  %957 = vmatmul.f32.gmra.mxu0 %v859
  %v958 = vpop.f32.mrf.mxu0
  %v959 = vadd.f32 0.0, %v958
  %960 = vdwg.mxu0
  %961 = vmatpush.msra.mxu0 0.0
  %962 = vmatpush.msra.mxu0 0.0
  %963 = vmatpush.msra.mxu0 0.0
  %964 = vmatpush.msra.mxu0 0.0
  %965 = vmatpush.msra.mxu0 0.0
  %966 = vmatpush.msra.mxu0 0.0
  %967 = vmatpush.msra.mxu0 0.0
  %968 = vmatpush.msra.mxu0 0.0
  %969 = vmatpush.msra.mxu0 0.0
  %970 = vmatpush.msra.mxu0 0.0
  %971 = vmatpush.msra.mxu0 0.0
  %972 = vmatpush.msra.mxu0 0.0
  %973 = vmatpush.msra.mxu0 0.0
  %974 = vmatpush.msra.mxu0 0.0
  %975 = vmatpush.msra.mxu0 0.0
  %976 = vmatpush.msra.mxu0 %v851
  %977 = vmatmul.f32.gmra.mxu0 %v859
  %v978 = vpop.f32.mrf.mxu0
  %v979 = vadd.f32 0.0, %v978
  %980 = vdwg.mxu0
  %v981 = vadd.f32 %v810, %v879
  %v982 = vadd.f32 %v811, %v899
  %v983 = vadd.f32 %v812, %v919
  %v984 = vadd.f32 %v813, %v939
  %v985 = vadd.f32 %v814, %v959
  %v986 = vadd.f32 %v815, %v979
  %v987 = vld [vmem:[%s2 + $0x30] sm:$0xff]
  %988 = vrot.lane.b32.xlu0 %v816, 111
  %v989 = vpop.permute.xlu0 %988
  %990 = vrot.lane.b32.xlu0 %v817, 111
  %v991 = vpop.permute.xlu0 %990
  %992 = vrot.lane.b32.xlu0 %v818, 111
  %v993 = vpop.permute.xlu0 %992
  %994 = vrot.lane.b32.xlu0 %v819, 111
  %v995 = vpop.permute.xlu0 %994
  %996 = vrot.lane.b32.xlu0 %v820, 111
  %v997 = vpop.permute.xlu0 %996
  %998 = vrot.lane.b32.xlu0 %v821, 111
  %v999 = vpop.permute.xlu0 %998
  %1000 = vrot.lane.b32.xlu0 %v822, 111
  %v1001 = vpop.permute.xlu0 %1000
  %vm1002 = vcmask 908288
  %v1003 = vsel %vm1002, %v989, %v991
  %v1004 = vsel %vm1002, %v991, %v993
  %v1005 = vsel %vm1002, %v993, %v995
  %v1006 = vsel %vm1002, %v995, %v997
  %v1007 = vsel %vm1002, %v997, %v999
  %v1008 = vsel %vm1002, %v999, %v1001
  %v1016 = vsel %vm98, %v987, 0
  %1018 = vmatpush.msra.mxu0 0.0
  %1019 = vmatpush.msra.mxu0 0.0
  %1020 = vmatpush.msra.mxu0 0.0
  %1021 = vmatpush.msra.mxu0 0.0
  %1022 = vmatpush.msra.mxu0 0.0
  %1023 = vmatpush.msra.mxu0 0.0
  %1024 = vmatpush.msra.mxu0 0.0
  %1025 = vmatpush.msra.mxu0 0.0
  %1026 = vmatpush.msra.mxu0 0.0
  %1027 = vmatpush.msra.mxu0 0.0
  %1028 = vmatpush.msra.mxu0 0.0
  %1029 = vmatpush.msra.mxu0 0.0
  %1030 = vmatpush.msra.mxu0 0.0
  %1031 = vmatpush.msra.mxu0 0.0
  %1032 = vmatpush.msra.mxu0 0.0
  %1033 = vmatpush.msra.mxu0 %v1003
  %1034 = vmatmul.f32.gmra.mxu0 %v1016
  %v1035 = vpop.f32.mrf.mxu0
  %v1036 = vadd.f32 0.0, %v1035
  %1037 = vdwg.mxu0
  %1038 = vmatpush.msra.mxu0 0.0
  %1039 = vmatpush.msra.mxu0 0.0
  %1040 = vmatpush.msra.mxu0 0.0
  %1041 = vmatpush.msra.mxu0 0.0
  %1042 = vmatpush.msra.mxu0 0.0
  %1043 = vmatpush.msra.mxu0 0.0
  %1044 = vmatpush.msra.mxu0 0.0
  %1045 = vmatpush.msra.mxu0 0.0
  %1046 = vmatpush.msra.mxu0 0.0
  %1047 = vmatpush.msra.mxu0 0.0
  %1048 = vmatpush.msra.mxu0 0.0
  %1049 = vmatpush.msra.mxu0 0.0
  %1050 = vmatpush.msra.mxu0 0.0
  %1051 = vmatpush.msra.mxu0 0.0
  %1052 = vmatpush.msra.mxu0 0.0
  %1053 = vmatpush.msra.mxu0 %v1004
  %1054 = vmatmul.f32.gmra.mxu0 %v1016
  %v1055 = vpop.f32.mrf.mxu0
  %v1056 = vadd.f32 0.0, %v1055
  %1057 = vdwg.mxu0
  %1058 = vmatpush.msra.mxu0 0.0
  %1059 = vmatpush.msra.mxu0 0.0
  %1060 = vmatpush.msra.mxu0 0.0
  %1061 = vmatpush.msra.mxu0 0.0
  %1062 = vmatpush.msra.mxu0 0.0
  %1063 = vmatpush.msra.mxu0 0.0
  %1064 = vmatpush.msra.mxu0 0.0
  %1065 = vmatpush.msra.mxu0 0.0
  %1066 = vmatpush.msra.mxu0 0.0
  %1067 = vmatpush.msra.mxu0 0.0
  %1068 = vmatpush.msra.mxu0 0.0
  %1069 = vmatpush.msra.mxu0 0.0
  %1070 = vmatpush.msra.mxu0 0.0
  %1071 = vmatpush.msra.mxu0 0.0
  %1072 = vmatpush.msra.mxu0 0.0
  %1073 = vmatpush.msra.mxu0 %v1005
  %1074 = vmatmul.f32.gmra.mxu0 %v1016
  %v1075 = vpop.f32.mrf.mxu0
  %v1076 = vadd.f32 0.0, %v1075
  %1077 = vdwg.mxu0
  %1078 = vmatpush.msra.mxu0 0.0
  %1079 = vmatpush.msra.mxu0 0.0
  %1080 = vmatpush.msra.mxu0 0.0
  %1081 = vmatpush.msra.mxu0 0.0
  %1082 = vmatpush.msra.mxu0 0.0
  %1083 = vmatpush.msra.mxu0 0.0
  %1084 = vmatpush.msra.mxu0 0.0
  %1085 = vmatpush.msra.mxu0 0.0
  %1086 = vmatpush.msra.mxu0 0.0
  %1087 = vmatpush.msra.mxu0 0.0
  %1088 = vmatpush.msra.mxu0 0.0
  %1089 = vmatpush.msra.mxu0 0.0
  %1090 = vmatpush.msra.mxu0 0.0
  %1091 = vmatpush.msra.mxu0 0.0
  %1092 = vmatpush.msra.mxu0 0.0
  %1093 = vmatpush.msra.mxu0 %v1006
  %1094 = vmatmul.f32.gmra.mxu0 %v1016
  %v1095 = vpop.f32.mrf.mxu0
  %v1096 = vadd.f32 0.0, %v1095
  %1097 = vdwg.mxu0
  %1098 = vmatpush.msra.mxu0 0.0
  %1099 = vmatpush.msra.mxu0 0.0
  %1100 = vmatpush.msra.mxu0 0.0
  %1101 = vmatpush.msra.mxu0 0.0
  %1102 = vmatpush.msra.mxu0 0.0
  %1103 = vmatpush.msra.mxu0 0.0
  %1104 = vmatpush.msra.mxu0 0.0
  %1105 = vmatpush.msra.mxu0 0.0
  %1106 = vmatpush.msra.mxu0 0.0
  %1107 = vmatpush.msra.mxu0 0.0
  %1108 = vmatpush.msra.mxu0 0.0
  %1109 = vmatpush.msra.mxu0 0.0
  %1110 = vmatpush.msra.mxu0 0.0
  %1111 = vmatpush.msra.mxu0 0.0
  %1112 = vmatpush.msra.mxu0 0.0
  %1113 = vmatpush.msra.mxu0 %v1007
  %1114 = vmatmul.f32.gmra.mxu0 %v1016
  %v1115 = vpop.f32.mrf.mxu0
  %v1116 = vadd.f32 0.0, %v1115
  %1117 = vdwg.mxu0
  %1118 = vmatpush.msra.mxu0 0.0
  %1119 = vmatpush.msra.mxu0 0.0
  %1120 = vmatpush.msra.mxu0 0.0
  %1121 = vmatpush.msra.mxu0 0.0
  %1122 = vmatpush.msra.mxu0 0.0
  %1123 = vmatpush.msra.mxu0 0.0
  %1124 = vmatpush.msra.mxu0 0.0
  %1125 = vmatpush.msra.mxu0 0.0
  %1126 = vmatpush.msra.mxu0 0.0
  %1127 = vmatpush.msra.mxu0 0.0
  %1128 = vmatpush.msra.mxu0 0.0
  %1129 = vmatpush.msra.mxu0 0.0
  %1130 = vmatpush.msra.mxu0 0.0
  %1131 = vmatpush.msra.mxu0 0.0
  %1132 = vmatpush.msra.mxu0 0.0
  %1133 = vmatpush.msra.mxu0 %v1008
  %1134 = vmatmul.f32.gmra.mxu0 %v1016
  %v1135 = vpop.f32.mrf.mxu0
  %v1136 = vadd.f32 0.0, %v1135
  %1137 = vdwg.mxu0
  %v1138 = vadd.f32 %v981, %v1036
  %v1139 = vadd.f32 %v982, %v1056
  %v1140 = vadd.f32 %v983, %v1076
  %v1141 = vadd.f32 %v984, %v1096
  %v1142 = vadd.f32 %v985, %v1116
  %v1143 = vadd.f32 %v986, %v1136
  %v1144 = vld [vmem:[%s2 + $0x38] sm:$0xff]
  %1145 = vrot.lane.b32.xlu0 %v816, 110
  %v1146 = vpop.permute.xlu0 %1145
  %1147 = vrot.lane.b32.xlu0 %v817, 110
  %v1148 = vpop.permute.xlu0 %1147
  %1149 = vrot.lane.b32.xlu0 %v818, 110
  %v1150 = vpop.permute.xlu0 %1149
  %1151 = vrot.lane.b32.xlu0 %v819, 110
  %v1152 = vpop.permute.xlu0 %1151
  %1153 = vrot.lane.b32.xlu0 %v820, 110
  %v1154 = vpop.permute.xlu0 %1153
  %1155 = vrot.lane.b32.xlu0 %v821, 110
  %v1156 = vpop.permute.xlu0 %1155
  %1157 = vrot.lane.b32.xlu0 %v822, 110
  %v1158 = vpop.permute.xlu0 %1157
  %vm1159 = vcmask 900096
  %v1160 = vsel %vm1159, %v1146, %v1148
  %v1161 = vsel %vm1159, %v1148, %v1150
  %v1162 = vsel %vm1159, %v1150, %v1152
  %v1163 = vsel %vm1159, %v1152, %v1154
  %v1164 = vsel %vm1159, %v1154, %v1156
  %v1165 = vsel %vm1159, %v1156, %v1158
  %v1173 = vsel %vm98, %v1144, 0
  %1175 = vmatpush.msra.mxu0 0.0
  %1176 = vmatpush.msra.mxu0 0.0
  %1177 = vmatpush.msra.mxu0 0.0
  %1178 = vmatpush.msra.mxu0 0.0
  %1179 = vmatpush.msra.mxu0 0.0
  %1180 = vmatpush.msra.mxu0 0.0
  %1181 = vmatpush.msra.mxu0 0.0
  %1182 = vmatpush.msra.mxu0 0.0
  %1183 = vmatpush.msra.mxu0 0.0
  %1184 = vmatpush.msra.mxu0 0.0
  %1185 = vmatpush.msra.mxu0 0.0
  %1186 = vmatpush.msra.mxu0 0.0
  %1187 = vmatpush.msra.mxu0 0.0
  %1188 = vmatpush.msra.mxu0 0.0
  %1189 = vmatpush.msra.mxu0 0.0
  %1190 = vmatpush.msra.mxu0 %v1160
  %1191 = vmatmul.f32.gmra.mxu0 %v1173
  %v1192 = vpop.f32.mrf.mxu0
  %v1193 = vadd.f32 0.0, %v1192
  %1194 = vdwg.mxu0
  %1195 = vmatpush.msra.mxu0 0.0
  %1196 = vmatpush.msra.mxu0 0.0
  %1197 = vmatpush.msra.mxu0 0.0
  %1198 = vmatpush.msra.mxu0 0.0
  %1199 = vmatpush.msra.mxu0 0.0
  %1200 = vmatpush.msra.mxu0 0.0
  %1201 = vmatpush.msra.mxu0 0.0
  %1202 = vmatpush.msra.mxu0 0.0
  %1203 = vmatpush.msra.mxu0 0.0
  %1204 = vmatpush.msra.mxu0 0.0
  %1205 = vmatpush.msra.mxu0 0.0
  %1206 = vmatpush.msra.mxu0 0.0
  %1207 = vmatpush.msra.mxu0 0.0
  %1208 = vmatpush.msra.mxu0 0.0
  %1209 = vmatpush.msra.mxu0 0.0
  %1210 = vmatpush.msra.mxu0 %v1161
  %1211 = vmatmul.f32.gmra.mxu0 %v1173
  %v1212 = vpop.f32.mrf.mxu0
  %v1213 = vadd.f32 0.0, %v1212
  %1214 = vdwg.mxu0
  %1215 = vmatpush.msra.mxu0 0.0
  %1216 = vmatpush.msra.mxu0 0.0
  %1217 = vmatpush.msra.mxu0 0.0
  %1218 = vmatpush.msra.mxu0 0.0
  %1219 = vmatpush.msra.mxu0 0.0
  %1220 = vmatpush.msra.mxu0 0.0
  %1221 = vmatpush.msra.mxu0 0.0
  %1222 = vmatpush.msra.mxu0 0.0
  %1223 = vmatpush.msra.mxu0 0.0
  %1224 = vmatpush.msra.mxu0 0.0
  %1225 = vmatpush.msra.mxu0 0.0
  %1226 = vmatpush.msra.mxu0 0.0
  %1227 = vmatpush.msra.mxu0 0.0
  %1228 = vmatpush.msra.mxu0 0.0
  %1229 = vmatpush.msra.mxu0 0.0
  %1230 = vmatpush.msra.mxu0 %v1162
  %1231 = vmatmul.f32.gmra.mxu0 %v1173
  %v1232 = vpop.f32.mrf.mxu0
  %v1233 = vadd.f32 0.0, %v1232
  %1234 = vdwg.mxu0
  %1235 = vmatpush.msra.mxu0 0.0
  %1236 = vmatpush.msra.mxu0 0.0
  %1237 = vmatpush.msra.mxu0 0.0
  %1238 = vmatpush.msra.mxu0 0.0
  %1239 = vmatpush.msra.mxu0 0.0
  %1240 = vmatpush.msra.mxu0 0.0
  %1241 = vmatpush.msra.mxu0 0.0
  %1242 = vmatpush.msra.mxu0 0.0
  %1243 = vmatpush.msra.mxu0 0.0
  %1244 = vmatpush.msra.mxu0 0.0
  %1245 = vmatpush.msra.mxu0 0.0
  %1246 = vmatpush.msra.mxu0 0.0
  %1247 = vmatpush.msra.mxu0 0.0
  %1248 = vmatpush.msra.mxu0 0.0
  %1249 = vmatpush.msra.mxu0 0.0
  %1250 = vmatpush.msra.mxu0 %v1163
  %1251 = vmatmul.f32.gmra.mxu0 %v1173
  %v1252 = vpop.f32.mrf.mxu0
  %v1253 = vadd.f32 0.0, %v1252
  %1254 = vdwg.mxu0
  %1255 = vmatpush.msra.mxu0 0.0
  %1256 = vmatpush.msra.mxu0 0.0
  %1257 = vmatpush.msra.mxu0 0.0
  %1258 = vmatpush.msra.mxu0 0.0
  %1259 = vmatpush.msra.mxu0 0.0
  %1260 = vmatpush.msra.mxu0 0.0
  %1261 = vmatpush.msra.mxu0 0.0
  %1262 = vmatpush.msra.mxu0 0.0
  %1263 = vmatpush.msra.mxu0 0.0
  %1264 = vmatpush.msra.mxu0 0.0
  %1265 = vmatpush.msra.mxu0 0.0
  %1266 = vmatpush.msra.mxu0 0.0
  %1267 = vmatpush.msra.mxu0 0.0
  %1268 = vmatpush.msra.mxu0 0.0
  %1269 = vmatpush.msra.mxu0 0.0
  %1270 = vmatpush.msra.mxu0 %v1164
  %1271 = vmatmul.f32.gmra.mxu0 %v1173
  %v1272 = vpop.f32.mrf.mxu0
  %v1273 = vadd.f32 0.0, %v1272
  %1274 = vdwg.mxu0
  %1275 = vmatpush.msra.mxu0 0.0
  %1276 = vmatpush.msra.mxu0 0.0
  %1277 = vmatpush.msra.mxu0 0.0
  %1278 = vmatpush.msra.mxu0 0.0
  %1279 = vmatpush.msra.mxu0 0.0
  %1280 = vmatpush.msra.mxu0 0.0
  %1281 = vmatpush.msra.mxu0 0.0
  %1282 = vmatpush.msra.mxu0 0.0
  %1283 = vmatpush.msra.mxu0 0.0
  %1284 = vmatpush.msra.mxu0 0.0
  %1285 = vmatpush.msra.mxu0 0.0
  %1286 = vmatpush.msra.mxu0 0.0
  %1287 = vmatpush.msra.mxu0 0.0
  %1288 = vmatpush.msra.mxu0 0.0
  %1289 = vmatpush.msra.mxu0 0.0
  %1290 = vmatpush.msra.mxu0 %v1165
  %1291 = vmatmul.f32.gmra.mxu0 %v1173
  %v1292 = vpop.f32.mrf.mxu0
  %v1293 = vadd.f32 0.0, %v1292
  %1294 = vdwg.mxu0
  %v1295 = vadd.f32 %v1138, %v1193
  %v1296 = vadd.f32 %v1139, %v1213
  %v1297 = vadd.f32 %v1140, %v1233
  %v1298 = vadd.f32 %v1141, %v1253
  %v1299 = vadd.f32 %v1142, %v1273
  %v1300 = vadd.f32 %v1143, %v1293
  %v1301 = vld [vmem:[%s2 + $0x40] sm:$0xff]
  %1302 = vrot.lane.b32.xlu0 %v816, 109
  %v1303 = vpop.permute.xlu0 %1302
  %1304 = vrot.lane.b32.xlu0 %v817, 109
  %v1305 = vpop.permute.xlu0 %1304
  %1306 = vrot.lane.b32.xlu0 %v818, 109
  %v1307 = vpop.permute.xlu0 %1306
  %1308 = vrot.lane.b32.xlu0 %v819, 109
  %v1309 = vpop.permute.xlu0 %1308
  %1310 = vrot.lane.b32.xlu0 %v820, 109
  %v1311 = vpop.permute.xlu0 %1310
  %1312 = vrot.lane.b32.xlu0 %v821, 109
  %v1313 = vpop.permute.xlu0 %1312
  %1314 = vrot.lane.b32.xlu0 %v822, 109
  %v1315 = vpop.permute.xlu0 %1314
  %vm1316 = vcmask 891904
  %v1317 = vsel %vm1316, %v1303, %v1305
  %v1318 = vsel %vm1316, %v1305, %v1307
  %v1319 = vsel %vm1316, %v1307, %v1309
  %v1320 = vsel %vm1316, %v1309, %v1311
  %v1321 = vsel %vm1316, %v1311, %v1313
  %v1322 = vsel %vm1316, %v1313, %v1315
  %v1330 = vsel %vm98, %v1301, 0
  %1332 = vmatpush.msra.mxu0 0.0
  %1333 = vmatpush.msra.mxu0 0.0
  %1334 = vmatpush.msra.mxu0 0.0
  %1335 = vmatpush.msra.mxu0 0.0
  %1336 = vmatpush.msra.mxu0 0.0
  %1337 = vmatpush.msra.mxu0 0.0
  %1338 = vmatpush.msra.mxu0 0.0
  %1339 = vmatpush.msra.mxu0 0.0
  %1340 = vmatpush.msra.mxu0 0.0
  %1341 = vmatpush.msra.mxu0 0.0
  %1342 = vmatpush.msra.mxu0 0.0
  %1343 = vmatpush.msra.mxu0 0.0
  %1344 = vmatpush.msra.mxu0 0.0
  %1345 = vmatpush.msra.mxu0 0.0
  %1346 = vmatpush.msra.mxu0 0.0
  %1347 = vmatpush.msra.mxu0 %v1317
  %1348 = vmatmul.f32.gmra.mxu0 %v1330
  %v1349 = vpop.f32.mrf.mxu0
  %v1350 = vadd.f32 0.0, %v1349
  %1351 = vdwg.mxu0
  %1352 = vmatpush.msra.mxu0 0.0
  %1353 = vmatpush.msra.mxu0 0.0
  %1354 = vmatpush.msra.mxu0 0.0
  %1355 = vmatpush.msra.mxu0 0.0
  %1356 = vmatpush.msra.mxu0 0.0
  %1357 = vmatpush.msra.mxu0 0.0
  %1358 = vmatpush.msra.mxu0 0.0
  %1359 = vmatpush.msra.mxu0 0.0
  %1360 = vmatpush.msra.mxu0 0.0
  %1361 = vmatpush.msra.mxu0 0.0
  %1362 = vmatpush.msra.mxu0 0.0
  %1363 = vmatpush.msra.mxu0 0.0
  %1364 = vmatpush.msra.mxu0 0.0
  %1365 = vmatpush.msra.mxu0 0.0
  %1366 = vmatpush.msra.mxu0 0.0
  %1367 = vmatpush.msra.mxu0 %v1318
  %1368 = vmatmul.f32.gmra.mxu0 %v1330
  %v1369 = vpop.f32.mrf.mxu0
  %v1370 = vadd.f32 0.0, %v1369
  %1371 = vdwg.mxu0
  %1372 = vmatpush.msra.mxu0 0.0
  %1373 = vmatpush.msra.mxu0 0.0
  %1374 = vmatpush.msra.mxu0 0.0
  %1375 = vmatpush.msra.mxu0 0.0
  %1376 = vmatpush.msra.mxu0 0.0
  %1377 = vmatpush.msra.mxu0 0.0
  %1378 = vmatpush.msra.mxu0 0.0
  %1379 = vmatpush.msra.mxu0 0.0
  %1380 = vmatpush.msra.mxu0 0.0
  %1381 = vmatpush.msra.mxu0 0.0
  %1382 = vmatpush.msra.mxu0 0.0
  %1383 = vmatpush.msra.mxu0 0.0
  %1384 = vmatpush.msra.mxu0 0.0
  %1385 = vmatpush.msra.mxu0 0.0
  %1386 = vmatpush.msra.mxu0 0.0
  %1387 = vmatpush.msra.mxu0 %v1319
  %1388 = vmatmul.f32.gmra.mxu0 %v1330
  %v1389 = vpop.f32.mrf.mxu0
  %v1390 = vadd.f32 0.0, %v1389
  %1391 = vdwg.mxu0
  %1392 = vmatpush.msra.mxu0 0.0
  %1393 = vmatpush.msra.mxu0 0.0
  %1394 = vmatpush.msra.mxu0 0.0
  %1395 = vmatpush.msra.mxu0 0.0
  %1396 = vmatpush.msra.mxu0 0.0
  %1397 = vmatpush.msra.mxu0 0.0
  %1398 = vmatpush.msra.mxu0 0.0
  %1399 = vmatpush.msra.mxu0 0.0
  %1400 = vmatpush.msra.mxu0 0.0
  %1401 = vmatpush.msra.mxu0 0.0
  %1402 = vmatpush.msra.mxu0 0.0
  %1403 = vmatpush.msra.mxu0 0.0
  %1404 = vmatpush.msra.mxu0 0.0
  %1405 = vmatpush.msra.mxu0 0.0
  %1406 = vmatpush.msra.mxu0 0.0
  %1407 = vmatpush.msra.mxu0 %v1320
  %1408 = vmatmul.f32.gmra.mxu0 %v1330
  %v1409 = vpop.f32.mrf.mxu0
  %v1410 = vadd.f32 0.0, %v1409
  %1411 = vdwg.mxu0
  %1412 = vmatpush.msra.mxu0 0.0
  %1413 = vmatpush.msra.mxu0 0.0
  %1414 = vmatpush.msra.mxu0 0.0
  %1415 = vmatpush.msra.mxu0 0.0
  %1416 = vmatpush.msra.mxu0 0.0
  %1417 = vmatpush.msra.mxu0 0.0
  %1418 = vmatpush.msra.mxu0 0.0
  %1419 = vmatpush.msra.mxu0 0.0
  %1420 = vmatpush.msra.mxu0 0.0
  %1421 = vmatpush.msra.mxu0 0.0
  %1422 = vmatpush.msra.mxu0 0.0
  %1423 = vmatpush.msra.mxu0 0.0
  %1424 = vmatpush.msra.mxu0 0.0
  %1425 = vmatpush.msra.mxu0 0.0
  %1426 = vmatpush.msra.mxu0 0.0
  %1427 = vmatpush.msra.mxu0 %v1321
  %1428 = vmatmul.f32.gmra.mxu0 %v1330
  %v1429 = vpop.f32.mrf.mxu0
  %v1430 = vadd.f32 0.0, %v1429
  %1431 = vdwg.mxu0
  %1432 = vmatpush.msra.mxu0 0.0
  %1433 = vmatpush.msra.mxu0 0.0
  %1434 = vmatpush.msra.mxu0 0.0
  %1435 = vmatpush.msra.mxu0 0.0
  %1436 = vmatpush.msra.mxu0 0.0
  %1437 = vmatpush.msra.mxu0 0.0
  %1438 = vmatpush.msra.mxu0 0.0
  %1439 = vmatpush.msra.mxu0 0.0
  %1440 = vmatpush.msra.mxu0 0.0
  %1441 = vmatpush.msra.mxu0 0.0
  %1442 = vmatpush.msra.mxu0 0.0
  %1443 = vmatpush.msra.mxu0 0.0
  %1444 = vmatpush.msra.mxu0 0.0
  %1445 = vmatpush.msra.mxu0 0.0
  %1446 = vmatpush.msra.mxu0 0.0
  %1447 = vmatpush.msra.mxu0 %v1322
  %1448 = vmatmul.f32.gmra.mxu0 %v1330
  %v1449 = vpop.f32.mrf.mxu0
  %v1450 = vadd.f32 0.0, %v1449
  %1451 = vdwg.mxu0
  %v1452 = vadd.f32 %v1295, %v1350
  %v1453 = vadd.f32 %v1296, %v1370
  %v1454 = vadd.f32 %v1297, %v1390
  %v1455 = vadd.f32 %v1298, %v1410
  %v1456 = vadd.f32 %v1299, %v1430
  %v1457 = vadd.f32 %v1300, %v1450
  %v1459 = vperm.slane %v54, 0
  %v1460 = vperm.slane %v54, 1
  %v1461 = vperm.slane %v54, 2
  %v1462 = vperm.slane %v54, 3
  %v1463 = vperm.slane %v54, 4
  %v1464 = vperm.slane %v54, 5
  %v1471 = vmul.f32 %v1452, %v1459
  %v1472 = vmul.f32 %v1453, %v1460
  %v1473 = vmul.f32 %v1454, %v1461
  %v1474 = vmul.f32 %v1455, %v1462
  %v1475 = vmul.f32 %v1456, %v1463
  %v1476 = vmul.f32 %v1457, %v1464
  %v1477 = vadd.f32 %v1471, %v1472
  %v1478 = vadd.f32 %v1477, %v1473
  %v1479 = vadd.f32 %v1478, %v1474
  %v1480 = vadd.f32 %v1479, %v1475
  %v1481 = vadd.f32 %v1480, %v1476
  %1482 = vadd.xlane.f32.xlu0 %v1481
  %v1483 = vpop.xlane.xlu0 %1482
  %v1484 = vmul.f32 %v1452, %v1452
  %v1485 = vmul.f32 %v1453, %v1453
  %v1486 = vmul.f32 %v1454, %v1454
  %v1487 = vmul.f32 %v1455, %v1455
  %v1488 = vmul.f32 %v1456, %v1456
  %v1489 = vmul.f32 %v1457, %v1457
  %v1490 = vmul.f32 %v1484, %v1459
  %v1491 = vmul.f32 %v1485, %v1460
  %v1492 = vmul.f32 %v1486, %v1461
  %v1493 = vmul.f32 %v1487, %v1462
  %v1494 = vmul.f32 %v1488, %v1463
  %v1495 = vmul.f32 %v1489, %v1464
  %v1496 = vadd.f32 %v1490, %v1491
  %v1497 = vadd.f32 %v1496, %v1492
  %v1498 = vadd.f32 %v1497, %v1493
  %v1499 = vadd.f32 %v1498, %v1494
  %v1500 = vadd.f32 %v1499, %v1495
  %1501 = vadd.xlane.f32.xlu0 %v1500
  %v1502 = vpop.xlane.xlu0 %1501
  %v1503 = vmul.f32 %v1483, 0.001953125
  %v1504 = vmul.f32 %v1502, 0.001953125
  %v1505 = vmul.f32 %v1503, %v1503
  %v1506 = vsub.f32 %v1504, %v1505
  %v1507 = vmax.f32 %v1506, 0.0
  %v1508 = vsub.f32 %v1452, %v1503
  %v1509 = vsub.f32 %v1453, %v1503
  %v1510 = vsub.f32 %v1454, %v1503
  %v1511 = vsub.f32 %v1455, %v1503
  %v1512 = vsub.f32 %v1456, %v1503
  %v1513 = vsub.f32 %v1457, %v1503
  %v1514 = vadd.f32 %v1507, 1e-05
  %v1515 = vrsqrt.pop %v1514
  %v1516 = vmul.f32 %v1515, %v1514
  %v1517 = vmul.f32 %v1516, %v1515
  %v1518 = vmul.f32 0.5, %v1517
  %v1519 = vsub.f32 1.5, %v1518
  %v1520 = vmul.f32 %v1515, %v1519
  %vm1521 = vweird.f32 %v1514
  %vm1522 = vweird.f32 %v1515
  %vm1523 = vmor %vm1521, %vm1522
  %v1524 = vsel %vm1523, %v1515, %v1520
  %v1525 = vmul.f32 %v1508, %v1524
  %v1526 = vmul.f32 %v1509, %v1524
  %v1527 = vmul.f32 %v1510, %v1524
  %v1528 = vmul.f32 %v1511, %v1524
  %v1529 = vmul.f32 %v1512, %v1524
  %v1530 = vmul.f32 %v1513, %v1524
  %v1531 = vld [vmem:[%s3] sm:$0xff]
  %1533 = vset.pattern.permute.xlu0 0
  %1534 = vperm.xlu0 %1533, %v1531
  %v1535 = vpop.permute.xlu0 %1534
  %v1537 = vmul.f32 %v1525, %v1535
  %v1538 = vmul.f32 %v1526, %v1535
  %v1539 = vmul.f32 %v1527, %v1535
  %v1540 = vmul.f32 %v1528, %v1535
  %v1541 = vmul.f32 %v1529, %v1535
  %v1542 = vmul.f32 %v1530, %v1535
  %v1543 = vld [vmem:[%s4] sm:$0xff]
  %1545 = vset.pattern.permute.xlu0 0
  %1546 = vperm.xlu0 %1545, %v1543
  %v1547 = vpop.permute.xlu0 %1546
  %v1549 = vadd.f32 %v1537, %v1547
  %v1550 = vadd.f32 %v1538, %v1547
  %v1551 = vadd.f32 %v1539, %v1547
  %v1552 = vadd.f32 %v1540, %v1547
  %v1553 = vadd.f32 %v1541, %v1547
  %v1554 = vadd.f32 %v1542, %v1547
  %v1555 = vmax.f32 %v1549, 0.0
  %v1556 = vmax.f32 %v1550, 0.0
  %v1557 = vmax.f32 %v1551, 0.0
  %v1558 = vmax.f32 %v1552, 0.0
  %v1559 = vmax.f32 %v1553, 0.0
  %v1560 = vmax.f32 %v1554, 0.0
  %v1561 = vmul.f32 %v1555, %v1459
  %v1562 = vmul.f32 %v1556, %v1460
  %v1563 = vmul.f32 %v1557, %v1461
  %v1564 = vmul.f32 %v1558, %v1462
  %v1565 = vmul.f32 %v1559, %v1463
  %v1566 = vmul.f32 %v1560, %v1464
  %1567 = vst [vmem:[%s11 + $0x8] sm:$0xff] %v1561
  %1568 = vst [vmem:[%s11 + $0x10] sm:$0xff] %v1562
  %1569 = vst [vmem:[%s11 + $0x18] sm:$0xff] %v1563
  %1570 = vst [vmem:[%s11 + $0x20] sm:$0xff] %v1564
  %1571 = vst [vmem:[%s11 + $0x28] sm:$0xff] %v1565
  %1572 = vst [vmem:[%s11 + $0x30] sm:$0xff] %v1566
  %v1573 = vld [vmem:[%s11] sm:$0xff]
  %v1574 = vld [vmem:[%s11 + $0x8] sm:$0xff]
  %v1575 = vld [vmem:[%s11 + $0x10] sm:$0xff]
  %v1576 = vld [vmem:[%s11 + $0x18] sm:$0xff]
  %v1577 = vld [vmem:[%s11 + $0x20] sm:$0xff]
  %v1578 = vld [vmem:[%s11 + $0x28] sm:$0xff]
  %v1579 = vld [vmem:[%s11 + $0x30] sm:$0xff]
  %v1580 = vld [vmem:[%s5] sm:$0xff]
  %v1581 = vld [vmem:[%s5 + $0x8] sm:$0xff]
  %1589 = vrot.lane.b32.xlu0 %v1573, 18
  %v1590 = vpop.permute.xlu0 %1589
  %1591 = vrot.lane.b32.xlu0 %v1574, 18
  %v1592 = vpop.permute.xlu0 %1591
  %1593 = vrot.lane.b32.xlu0 %v1575, 18
  %v1594 = vpop.permute.xlu0 %1593
  %1595 = vrot.lane.b32.xlu0 %v1576, 18
  %v1596 = vpop.permute.xlu0 %1595
  %1597 = vrot.lane.b32.xlu0 %v1577, 18
  %v1598 = vpop.permute.xlu0 %1597
  %1599 = vrot.lane.b32.xlu0 %v1578, 18
  %v1600 = vpop.permute.xlu0 %1599
  %1601 = vrot.lane.b32.xlu0 %v1579, 18
  %v1602 = vpop.permute.xlu0 %1601
  %v1603 = vsel %vm85, %v1590, %v1592
  %v1604 = vsel %vm85, %v1592, %v1594
  %v1605 = vsel %vm85, %v1594, %v1596
  %v1606 = vsel %vm85, %v1596, %v1598
  %v1607 = vsel %vm85, %v1598, %v1600
  %v1608 = vsel %vm85, %v1600, %v1602
  %v1616 = vsel %vm98, %v1581, 0
  %1618 = vmatpush.msra.mxu0 0.0
  %1619 = vmatpush.msra.mxu0 0.0
  %1620 = vmatpush.msra.mxu0 0.0
  %1621 = vmatpush.msra.mxu0 0.0
  %1622 = vmatpush.msra.mxu0 0.0
  %1623 = vmatpush.msra.mxu0 0.0
  %1624 = vmatpush.msra.mxu0 0.0
  %1625 = vmatpush.msra.mxu0 0.0
  %1626 = vmatpush.msra.mxu0 0.0
  %1627 = vmatpush.msra.mxu0 0.0
  %1628 = vmatpush.msra.mxu0 0.0
  %1629 = vmatpush.msra.mxu0 0.0
  %1630 = vmatpush.msra.mxu0 0.0
  %1631 = vmatpush.msra.mxu0 0.0
  %1632 = vmatpush.msra.mxu0 0.0
  %1633 = vmatpush.msra.mxu0 %v1603
  %1634 = vmatmul.f32.gmra.mxu0 %v1616
  %v1635 = vpop.f32.mrf.mxu0
  %v1636 = vadd.f32 0.0, %v1635
  %1637 = vdwg.mxu0
  %1638 = vmatpush.msra.mxu0 0.0
  %1639 = vmatpush.msra.mxu0 0.0
  %1640 = vmatpush.msra.mxu0 0.0
  %1641 = vmatpush.msra.mxu0 0.0
  %1642 = vmatpush.msra.mxu0 0.0
  %1643 = vmatpush.msra.mxu0 0.0
  %1644 = vmatpush.msra.mxu0 0.0
  %1645 = vmatpush.msra.mxu0 0.0
  %1646 = vmatpush.msra.mxu0 0.0
  %1647 = vmatpush.msra.mxu0 0.0
  %1648 = vmatpush.msra.mxu0 0.0
  %1649 = vmatpush.msra.mxu0 0.0
  %1650 = vmatpush.msra.mxu0 0.0
  %1651 = vmatpush.msra.mxu0 0.0
  %1652 = vmatpush.msra.mxu0 0.0
  %1653 = vmatpush.msra.mxu0 %v1604
  %1654 = vmatmul.f32.gmra.mxu0 %v1616
  %v1655 = vpop.f32.mrf.mxu0
  %v1656 = vadd.f32 0.0, %v1655
  %1657 = vdwg.mxu0
  %1658 = vmatpush.msra.mxu0 0.0
  %1659 = vmatpush.msra.mxu0 0.0
  %1660 = vmatpush.msra.mxu0 0.0
  %1661 = vmatpush.msra.mxu0 0.0
  %1662 = vmatpush.msra.mxu0 0.0
  %1663 = vmatpush.msra.mxu0 0.0
  %1664 = vmatpush.msra.mxu0 0.0
  %1665 = vmatpush.msra.mxu0 0.0
  %1666 = vmatpush.msra.mxu0 0.0
  %1667 = vmatpush.msra.mxu0 0.0
  %1668 = vmatpush.msra.mxu0 0.0
  %1669 = vmatpush.msra.mxu0 0.0
  %1670 = vmatpush.msra.mxu0 0.0
  %1671 = vmatpush.msra.mxu0 0.0
  %1672 = vmatpush.msra.mxu0 0.0
  %1673 = vmatpush.msra.mxu0 %v1605
  %1674 = vmatmul.f32.gmra.mxu0 %v1616
  %v1675 = vpop.f32.mrf.mxu0
  %v1676 = vadd.f32 0.0, %v1675
  %1677 = vdwg.mxu0
  %1678 = vmatpush.msra.mxu0 0.0
  %1679 = vmatpush.msra.mxu0 0.0
  %1680 = vmatpush.msra.mxu0 0.0
  %1681 = vmatpush.msra.mxu0 0.0
  %1682 = vmatpush.msra.mxu0 0.0
  %1683 = vmatpush.msra.mxu0 0.0
  %1684 = vmatpush.msra.mxu0 0.0
  %1685 = vmatpush.msra.mxu0 0.0
  %1686 = vmatpush.msra.mxu0 0.0
  %1687 = vmatpush.msra.mxu0 0.0
  %1688 = vmatpush.msra.mxu0 0.0
  %1689 = vmatpush.msra.mxu0 0.0
  %1690 = vmatpush.msra.mxu0 0.0
  %1691 = vmatpush.msra.mxu0 0.0
  %1692 = vmatpush.msra.mxu0 0.0
  %1693 = vmatpush.msra.mxu0 %v1606
  %1694 = vmatmul.f32.gmra.mxu0 %v1616
  %v1695 = vpop.f32.mrf.mxu0
  %v1696 = vadd.f32 0.0, %v1695
  %1697 = vdwg.mxu0
  %1698 = vmatpush.msra.mxu0 0.0
  %1699 = vmatpush.msra.mxu0 0.0
  %1700 = vmatpush.msra.mxu0 0.0
  %1701 = vmatpush.msra.mxu0 0.0
  %1702 = vmatpush.msra.mxu0 0.0
  %1703 = vmatpush.msra.mxu0 0.0
  %1704 = vmatpush.msra.mxu0 0.0
  %1705 = vmatpush.msra.mxu0 0.0
  %1706 = vmatpush.msra.mxu0 0.0
  %1707 = vmatpush.msra.mxu0 0.0
  %1708 = vmatpush.msra.mxu0 0.0
  %1709 = vmatpush.msra.mxu0 0.0
  %1710 = vmatpush.msra.mxu0 0.0
  %1711 = vmatpush.msra.mxu0 0.0
  %1712 = vmatpush.msra.mxu0 0.0
  %1713 = vmatpush.msra.mxu0 %v1607
  %1714 = vmatmul.f32.gmra.mxu0 %v1616
  %v1715 = vpop.f32.mrf.mxu0
  %v1716 = vadd.f32 0.0, %v1715
  %1717 = vdwg.mxu0
  %1718 = vmatpush.msra.mxu0 0.0
  %1719 = vmatpush.msra.mxu0 0.0
  %1720 = vmatpush.msra.mxu0 0.0
  %1721 = vmatpush.msra.mxu0 0.0
  %1722 = vmatpush.msra.mxu0 0.0
  %1723 = vmatpush.msra.mxu0 0.0
  %1724 = vmatpush.msra.mxu0 0.0
  %1725 = vmatpush.msra.mxu0 0.0
  %1726 = vmatpush.msra.mxu0 0.0
  %1727 = vmatpush.msra.mxu0 0.0
  %1728 = vmatpush.msra.mxu0 0.0
  %1729 = vmatpush.msra.mxu0 0.0
  %1730 = vmatpush.msra.mxu0 0.0
  %1731 = vmatpush.msra.mxu0 0.0
  %1732 = vmatpush.msra.mxu0 0.0
  %1733 = vmatpush.msra.mxu0 %v1608
  %1734 = vmatmul.f32.gmra.mxu0 %v1616
  %v1735 = vpop.f32.mrf.mxu0
  %v1736 = vadd.f32 0.0, %v1735
  %1737 = vdwg.mxu0
  %1738 = vrot.lane.b32.xlu0 %v1573, 19
  %v1739 = vpop.permute.xlu0 %1738
  %1740 = vrot.lane.b32.xlu0 %v1574, 19
  %v1741 = vpop.permute.xlu0 %1740
  %1742 = vrot.lane.b32.xlu0 %v1575, 19
  %v1743 = vpop.permute.xlu0 %1742
  %1744 = vrot.lane.b32.xlu0 %v1576, 19
  %v1745 = vpop.permute.xlu0 %1744
  %1746 = vrot.lane.b32.xlu0 %v1577, 19
  %v1747 = vpop.permute.xlu0 %1746
  %1748 = vrot.lane.b32.xlu0 %v1578, 19
  %v1749 = vpop.permute.xlu0 %1748
  %1750 = vrot.lane.b32.xlu0 %v1579, 19
  %v1751 = vpop.permute.xlu0 %1750
  %v1752 = vsel %vm236, %v1739, %v1741
  %v1753 = vsel %vm236, %v1741, %v1743
  %v1754 = vsel %vm236, %v1743, %v1745
  %v1755 = vsel %vm236, %v1745, %v1747
  %v1756 = vsel %vm236, %v1747, %v1749
  %v1757 = vsel %vm236, %v1749, %v1751
  %v1765 = vsel %vm98, %v1580, 0
  %1767 = vmatpush.msra.mxu0 0.0
  %1768 = vmatpush.msra.mxu0 0.0
  %1769 = vmatpush.msra.mxu0 0.0
  %1770 = vmatpush.msra.mxu0 0.0
  %1771 = vmatpush.msra.mxu0 0.0
  %1772 = vmatpush.msra.mxu0 0.0
  %1773 = vmatpush.msra.mxu0 0.0
  %1774 = vmatpush.msra.mxu0 0.0
  %1775 = vmatpush.msra.mxu0 0.0
  %1776 = vmatpush.msra.mxu0 0.0
  %1777 = vmatpush.msra.mxu0 0.0
  %1778 = vmatpush.msra.mxu0 0.0
  %1779 = vmatpush.msra.mxu0 0.0
  %1780 = vmatpush.msra.mxu0 0.0
  %1781 = vmatpush.msra.mxu0 0.0
  %1782 = vmatpush.msra.mxu0 %v1752
  %1783 = vmatmul.f32.gmra.mxu0 %v1765
  %v1784 = vpop.f32.mrf.mxu0
  %v1785 = vadd.f32 %v1636, %v1784
  %1786 = vdwg.mxu0
  %1787 = vmatpush.msra.mxu0 0.0
  %1788 = vmatpush.msra.mxu0 0.0
  %1789 = vmatpush.msra.mxu0 0.0
  %1790 = vmatpush.msra.mxu0 0.0
  %1791 = vmatpush.msra.mxu0 0.0
  %1792 = vmatpush.msra.mxu0 0.0
  %1793 = vmatpush.msra.mxu0 0.0
  %1794 = vmatpush.msra.mxu0 0.0
  %1795 = vmatpush.msra.mxu0 0.0
  %1796 = vmatpush.msra.mxu0 0.0
  %1797 = vmatpush.msra.mxu0 0.0
  %1798 = vmatpush.msra.mxu0 0.0
  %1799 = vmatpush.msra.mxu0 0.0
  %1800 = vmatpush.msra.mxu0 0.0
  %1801 = vmatpush.msra.mxu0 0.0
  %1802 = vmatpush.msra.mxu0 %v1753
  %1803 = vmatmul.f32.gmra.mxu0 %v1765
  %v1804 = vpop.f32.mrf.mxu0
  %v1805 = vadd.f32 %v1656, %v1804
  %1806 = vdwg.mxu0
  %1807 = vmatpush.msra.mxu0 0.0
  %1808 = vmatpush.msra.mxu0 0.0
  %1809 = vmatpush.msra.mxu0 0.0
  %1810 = vmatpush.msra.mxu0 0.0
  %1811 = vmatpush.msra.mxu0 0.0
  %1812 = vmatpush.msra.mxu0 0.0
  %1813 = vmatpush.msra.mxu0 0.0
  %1814 = vmatpush.msra.mxu0 0.0
  %1815 = vmatpush.msra.mxu0 0.0
  %1816 = vmatpush.msra.mxu0 0.0
  %1817 = vmatpush.msra.mxu0 0.0
  %1818 = vmatpush.msra.mxu0 0.0
  %1819 = vmatpush.msra.mxu0 0.0
  %1820 = vmatpush.msra.mxu0 0.0
  %1821 = vmatpush.msra.mxu0 0.0
  %1822 = vmatpush.msra.mxu0 %v1754
  %1823 = vmatmul.f32.gmra.mxu0 %v1765
  %v1824 = vpop.f32.mrf.mxu0
  %v1825 = vadd.f32 %v1676, %v1824
  %1826 = vdwg.mxu0
  %1827 = vmatpush.msra.mxu0 0.0
  %1828 = vmatpush.msra.mxu0 0.0
  %1829 = vmatpush.msra.mxu0 0.0
  %1830 = vmatpush.msra.mxu0 0.0
  %1831 = vmatpush.msra.mxu0 0.0
  %1832 = vmatpush.msra.mxu0 0.0
  %1833 = vmatpush.msra.mxu0 0.0
  %1834 = vmatpush.msra.mxu0 0.0
  %1835 = vmatpush.msra.mxu0 0.0
  %1836 = vmatpush.msra.mxu0 0.0
  %1837 = vmatpush.msra.mxu0 0.0
  %1838 = vmatpush.msra.mxu0 0.0
  %1839 = vmatpush.msra.mxu0 0.0
  %1840 = vmatpush.msra.mxu0 0.0
  %1841 = vmatpush.msra.mxu0 0.0
  %1842 = vmatpush.msra.mxu0 %v1755
  %1843 = vmatmul.f32.gmra.mxu0 %v1765
  %v1844 = vpop.f32.mrf.mxu0
  %v1845 = vadd.f32 %v1696, %v1844
  %1846 = vdwg.mxu0
  %1847 = vmatpush.msra.mxu0 0.0
  %1848 = vmatpush.msra.mxu0 0.0
  %1849 = vmatpush.msra.mxu0 0.0
  %1850 = vmatpush.msra.mxu0 0.0
  %1851 = vmatpush.msra.mxu0 0.0
  %1852 = vmatpush.msra.mxu0 0.0
  %1853 = vmatpush.msra.mxu0 0.0
  %1854 = vmatpush.msra.mxu0 0.0
  %1855 = vmatpush.msra.mxu0 0.0
  %1856 = vmatpush.msra.mxu0 0.0
  %1857 = vmatpush.msra.mxu0 0.0
  %1858 = vmatpush.msra.mxu0 0.0
  %1859 = vmatpush.msra.mxu0 0.0
  %1860 = vmatpush.msra.mxu0 0.0
  %1861 = vmatpush.msra.mxu0 0.0
  %1862 = vmatpush.msra.mxu0 %v1756
  %1863 = vmatmul.f32.gmra.mxu0 %v1765
  %v1864 = vpop.f32.mrf.mxu0
  %v1865 = vadd.f32 %v1716, %v1864
  %1866 = vdwg.mxu0
  %1867 = vmatpush.msra.mxu0 0.0
  %1868 = vmatpush.msra.mxu0 0.0
  %1869 = vmatpush.msra.mxu0 0.0
  %1870 = vmatpush.msra.mxu0 0.0
  %1871 = vmatpush.msra.mxu0 0.0
  %1872 = vmatpush.msra.mxu0 0.0
  %1873 = vmatpush.msra.mxu0 0.0
  %1874 = vmatpush.msra.mxu0 0.0
  %1875 = vmatpush.msra.mxu0 0.0
  %1876 = vmatpush.msra.mxu0 0.0
  %1877 = vmatpush.msra.mxu0 0.0
  %1878 = vmatpush.msra.mxu0 0.0
  %1879 = vmatpush.msra.mxu0 0.0
  %1880 = vmatpush.msra.mxu0 0.0
  %1881 = vmatpush.msra.mxu0 0.0
  %1882 = vmatpush.msra.mxu0 %v1757
  %1883 = vmatmul.f32.gmra.mxu0 %v1765
  %v1884 = vpop.f32.mrf.mxu0
  %v1885 = vadd.f32 %v1736, %v1884
  %1886 = vdwg.mxu0
  %v1887 = vld [vmem:[%s5 + $0x10] sm:$0xff]
  %1888 = vrot.lane.b32.xlu0 %v1573, 17
  %v1889 = vpop.permute.xlu0 %1888
  %1890 = vrot.lane.b32.xlu0 %v1574, 17
  %v1891 = vpop.permute.xlu0 %1890
  %1892 = vrot.lane.b32.xlu0 %v1575, 17
  %v1893 = vpop.permute.xlu0 %1892
  %1894 = vrot.lane.b32.xlu0 %v1576, 17
  %v1895 = vpop.permute.xlu0 %1894
  %1896 = vrot.lane.b32.xlu0 %v1577, 17
  %v1897 = vpop.permute.xlu0 %1896
  %1898 = vrot.lane.b32.xlu0 %v1578, 17
  %v1899 = vpop.permute.xlu0 %1898
  %1900 = vrot.lane.b32.xlu0 %v1579, 17
  %v1901 = vpop.permute.xlu0 %1900
  %v1902 = vsel %vm387, %v1889, %v1891
  %v1903 = vsel %vm387, %v1891, %v1893
  %v1904 = vsel %vm387, %v1893, %v1895
  %v1905 = vsel %vm387, %v1895, %v1897
  %v1906 = vsel %vm387, %v1897, %v1899
  %v1907 = vsel %vm387, %v1899, %v1901
  %v1915 = vsel %vm98, %v1887, 0
  %1917 = vmatpush.msra.mxu0 0.0
  %1918 = vmatpush.msra.mxu0 0.0
  %1919 = vmatpush.msra.mxu0 0.0
  %1920 = vmatpush.msra.mxu0 0.0
  %1921 = vmatpush.msra.mxu0 0.0
  %1922 = vmatpush.msra.mxu0 0.0
  %1923 = vmatpush.msra.mxu0 0.0
  %1924 = vmatpush.msra.mxu0 0.0
  %1925 = vmatpush.msra.mxu0 0.0
  %1926 = vmatpush.msra.mxu0 0.0
  %1927 = vmatpush.msra.mxu0 0.0
  %1928 = vmatpush.msra.mxu0 0.0
  %1929 = vmatpush.msra.mxu0 0.0
  %1930 = vmatpush.msra.mxu0 0.0
  %1931 = vmatpush.msra.mxu0 0.0
  %1932 = vmatpush.msra.mxu0 %v1902
  %1933 = vmatmul.f32.gmra.mxu0 %v1915
  %v1934 = vpop.f32.mrf.mxu0
  %v1935 = vadd.f32 0.0, %v1934
  %1936 = vdwg.mxu0
  %1937 = vmatpush.msra.mxu0 0.0
  %1938 = vmatpush.msra.mxu0 0.0
  %1939 = vmatpush.msra.mxu0 0.0
  %1940 = vmatpush.msra.mxu0 0.0
  %1941 = vmatpush.msra.mxu0 0.0
  %1942 = vmatpush.msra.mxu0 0.0
  %1943 = vmatpush.msra.mxu0 0.0
  %1944 = vmatpush.msra.mxu0 0.0
  %1945 = vmatpush.msra.mxu0 0.0
  %1946 = vmatpush.msra.mxu0 0.0
  %1947 = vmatpush.msra.mxu0 0.0
  %1948 = vmatpush.msra.mxu0 0.0
  %1949 = vmatpush.msra.mxu0 0.0
  %1950 = vmatpush.msra.mxu0 0.0
  %1951 = vmatpush.msra.mxu0 0.0
  %1952 = vmatpush.msra.mxu0 %v1903
  %1953 = vmatmul.f32.gmra.mxu0 %v1915
  %v1954 = vpop.f32.mrf.mxu0
  %v1955 = vadd.f32 0.0, %v1954
  %1956 = vdwg.mxu0
  %1957 = vmatpush.msra.mxu0 0.0
  %1958 = vmatpush.msra.mxu0 0.0
  %1959 = vmatpush.msra.mxu0 0.0
  %1960 = vmatpush.msra.mxu0 0.0
  %1961 = vmatpush.msra.mxu0 0.0
  %1962 = vmatpush.msra.mxu0 0.0
  %1963 = vmatpush.msra.mxu0 0.0
  %1964 = vmatpush.msra.mxu0 0.0
  %1965 = vmatpush.msra.mxu0 0.0
  %1966 = vmatpush.msra.mxu0 0.0
  %1967 = vmatpush.msra.mxu0 0.0
  %1968 = vmatpush.msra.mxu0 0.0
  %1969 = vmatpush.msra.mxu0 0.0
  %1970 = vmatpush.msra.mxu0 0.0
  %1971 = vmatpush.msra.mxu0 0.0
  %1972 = vmatpush.msra.mxu0 %v1904
  %1973 = vmatmul.f32.gmra.mxu0 %v1915
  %v1974 = vpop.f32.mrf.mxu0
  %v1975 = vadd.f32 0.0, %v1974
  %1976 = vdwg.mxu0
  %1977 = vmatpush.msra.mxu0 0.0
  %1978 = vmatpush.msra.mxu0 0.0
  %1979 = vmatpush.msra.mxu0 0.0
  %1980 = vmatpush.msra.mxu0 0.0
  %1981 = vmatpush.msra.mxu0 0.0
  %1982 = vmatpush.msra.mxu0 0.0
  %1983 = vmatpush.msra.mxu0 0.0
  %1984 = vmatpush.msra.mxu0 0.0
  %1985 = vmatpush.msra.mxu0 0.0
  %1986 = vmatpush.msra.mxu0 0.0
  %1987 = vmatpush.msra.mxu0 0.0
  %1988 = vmatpush.msra.mxu0 0.0
  %1989 = vmatpush.msra.mxu0 0.0
  %1990 = vmatpush.msra.mxu0 0.0
  %1991 = vmatpush.msra.mxu0 0.0
  %1992 = vmatpush.msra.mxu0 %v1905
  %1993 = vmatmul.f32.gmra.mxu0 %v1915
  %v1994 = vpop.f32.mrf.mxu0
  %v1995 = vadd.f32 0.0, %v1994
  %1996 = vdwg.mxu0
  %1997 = vmatpush.msra.mxu0 0.0
  %1998 = vmatpush.msra.mxu0 0.0
  %1999 = vmatpush.msra.mxu0 0.0
  %2000 = vmatpush.msra.mxu0 0.0
  %2001 = vmatpush.msra.mxu0 0.0
  %2002 = vmatpush.msra.mxu0 0.0
  %2003 = vmatpush.msra.mxu0 0.0
  %2004 = vmatpush.msra.mxu0 0.0
  %2005 = vmatpush.msra.mxu0 0.0
  %2006 = vmatpush.msra.mxu0 0.0
  %2007 = vmatpush.msra.mxu0 0.0
  %2008 = vmatpush.msra.mxu0 0.0
  %2009 = vmatpush.msra.mxu0 0.0
  %2010 = vmatpush.msra.mxu0 0.0
  %2011 = vmatpush.msra.mxu0 0.0
  %2012 = vmatpush.msra.mxu0 %v1906
  %2013 = vmatmul.f32.gmra.mxu0 %v1915
  %v2014 = vpop.f32.mrf.mxu0
  %v2015 = vadd.f32 0.0, %v2014
  %2016 = vdwg.mxu0
  %2017 = vmatpush.msra.mxu0 0.0
  %2018 = vmatpush.msra.mxu0 0.0
  %2019 = vmatpush.msra.mxu0 0.0
  %2020 = vmatpush.msra.mxu0 0.0
  %2021 = vmatpush.msra.mxu0 0.0
  %2022 = vmatpush.msra.mxu0 0.0
  %2023 = vmatpush.msra.mxu0 0.0
  %2024 = vmatpush.msra.mxu0 0.0
  %2025 = vmatpush.msra.mxu0 0.0
  %2026 = vmatpush.msra.mxu0 0.0
  %2027 = vmatpush.msra.mxu0 0.0
  %2028 = vmatpush.msra.mxu0 0.0
  %2029 = vmatpush.msra.mxu0 0.0
  %2030 = vmatpush.msra.mxu0 0.0
  %2031 = vmatpush.msra.mxu0 0.0
  %2032 = vmatpush.msra.mxu0 %v1907
  %2033 = vmatmul.f32.gmra.mxu0 %v1915
  %v2034 = vpop.f32.mrf.mxu0
  %v2035 = vadd.f32 0.0, %v2034
  %2036 = vdwg.mxu0
  %v2037 = vadd.f32 %v1785, %v1935
  %v2038 = vadd.f32 %v1805, %v1955
  %v2039 = vadd.f32 %v1825, %v1975
  %v2040 = vadd.f32 %v1845, %v1995
  %v2041 = vadd.f32 %v1865, %v2015
  %v2042 = vadd.f32 %v1885, %v2035
  %v2043 = vld [vmem:[%s5 + $0x18] sm:$0xff]
  %2044 = vrot.lane.b32.xlu0 %v1573, 1
  %v2045 = vpop.permute.xlu0 %2044
  %2046 = vrot.lane.b32.xlu0 %v1574, 1
  %v2047 = vpop.permute.xlu0 %2046
  %2048 = vrot.lane.b32.xlu0 %v1575, 1
  %v2049 = vpop.permute.xlu0 %2048
  %2050 = vrot.lane.b32.xlu0 %v1576, 1
  %v2051 = vpop.permute.xlu0 %2050
  %2052 = vrot.lane.b32.xlu0 %v1577, 1
  %v2053 = vpop.permute.xlu0 %2052
  %2054 = vrot.lane.b32.xlu0 %v1578, 1
  %v2055 = vpop.permute.xlu0 %2054
  %2056 = vrot.lane.b32.xlu0 %v1579, 1
  %v2057 = vpop.permute.xlu0 %2056
  %v2058 = vsel %vm544, %v2045, %v2047
  %v2059 = vsel %vm544, %v2047, %v2049
  %v2060 = vsel %vm544, %v2049, %v2051
  %v2061 = vsel %vm544, %v2051, %v2053
  %v2062 = vsel %vm544, %v2053, %v2055
  %v2063 = vsel %vm544, %v2055, %v2057
  %v2071 = vsel %vm98, %v2043, 0
  %2073 = vmatpush.msra.mxu0 0.0
  %2074 = vmatpush.msra.mxu0 0.0
  %2075 = vmatpush.msra.mxu0 0.0
  %2076 = vmatpush.msra.mxu0 0.0
  %2077 = vmatpush.msra.mxu0 0.0
  %2078 = vmatpush.msra.mxu0 0.0
  %2079 = vmatpush.msra.mxu0 0.0
  %2080 = vmatpush.msra.mxu0 0.0
  %2081 = vmatpush.msra.mxu0 0.0
  %2082 = vmatpush.msra.mxu0 0.0
  %2083 = vmatpush.msra.mxu0 0.0
  %2084 = vmatpush.msra.mxu0 0.0
  %2085 = vmatpush.msra.mxu0 0.0
  %2086 = vmatpush.msra.mxu0 0.0
  %2087 = vmatpush.msra.mxu0 0.0
  %2088 = vmatpush.msra.mxu0 %v2058
  %2089 = vmatmul.f32.gmra.mxu0 %v2071
  %v2090 = vpop.f32.mrf.mxu0
  %v2091 = vadd.f32 0.0, %v2090
  %2092 = vdwg.mxu0
  %2093 = vmatpush.msra.mxu0 0.0
  %2094 = vmatpush.msra.mxu0 0.0
  %2095 = vmatpush.msra.mxu0 0.0
  %2096 = vmatpush.msra.mxu0 0.0
  %2097 = vmatpush.msra.mxu0 0.0
  %2098 = vmatpush.msra.mxu0 0.0
  %2099 = vmatpush.msra.mxu0 0.0
  %2100 = vmatpush.msra.mxu0 0.0
  %2101 = vmatpush.msra.mxu0 0.0
  %2102 = vmatpush.msra.mxu0 0.0
  %2103 = vmatpush.msra.mxu0 0.0
  %2104 = vmatpush.msra.mxu0 0.0
  %2105 = vmatpush.msra.mxu0 0.0
  %2106 = vmatpush.msra.mxu0 0.0
  %2107 = vmatpush.msra.mxu0 0.0
  %2108 = vmatpush.msra.mxu0 %v2059
  %2109 = vmatmul.f32.gmra.mxu0 %v2071
  %v2110 = vpop.f32.mrf.mxu0
  %v2111 = vadd.f32 0.0, %v2110
  %2112 = vdwg.mxu0
  %2113 = vmatpush.msra.mxu0 0.0
  %2114 = vmatpush.msra.mxu0 0.0
  %2115 = vmatpush.msra.mxu0 0.0
  %2116 = vmatpush.msra.mxu0 0.0
  %2117 = vmatpush.msra.mxu0 0.0
  %2118 = vmatpush.msra.mxu0 0.0
  %2119 = vmatpush.msra.mxu0 0.0
  %2120 = vmatpush.msra.mxu0 0.0
  %2121 = vmatpush.msra.mxu0 0.0
  %2122 = vmatpush.msra.mxu0 0.0
  %2123 = vmatpush.msra.mxu0 0.0
  %2124 = vmatpush.msra.mxu0 0.0
  %2125 = vmatpush.msra.mxu0 0.0
  %2126 = vmatpush.msra.mxu0 0.0
  %2127 = vmatpush.msra.mxu0 0.0
  %2128 = vmatpush.msra.mxu0 %v2060
  %2129 = vmatmul.f32.gmra.mxu0 %v2071
  %v2130 = vpop.f32.mrf.mxu0
  %v2131 = vadd.f32 0.0, %v2130
  %2132 = vdwg.mxu0
  %2133 = vmatpush.msra.mxu0 0.0
  %2134 = vmatpush.msra.mxu0 0.0
  %2135 = vmatpush.msra.mxu0 0.0
  %2136 = vmatpush.msra.mxu0 0.0
  %2137 = vmatpush.msra.mxu0 0.0
  %2138 = vmatpush.msra.mxu0 0.0
  %2139 = vmatpush.msra.mxu0 0.0
  %2140 = vmatpush.msra.mxu0 0.0
  %2141 = vmatpush.msra.mxu0 0.0
  %2142 = vmatpush.msra.mxu0 0.0
  %2143 = vmatpush.msra.mxu0 0.0
  %2144 = vmatpush.msra.mxu0 0.0
  %2145 = vmatpush.msra.mxu0 0.0
  %2146 = vmatpush.msra.mxu0 0.0
  %2147 = vmatpush.msra.mxu0 0.0
  %2148 = vmatpush.msra.mxu0 %v2061
  %2149 = vmatmul.f32.gmra.mxu0 %v2071
  %v2150 = vpop.f32.mrf.mxu0
  %v2151 = vadd.f32 0.0, %v2150
  %2152 = vdwg.mxu0
  %2153 = vmatpush.msra.mxu0 0.0
  %2154 = vmatpush.msra.mxu0 0.0
  %2155 = vmatpush.msra.mxu0 0.0
  %2156 = vmatpush.msra.mxu0 0.0
  %2157 = vmatpush.msra.mxu0 0.0
  %2158 = vmatpush.msra.mxu0 0.0
  %2159 = vmatpush.msra.mxu0 0.0
  %2160 = vmatpush.msra.mxu0 0.0
  %2161 = vmatpush.msra.mxu0 0.0
  %2162 = vmatpush.msra.mxu0 0.0
  %2163 = vmatpush.msra.mxu0 0.0
  %2164 = vmatpush.msra.mxu0 0.0
  %2165 = vmatpush.msra.mxu0 0.0
  %2166 = vmatpush.msra.mxu0 0.0
  %2167 = vmatpush.msra.mxu0 0.0
  %2168 = vmatpush.msra.mxu0 %v2062
  %2169 = vmatmul.f32.gmra.mxu0 %v2071
  %v2170 = vpop.f32.mrf.mxu0
  %v2171 = vadd.f32 0.0, %v2170
  %2172 = vdwg.mxu0
  %2173 = vmatpush.msra.mxu0 0.0
  %2174 = vmatpush.msra.mxu0 0.0
  %2175 = vmatpush.msra.mxu0 0.0
  %2176 = vmatpush.msra.mxu0 0.0
  %2177 = vmatpush.msra.mxu0 0.0
  %2178 = vmatpush.msra.mxu0 0.0
  %2179 = vmatpush.msra.mxu0 0.0
  %2180 = vmatpush.msra.mxu0 0.0
  %2181 = vmatpush.msra.mxu0 0.0
  %2182 = vmatpush.msra.mxu0 0.0
  %2183 = vmatpush.msra.mxu0 0.0
  %2184 = vmatpush.msra.mxu0 0.0
  %2185 = vmatpush.msra.mxu0 0.0
  %2186 = vmatpush.msra.mxu0 0.0
  %2187 = vmatpush.msra.mxu0 0.0
  %2188 = vmatpush.msra.mxu0 %v2063
  %2189 = vmatmul.f32.gmra.mxu0 %v2071
  %v2190 = vpop.f32.mrf.mxu0
  %v2191 = vadd.f32 0.0, %v2190
  %2192 = vdwg.mxu0
  %v2193 = vadd.f32 %v2037, %v2091
  %v2194 = vadd.f32 %v2038, %v2111
  %v2195 = vadd.f32 %v2039, %v2131
  %v2196 = vadd.f32 %v2040, %v2151
  %v2197 = vadd.f32 %v2041, %v2171
  %v2198 = vadd.f32 %v2042, %v2191
  %v2199 = vld [vmem:[%s5 + $0x20] sm:$0xff]
  %v2201 = vsel %vm98, %v2199, 0
  %2203 = vmatpush.msra.mxu0 0.0
  %2204 = vmatpush.msra.mxu0 0.0
  %2205 = vmatpush.msra.mxu0 0.0
  %2206 = vmatpush.msra.mxu0 0.0
  %2207 = vmatpush.msra.mxu0 0.0
  %2208 = vmatpush.msra.mxu0 0.0
  %2209 = vmatpush.msra.mxu0 0.0
  %2210 = vmatpush.msra.mxu0 0.0
  %2211 = vmatpush.msra.mxu0 0.0
  %2212 = vmatpush.msra.mxu0 0.0
  %2213 = vmatpush.msra.mxu0 0.0
  %2214 = vmatpush.msra.mxu0 0.0
  %2215 = vmatpush.msra.mxu0 0.0
  %2216 = vmatpush.msra.mxu0 0.0
  %2217 = vmatpush.msra.mxu0 0.0
  %2218 = vmatpush.msra.mxu0 %v1574
  %2219 = vmatmul.f32.gmra.mxu0 %v2201
  %v2220 = vpop.f32.mrf.mxu0
  %v2221 = vadd.f32 0.0, %v2220
  %2222 = vdwg.mxu0
  %2223 = vmatpush.msra.mxu0 0.0
  %2224 = vmatpush.msra.mxu0 0.0
  %2225 = vmatpush.msra.mxu0 0.0
  %2226 = vmatpush.msra.mxu0 0.0
  %2227 = vmatpush.msra.mxu0 0.0
  %2228 = vmatpush.msra.mxu0 0.0
  %2229 = vmatpush.msra.mxu0 0.0
  %2230 = vmatpush.msra.mxu0 0.0
  %2231 = vmatpush.msra.mxu0 0.0
  %2232 = vmatpush.msra.mxu0 0.0
  %2233 = vmatpush.msra.mxu0 0.0
  %2234 = vmatpush.msra.mxu0 0.0
  %2235 = vmatpush.msra.mxu0 0.0
  %2236 = vmatpush.msra.mxu0 0.0
  %2237 = vmatpush.msra.mxu0 0.0
  %2238 = vmatpush.msra.mxu0 %v1575
  %2239 = vmatmul.f32.gmra.mxu0 %v2201
  %v2240 = vpop.f32.mrf.mxu0
  %v2241 = vadd.f32 0.0, %v2240
  %2242 = vdwg.mxu0
  %2243 = vmatpush.msra.mxu0 0.0
  %2244 = vmatpush.msra.mxu0 0.0
  %2245 = vmatpush.msra.mxu0 0.0
  %2246 = vmatpush.msra.mxu0 0.0
  %2247 = vmatpush.msra.mxu0 0.0
  %2248 = vmatpush.msra.mxu0 0.0
  %2249 = vmatpush.msra.mxu0 0.0
  %2250 = vmatpush.msra.mxu0 0.0
  %2251 = vmatpush.msra.mxu0 0.0
  %2252 = vmatpush.msra.mxu0 0.0
  %2253 = vmatpush.msra.mxu0 0.0
  %2254 = vmatpush.msra.mxu0 0.0
  %2255 = vmatpush.msra.mxu0 0.0
  %2256 = vmatpush.msra.mxu0 0.0
  %2257 = vmatpush.msra.mxu0 0.0
  %2258 = vmatpush.msra.mxu0 %v1576
  %2259 = vmatmul.f32.gmra.mxu0 %v2201
  %v2260 = vpop.f32.mrf.mxu0
  %v2261 = vadd.f32 0.0, %v2260
  %2262 = vdwg.mxu0
  %2263 = vmatpush.msra.mxu0 0.0
  %2264 = vmatpush.msra.mxu0 0.0
  %2265 = vmatpush.msra.mxu0 0.0
  %2266 = vmatpush.msra.mxu0 0.0
  %2267 = vmatpush.msra.mxu0 0.0
  %2268 = vmatpush.msra.mxu0 0.0
  %2269 = vmatpush.msra.mxu0 0.0
  %2270 = vmatpush.msra.mxu0 0.0
  %2271 = vmatpush.msra.mxu0 0.0
  %2272 = vmatpush.msra.mxu0 0.0
  %2273 = vmatpush.msra.mxu0 0.0
  %2274 = vmatpush.msra.mxu0 0.0
  %2275 = vmatpush.msra.mxu0 0.0
  %2276 = vmatpush.msra.mxu0 0.0
  %2277 = vmatpush.msra.mxu0 0.0
  %2278 = vmatpush.msra.mxu0 %v1577
  %2279 = vmatmul.f32.gmra.mxu0 %v2201
  %v2280 = vpop.f32.mrf.mxu0
  %v2281 = vadd.f32 0.0, %v2280
  %2282 = vdwg.mxu0
  %2283 = vmatpush.msra.mxu0 0.0
  %2284 = vmatpush.msra.mxu0 0.0
  %2285 = vmatpush.msra.mxu0 0.0
  %2286 = vmatpush.msra.mxu0 0.0
  %2287 = vmatpush.msra.mxu0 0.0
  %2288 = vmatpush.msra.mxu0 0.0
  %2289 = vmatpush.msra.mxu0 0.0
  %2290 = vmatpush.msra.mxu0 0.0
  %2291 = vmatpush.msra.mxu0 0.0
  %2292 = vmatpush.msra.mxu0 0.0
  %2293 = vmatpush.msra.mxu0 0.0
  %2294 = vmatpush.msra.mxu0 0.0
  %2295 = vmatpush.msra.mxu0 0.0
  %2296 = vmatpush.msra.mxu0 0.0
  %2297 = vmatpush.msra.mxu0 0.0
  %2298 = vmatpush.msra.mxu0 %v1578
  %2299 = vmatmul.f32.gmra.mxu0 %v2201
  %v2300 = vpop.f32.mrf.mxu0
  %v2301 = vadd.f32 0.0, %v2300
  %2302 = vdwg.mxu0
  %2303 = vmatpush.msra.mxu0 0.0
  %2304 = vmatpush.msra.mxu0 0.0
  %2305 = vmatpush.msra.mxu0 0.0
  %2306 = vmatpush.msra.mxu0 0.0
  %2307 = vmatpush.msra.mxu0 0.0
  %2308 = vmatpush.msra.mxu0 0.0
  %2309 = vmatpush.msra.mxu0 0.0
  %2310 = vmatpush.msra.mxu0 0.0
  %2311 = vmatpush.msra.mxu0 0.0
  %2312 = vmatpush.msra.mxu0 0.0
  %2313 = vmatpush.msra.mxu0 0.0
  %2314 = vmatpush.msra.mxu0 0.0
  %2315 = vmatpush.msra.mxu0 0.0
  %2316 = vmatpush.msra.mxu0 0.0
  %2317 = vmatpush.msra.mxu0 0.0
  %2318 = vmatpush.msra.mxu0 %v1579
  %2319 = vmatmul.f32.gmra.mxu0 %v2201
  %v2320 = vpop.f32.mrf.mxu0
  %v2321 = vadd.f32 0.0, %v2320
  %2322 = vdwg.mxu0
  %v2323 = vadd.f32 %v2193, %v2221
  %v2324 = vadd.f32 %v2194, %v2241
  %v2325 = vadd.f32 %v2195, %v2261
  %v2326 = vadd.f32 %v2196, %v2281
  %v2327 = vadd.f32 %v2197, %v2301
  %v2328 = vadd.f32 %v2198, %v2321
  %v2329 = vld [vmem:[%s11 + $0x8] sm:$0xff]
  %v2330 = vld [vmem:[%s11 + $0x10] sm:$0xff]
  %v2331 = vld [vmem:[%s11 + $0x18] sm:$0xff]
  %v2332 = vld [vmem:[%s11 + $0x20] sm:$0xff]
  %v2333 = vld [vmem:[%s11 + $0x28] sm:$0xff]
  %v2334 = vld [vmem:[%s11 + $0x30] sm:$0xff]
  %v2335 = vld [vmem:[%s11 + $0x38] sm:$0xff]
  %v2336 = vld [vmem:[%s5 + $0x28] sm:$0xff]
  %2344 = vrot.lane.b32.xlu0 %v2329, 127
  %v2345 = vpop.permute.xlu0 %2344
  %2346 = vrot.lane.b32.xlu0 %v2330, 127
  %v2347 = vpop.permute.xlu0 %2346
  %2348 = vrot.lane.b32.xlu0 %v2331, 127
  %v2349 = vpop.permute.xlu0 %2348
  %2350 = vrot.lane.b32.xlu0 %v2332, 127
  %v2351 = vpop.permute.xlu0 %2350
  %2352 = vrot.lane.b32.xlu0 %v2333, 127
  %v2353 = vpop.permute.xlu0 %2352
  %2354 = vrot.lane.b32.xlu0 %v2334, 127
  %v2355 = vpop.permute.xlu0 %2354
  %2356 = vrot.lane.b32.xlu0 %v2335, 127
  %v2357 = vpop.permute.xlu0 %2356
  %v2358 = vsel %vm845, %v2345, %v2347
  %v2359 = vsel %vm845, %v2347, %v2349
  %v2360 = vsel %vm845, %v2349, %v2351
  %v2361 = vsel %vm845, %v2351, %v2353
  %v2362 = vsel %vm845, %v2353, %v2355
  %v2363 = vsel %vm845, %v2355, %v2357
  %v2371 = vsel %vm98, %v2336, 0
  %2373 = vmatpush.msra.mxu0 0.0
  %2374 = vmatpush.msra.mxu0 0.0
  %2375 = vmatpush.msra.mxu0 0.0
  %2376 = vmatpush.msra.mxu0 0.0
  %2377 = vmatpush.msra.mxu0 0.0
  %2378 = vmatpush.msra.mxu0 0.0
  %2379 = vmatpush.msra.mxu0 0.0
  %2380 = vmatpush.msra.mxu0 0.0
  %2381 = vmatpush.msra.mxu0 0.0
  %2382 = vmatpush.msra.mxu0 0.0
  %2383 = vmatpush.msra.mxu0 0.0
  %2384 = vmatpush.msra.mxu0 0.0
  %2385 = vmatpush.msra.mxu0 0.0
  %2386 = vmatpush.msra.mxu0 0.0
  %2387 = vmatpush.msra.mxu0 0.0
  %2388 = vmatpush.msra.mxu0 %v2358
  %2389 = vmatmul.f32.gmra.mxu0 %v2371
  %v2390 = vpop.f32.mrf.mxu0
  %v2391 = vadd.f32 0.0, %v2390
  %2392 = vdwg.mxu0
  %2393 = vmatpush.msra.mxu0 0.0
  %2394 = vmatpush.msra.mxu0 0.0
  %2395 = vmatpush.msra.mxu0 0.0
  %2396 = vmatpush.msra.mxu0 0.0
  %2397 = vmatpush.msra.mxu0 0.0
  %2398 = vmatpush.msra.mxu0 0.0
  %2399 = vmatpush.msra.mxu0 0.0
  %2400 = vmatpush.msra.mxu0 0.0
  %2401 = vmatpush.msra.mxu0 0.0
  %2402 = vmatpush.msra.mxu0 0.0
  %2403 = vmatpush.msra.mxu0 0.0
  %2404 = vmatpush.msra.mxu0 0.0
  %2405 = vmatpush.msra.mxu0 0.0
  %2406 = vmatpush.msra.mxu0 0.0
  %2407 = vmatpush.msra.mxu0 0.0
  %2408 = vmatpush.msra.mxu0 %v2359
  %2409 = vmatmul.f32.gmra.mxu0 %v2371
  %v2410 = vpop.f32.mrf.mxu0
  %v2411 = vadd.f32 0.0, %v2410
  %2412 = vdwg.mxu0
  %2413 = vmatpush.msra.mxu0 0.0
  %2414 = vmatpush.msra.mxu0 0.0
  %2415 = vmatpush.msra.mxu0 0.0
  %2416 = vmatpush.msra.mxu0 0.0
  %2417 = vmatpush.msra.mxu0 0.0
  %2418 = vmatpush.msra.mxu0 0.0
  %2419 = vmatpush.msra.mxu0 0.0
  %2420 = vmatpush.msra.mxu0 0.0
  %2421 = vmatpush.msra.mxu0 0.0
  %2422 = vmatpush.msra.mxu0 0.0
  %2423 = vmatpush.msra.mxu0 0.0
  %2424 = vmatpush.msra.mxu0 0.0
  %2425 = vmatpush.msra.mxu0 0.0
  %2426 = vmatpush.msra.mxu0 0.0
  %2427 = vmatpush.msra.mxu0 0.0
  %2428 = vmatpush.msra.mxu0 %v2360
  %2429 = vmatmul.f32.gmra.mxu0 %v2371
  %v2430 = vpop.f32.mrf.mxu0
  %v2431 = vadd.f32 0.0, %v2430
  %2432 = vdwg.mxu0
  %2433 = vmatpush.msra.mxu0 0.0
  %2434 = vmatpush.msra.mxu0 0.0
  %2435 = vmatpush.msra.mxu0 0.0
  %2436 = vmatpush.msra.mxu0 0.0
  %2437 = vmatpush.msra.mxu0 0.0
  %2438 = vmatpush.msra.mxu0 0.0
  %2439 = vmatpush.msra.mxu0 0.0
  %2440 = vmatpush.msra.mxu0 0.0
  %2441 = vmatpush.msra.mxu0 0.0
  %2442 = vmatpush.msra.mxu0 0.0
  %2443 = vmatpush.msra.mxu0 0.0
  %2444 = vmatpush.msra.mxu0 0.0
  %2445 = vmatpush.msra.mxu0 0.0
  %2446 = vmatpush.msra.mxu0 0.0
  %2447 = vmatpush.msra.mxu0 0.0
  %2448 = vmatpush.msra.mxu0 %v2361
  %2449 = vmatmul.f32.gmra.mxu0 %v2371
  %v2450 = vpop.f32.mrf.mxu0
  %v2451 = vadd.f32 0.0, %v2450
  %2452 = vdwg.mxu0
  %2453 = vmatpush.msra.mxu0 0.0
  %2454 = vmatpush.msra.mxu0 0.0
  %2455 = vmatpush.msra.mxu0 0.0
  %2456 = vmatpush.msra.mxu0 0.0
  %2457 = vmatpush.msra.mxu0 0.0
  %2458 = vmatpush.msra.mxu0 0.0
  %2459 = vmatpush.msra.mxu0 0.0
  %2460 = vmatpush.msra.mxu0 0.0
  %2461 = vmatpush.msra.mxu0 0.0
  %2462 = vmatpush.msra.mxu0 0.0
  %2463 = vmatpush.msra.mxu0 0.0
  %2464 = vmatpush.msra.mxu0 0.0
  %2465 = vmatpush.msra.mxu0 0.0
  %2466 = vmatpush.msra.mxu0 0.0
  %2467 = vmatpush.msra.mxu0 0.0
  %2468 = vmatpush.msra.mxu0 %v2362
  %2469 = vmatmul.f32.gmra.mxu0 %v2371
  %v2470 = vpop.f32.mrf.mxu0
  %v2471 = vadd.f32 0.0, %v2470
  %2472 = vdwg.mxu0
  %2473 = vmatpush.msra.mxu0 0.0
  %2474 = vmatpush.msra.mxu0 0.0
  %2475 = vmatpush.msra.mxu0 0.0
  %2476 = vmatpush.msra.mxu0 0.0
  %2477 = vmatpush.msra.mxu0 0.0
  %2478 = vmatpush.msra.mxu0 0.0
  %2479 = vmatpush.msra.mxu0 0.0
  %2480 = vmatpush.msra.mxu0 0.0
  %2481 = vmatpush.msra.mxu0 0.0
  %2482 = vmatpush.msra.mxu0 0.0
  %2483 = vmatpush.msra.mxu0 0.0
  %2484 = vmatpush.msra.mxu0 0.0
  %2485 = vmatpush.msra.mxu0 0.0
  %2486 = vmatpush.msra.mxu0 0.0
  %2487 = vmatpush.msra.mxu0 0.0
  %2488 = vmatpush.msra.mxu0 %v2363
  %2489 = vmatmul.f32.gmra.mxu0 %v2371
  %v2490 = vpop.f32.mrf.mxu0
  %v2491 = vadd.f32 0.0, %v2490
  %2492 = vdwg.mxu0
  %v2493 = vadd.f32 %v2323, %v2391
  %v2494 = vadd.f32 %v2324, %v2411
  %v2495 = vadd.f32 %v2325, %v2431
  %v2496 = vadd.f32 %v2326, %v2451
  %v2497 = vadd.f32 %v2327, %v2471
  %v2498 = vadd.f32 %v2328, %v2491
  %v2499 = vld [vmem:[%s5 + $0x30] sm:$0xff]
  %2500 = vrot.lane.b32.xlu0 %v2329, 111
  %v2501 = vpop.permute.xlu0 %2500
  %2502 = vrot.lane.b32.xlu0 %v2330, 111
  %v2503 = vpop.permute.xlu0 %2502
  %2504 = vrot.lane.b32.xlu0 %v2331, 111
  %v2505 = vpop.permute.xlu0 %2504
  %2506 = vrot.lane.b32.xlu0 %v2332, 111
  %v2507 = vpop.permute.xlu0 %2506
  %2508 = vrot.lane.b32.xlu0 %v2333, 111
  %v2509 = vpop.permute.xlu0 %2508
  %2510 = vrot.lane.b32.xlu0 %v2334, 111
  %v2511 = vpop.permute.xlu0 %2510
  %2512 = vrot.lane.b32.xlu0 %v2335, 111
  %v2513 = vpop.permute.xlu0 %2512
  %v2514 = vsel %vm1002, %v2501, %v2503
  %v2515 = vsel %vm1002, %v2503, %v2505
  %v2516 = vsel %vm1002, %v2505, %v2507
  %v2517 = vsel %vm1002, %v2507, %v2509
  %v2518 = vsel %vm1002, %v2509, %v2511
  %v2519 = vsel %vm1002, %v2511, %v2513
  %v2527 = vsel %vm98, %v2499, 0
  %2529 = vmatpush.msra.mxu0 0.0
  %2530 = vmatpush.msra.mxu0 0.0
  %2531 = vmatpush.msra.mxu0 0.0
  %2532 = vmatpush.msra.mxu0 0.0
  %2533 = vmatpush.msra.mxu0 0.0
  %2534 = vmatpush.msra.mxu0 0.0
  %2535 = vmatpush.msra.mxu0 0.0
  %2536 = vmatpush.msra.mxu0 0.0
  %2537 = vmatpush.msra.mxu0 0.0
  %2538 = vmatpush.msra.mxu0 0.0
  %2539 = vmatpush.msra.mxu0 0.0
  %2540 = vmatpush.msra.mxu0 0.0
  %2541 = vmatpush.msra.mxu0 0.0
  %2542 = vmatpush.msra.mxu0 0.0
  %2543 = vmatpush.msra.mxu0 0.0
  %2544 = vmatpush.msra.mxu0 %v2514
  %2545 = vmatmul.f32.gmra.mxu0 %v2527
  %v2546 = vpop.f32.mrf.mxu0
  %v2547 = vadd.f32 0.0, %v2546
  %2548 = vdwg.mxu0
  %2549 = vmatpush.msra.mxu0 0.0
  %2550 = vmatpush.msra.mxu0 0.0
  %2551 = vmatpush.msra.mxu0 0.0
  %2552 = vmatpush.msra.mxu0 0.0
  %2553 = vmatpush.msra.mxu0 0.0
  %2554 = vmatpush.msra.mxu0 0.0
  %2555 = vmatpush.msra.mxu0 0.0
  %2556 = vmatpush.msra.mxu0 0.0
  %2557 = vmatpush.msra.mxu0 0.0
  %2558 = vmatpush.msra.mxu0 0.0
  %2559 = vmatpush.msra.mxu0 0.0
  %2560 = vmatpush.msra.mxu0 0.0
  %2561 = vmatpush.msra.mxu0 0.0
  %2562 = vmatpush.msra.mxu0 0.0
  %2563 = vmatpush.msra.mxu0 0.0
  %2564 = vmatpush.msra.mxu0 %v2515
  %2565 = vmatmul.f32.gmra.mxu0 %v2527
  %v2566 = vpop.f32.mrf.mxu0
  %v2567 = vadd.f32 0.0, %v2566
  %2568 = vdwg.mxu0
  %2569 = vmatpush.msra.mxu0 0.0
  %2570 = vmatpush.msra.mxu0 0.0
  %2571 = vmatpush.msra.mxu0 0.0
  %2572 = vmatpush.msra.mxu0 0.0
  %2573 = vmatpush.msra.mxu0 0.0
  %2574 = vmatpush.msra.mxu0 0.0
  %2575 = vmatpush.msra.mxu0 0.0
  %2576 = vmatpush.msra.mxu0 0.0
  %2577 = vmatpush.msra.mxu0 0.0
  %2578 = vmatpush.msra.mxu0 0.0
  %2579 = vmatpush.msra.mxu0 0.0
  %2580 = vmatpush.msra.mxu0 0.0
  %2581 = vmatpush.msra.mxu0 0.0
  %2582 = vmatpush.msra.mxu0 0.0
  %2583 = vmatpush.msra.mxu0 0.0
  %2584 = vmatpush.msra.mxu0 %v2516
  %2585 = vmatmul.f32.gmra.mxu0 %v2527
  %v2586 = vpop.f32.mrf.mxu0
  %v2587 = vadd.f32 0.0, %v2586
  %2588 = vdwg.mxu0
  %2589 = vmatpush.msra.mxu0 0.0
  %2590 = vmatpush.msra.mxu0 0.0
  %2591 = vmatpush.msra.mxu0 0.0
  %2592 = vmatpush.msra.mxu0 0.0
  %2593 = vmatpush.msra.mxu0 0.0
  %2594 = vmatpush.msra.mxu0 0.0
  %2595 = vmatpush.msra.mxu0 0.0
  %2596 = vmatpush.msra.mxu0 0.0
  %2597 = vmatpush.msra.mxu0 0.0
  %2598 = vmatpush.msra.mxu0 0.0
  %2599 = vmatpush.msra.mxu0 0.0
  %2600 = vmatpush.msra.mxu0 0.0
  %2601 = vmatpush.msra.mxu0 0.0
  %2602 = vmatpush.msra.mxu0 0.0
  %2603 = vmatpush.msra.mxu0 0.0
  %2604 = vmatpush.msra.mxu0 %v2517
  %2605 = vmatmul.f32.gmra.mxu0 %v2527
  %v2606 = vpop.f32.mrf.mxu0
  %v2607 = vadd.f32 0.0, %v2606
  %2608 = vdwg.mxu0
  %2609 = vmatpush.msra.mxu0 0.0
  %2610 = vmatpush.msra.mxu0 0.0
  %2611 = vmatpush.msra.mxu0 0.0
  %2612 = vmatpush.msra.mxu0 0.0
  %2613 = vmatpush.msra.mxu0 0.0
  %2614 = vmatpush.msra.mxu0 0.0
  %2615 = vmatpush.msra.mxu0 0.0
  %2616 = vmatpush.msra.mxu0 0.0
  %2617 = vmatpush.msra.mxu0 0.0
  %2618 = vmatpush.msra.mxu0 0.0
  %2619 = vmatpush.msra.mxu0 0.0
  %2620 = vmatpush.msra.mxu0 0.0
  %2621 = vmatpush.msra.mxu0 0.0
  %2622 = vmatpush.msra.mxu0 0.0
  %2623 = vmatpush.msra.mxu0 0.0
  %2624 = vmatpush.msra.mxu0 %v2518
  %2625 = vmatmul.f32.gmra.mxu0 %v2527
  %v2626 = vpop.f32.mrf.mxu0
  %v2627 = vadd.f32 0.0, %v2626
  %2628 = vdwg.mxu0
  %2629 = vmatpush.msra.mxu0 0.0
  %2630 = vmatpush.msra.mxu0 0.0
  %2631 = vmatpush.msra.mxu0 0.0
  %2632 = vmatpush.msra.mxu0 0.0
  %2633 = vmatpush.msra.mxu0 0.0
  %2634 = vmatpush.msra.mxu0 0.0
  %2635 = vmatpush.msra.mxu0 0.0
  %2636 = vmatpush.msra.mxu0 0.0
  %2637 = vmatpush.msra.mxu0 0.0
  %2638 = vmatpush.msra.mxu0 0.0
  %2639 = vmatpush.msra.mxu0 0.0
  %2640 = vmatpush.msra.mxu0 0.0
  %2641 = vmatpush.msra.mxu0 0.0
  %2642 = vmatpush.msra.mxu0 0.0
  %2643 = vmatpush.msra.mxu0 0.0
  %2644 = vmatpush.msra.mxu0 %v2519
  %2645 = vmatmul.f32.gmra.mxu0 %v2527
  %v2646 = vpop.f32.mrf.mxu0
  %v2647 = vadd.f32 0.0, %v2646
  %2648 = vdwg.mxu0
  %v2649 = vadd.f32 %v2493, %v2547
  %v2650 = vadd.f32 %v2494, %v2567
  %v2651 = vadd.f32 %v2495, %v2587
  %v2652 = vadd.f32 %v2496, %v2607
  %v2653 = vadd.f32 %v2497, %v2627
  %v2654 = vadd.f32 %v2498, %v2647
  %v2655 = vld [vmem:[%s5 + $0x38] sm:$0xff]
  %2656 = vrot.lane.b32.xlu0 %v2329, 110
  %v2657 = vpop.permute.xlu0 %2656
  %2658 = vrot.lane.b32.xlu0 %v2330, 110
  %v2659 = vpop.permute.xlu0 %2658
  %2660 = vrot.lane.b32.xlu0 %v2331, 110
  %v2661 = vpop.permute.xlu0 %2660
  %2662 = vrot.lane.b32.xlu0 %v2332, 110
  %v2663 = vpop.permute.xlu0 %2662
  %2664 = vrot.lane.b32.xlu0 %v2333, 110
  %v2665 = vpop.permute.xlu0 %2664
  %2666 = vrot.lane.b32.xlu0 %v2334, 110
  %v2667 = vpop.permute.xlu0 %2666
  %2668 = vrot.lane.b32.xlu0 %v2335, 110
  %v2669 = vpop.permute.xlu0 %2668
  %v2670 = vsel %vm1159, %v2657, %v2659
  %v2671 = vsel %vm1159, %v2659, %v2661
  %v2672 = vsel %vm1159, %v2661, %v2663
  %v2673 = vsel %vm1159, %v2663, %v2665
  %v2674 = vsel %vm1159, %v2665, %v2667
  %v2675 = vsel %vm1159, %v2667, %v2669
  %v2683 = vsel %vm98, %v2655, 0
  %2685 = vmatpush.msra.mxu0 0.0
  %2686 = vmatpush.msra.mxu0 0.0
  %2687 = vmatpush.msra.mxu0 0.0
  %2688 = vmatpush.msra.mxu0 0.0
  %2689 = vmatpush.msra.mxu0 0.0
  %2690 = vmatpush.msra.mxu0 0.0
  %2691 = vmatpush.msra.mxu0 0.0
  %2692 = vmatpush.msra.mxu0 0.0
  %2693 = vmatpush.msra.mxu0 0.0
  %2694 = vmatpush.msra.mxu0 0.0
  %2695 = vmatpush.msra.mxu0 0.0
  %2696 = vmatpush.msra.mxu0 0.0
  %2697 = vmatpush.msra.mxu0 0.0
  %2698 = vmatpush.msra.mxu0 0.0
  %2699 = vmatpush.msra.mxu0 0.0
  %2700 = vmatpush.msra.mxu0 %v2670
  %2701 = vmatmul.f32.gmra.mxu0 %v2683
  %v2702 = vpop.f32.mrf.mxu0
  %v2703 = vadd.f32 0.0, %v2702
  %2704 = vdwg.mxu0
  %2705 = vmatpush.msra.mxu0 0.0
  %2706 = vmatpush.msra.mxu0 0.0
  %2707 = vmatpush.msra.mxu0 0.0
  %2708 = vmatpush.msra.mxu0 0.0
  %2709 = vmatpush.msra.mxu0 0.0
  %2710 = vmatpush.msra.mxu0 0.0
  %2711 = vmatpush.msra.mxu0 0.0
  %2712 = vmatpush.msra.mxu0 0.0
  %2713 = vmatpush.msra.mxu0 0.0
  %2714 = vmatpush.msra.mxu0 0.0
  %2715 = vmatpush.msra.mxu0 0.0
  %2716 = vmatpush.msra.mxu0 0.0
  %2717 = vmatpush.msra.mxu0 0.0
  %2718 = vmatpush.msra.mxu0 0.0
  %2719 = vmatpush.msra.mxu0 0.0
  %2720 = vmatpush.msra.mxu0 %v2671
  %2721 = vmatmul.f32.gmra.mxu0 %v2683
  %v2722 = vpop.f32.mrf.mxu0
  %v2723 = vadd.f32 0.0, %v2722
  %2724 = vdwg.mxu0
  %2725 = vmatpush.msra.mxu0 0.0
  %2726 = vmatpush.msra.mxu0 0.0
  %2727 = vmatpush.msra.mxu0 0.0
  %2728 = vmatpush.msra.mxu0 0.0
  %2729 = vmatpush.msra.mxu0 0.0
  %2730 = vmatpush.msra.mxu0 0.0
  %2731 = vmatpush.msra.mxu0 0.0
  %2732 = vmatpush.msra.mxu0 0.0
  %2733 = vmatpush.msra.mxu0 0.0
  %2734 = vmatpush.msra.mxu0 0.0
  %2735 = vmatpush.msra.mxu0 0.0
  %2736 = vmatpush.msra.mxu0 0.0
  %2737 = vmatpush.msra.mxu0 0.0
  %2738 = vmatpush.msra.mxu0 0.0
  %2739 = vmatpush.msra.mxu0 0.0
  %2740 = vmatpush.msra.mxu0 %v2672
  %2741 = vmatmul.f32.gmra.mxu0 %v2683
  %v2742 = vpop.f32.mrf.mxu0
  %v2743 = vadd.f32 0.0, %v2742
  %2744 = vdwg.mxu0
  %2745 = vmatpush.msra.mxu0 0.0
  %2746 = vmatpush.msra.mxu0 0.0
  %2747 = vmatpush.msra.mxu0 0.0
  %2748 = vmatpush.msra.mxu0 0.0
  %2749 = vmatpush.msra.mxu0 0.0
  %2750 = vmatpush.msra.mxu0 0.0
  %2751 = vmatpush.msra.mxu0 0.0
  %2752 = vmatpush.msra.mxu0 0.0
  %2753 = vmatpush.msra.mxu0 0.0
  %2754 = vmatpush.msra.mxu0 0.0
  %2755 = vmatpush.msra.mxu0 0.0
  %2756 = vmatpush.msra.mxu0 0.0
  %2757 = vmatpush.msra.mxu0 0.0
  %2758 = vmatpush.msra.mxu0 0.0
  %2759 = vmatpush.msra.mxu0 0.0
  %2760 = vmatpush.msra.mxu0 %v2673
  %2761 = vmatmul.f32.gmra.mxu0 %v2683
  %v2762 = vpop.f32.mrf.mxu0
  %v2763 = vadd.f32 0.0, %v2762
  %2764 = vdwg.mxu0
  %2765 = vmatpush.msra.mxu0 0.0
  %2766 = vmatpush.msra.mxu0 0.0
  %2767 = vmatpush.msra.mxu0 0.0
  %2768 = vmatpush.msra.mxu0 0.0
  %2769 = vmatpush.msra.mxu0 0.0
  %2770 = vmatpush.msra.mxu0 0.0
  %2771 = vmatpush.msra.mxu0 0.0
  %2772 = vmatpush.msra.mxu0 0.0
  %2773 = vmatpush.msra.mxu0 0.0
  %2774 = vmatpush.msra.mxu0 0.0
  %2775 = vmatpush.msra.mxu0 0.0
  %2776 = vmatpush.msra.mxu0 0.0
  %2777 = vmatpush.msra.mxu0 0.0
  %2778 = vmatpush.msra.mxu0 0.0
  %2779 = vmatpush.msra.mxu0 0.0
  %2780 = vmatpush.msra.mxu0 %v2674
  %2781 = vmatmul.f32.gmra.mxu0 %v2683
  %v2782 = vpop.f32.mrf.mxu0
  %v2783 = vadd.f32 0.0, %v2782
  %2784 = vdwg.mxu0
  %2785 = vmatpush.msra.mxu0 0.0
  %2786 = vmatpush.msra.mxu0 0.0
  %2787 = vmatpush.msra.mxu0 0.0
  %2788 = vmatpush.msra.mxu0 0.0
  %2789 = vmatpush.msra.mxu0 0.0
  %2790 = vmatpush.msra.mxu0 0.0
  %2791 = vmatpush.msra.mxu0 0.0
  %2792 = vmatpush.msra.mxu0 0.0
  %2793 = vmatpush.msra.mxu0 0.0
  %2794 = vmatpush.msra.mxu0 0.0
  %2795 = vmatpush.msra.mxu0 0.0
  %2796 = vmatpush.msra.mxu0 0.0
  %2797 = vmatpush.msra.mxu0 0.0
  %2798 = vmatpush.msra.mxu0 0.0
  %2799 = vmatpush.msra.mxu0 0.0
  %2800 = vmatpush.msra.mxu0 %v2675
  %2801 = vmatmul.f32.gmra.mxu0 %v2683
  %v2802 = vpop.f32.mrf.mxu0
  %v2803 = vadd.f32 0.0, %v2802
  %2804 = vdwg.mxu0
  %v2805 = vadd.f32 %v2649, %v2703
  %v2806 = vadd.f32 %v2650, %v2723
  %v2807 = vadd.f32 %v2651, %v2743
  %v2808 = vadd.f32 %v2652, %v2763
  %v2809 = vadd.f32 %v2653, %v2783
  %v2810 = vadd.f32 %v2654, %v2803
  %v2811 = vld [vmem:[%s5 + $0x40] sm:$0xff]
  %2812 = vrot.lane.b32.xlu0 %v2329, 109
  %v2813 = vpop.permute.xlu0 %2812
  %2814 = vrot.lane.b32.xlu0 %v2330, 109
  %v2815 = vpop.permute.xlu0 %2814
  %2816 = vrot.lane.b32.xlu0 %v2331, 109
  %v2817 = vpop.permute.xlu0 %2816
  %2818 = vrot.lane.b32.xlu0 %v2332, 109
  %v2819 = vpop.permute.xlu0 %2818
  %2820 = vrot.lane.b32.xlu0 %v2333, 109
  %v2821 = vpop.permute.xlu0 %2820
  %2822 = vrot.lane.b32.xlu0 %v2334, 109
  %v2823 = vpop.permute.xlu0 %2822
  %2824 = vrot.lane.b32.xlu0 %v2335, 109
  %v2825 = vpop.permute.xlu0 %2824
  %v2826 = vsel %vm1316, %v2813, %v2815
  %v2827 = vsel %vm1316, %v2815, %v2817
  %v2828 = vsel %vm1316, %v2817, %v2819
  %v2829 = vsel %vm1316, %v2819, %v2821
  %v2830 = vsel %vm1316, %v2821, %v2823
  %v2831 = vsel %vm1316, %v2823, %v2825
  %v2839 = vsel %vm98, %v2811, 0
  %2841 = vmatpush.msra.mxu0 0.0
  %2842 = vmatpush.msra.mxu0 0.0
  %2843 = vmatpush.msra.mxu0 0.0
  %2844 = vmatpush.msra.mxu0 0.0
  %2845 = vmatpush.msra.mxu0 0.0
  %2846 = vmatpush.msra.mxu0 0.0
  %2847 = vmatpush.msra.mxu0 0.0
  %2848 = vmatpush.msra.mxu0 0.0
  %2849 = vmatpush.msra.mxu0 0.0
  %2850 = vmatpush.msra.mxu0 0.0
  %2851 = vmatpush.msra.mxu0 0.0
  %2852 = vmatpush.msra.mxu0 0.0
  %2853 = vmatpush.msra.mxu0 0.0
  %2854 = vmatpush.msra.mxu0 0.0
  %2855 = vmatpush.msra.mxu0 0.0
  %2856 = vmatpush.msra.mxu0 %v2826
  %2857 = vmatmul.f32.gmra.mxu0 %v2839
  %v2858 = vpop.f32.mrf.mxu0
  %v2859 = vadd.f32 0.0, %v2858
  %2860 = vdwg.mxu0
  %2861 = vmatpush.msra.mxu0 0.0
  %2862 = vmatpush.msra.mxu0 0.0
  %2863 = vmatpush.msra.mxu0 0.0
  %2864 = vmatpush.msra.mxu0 0.0
  %2865 = vmatpush.msra.mxu0 0.0
  %2866 = vmatpush.msra.mxu0 0.0
  %2867 = vmatpush.msra.mxu0 0.0
  %2868 = vmatpush.msra.mxu0 0.0
  %2869 = vmatpush.msra.mxu0 0.0
  %2870 = vmatpush.msra.mxu0 0.0
  %2871 = vmatpush.msra.mxu0 0.0
  %2872 = vmatpush.msra.mxu0 0.0
  %2873 = vmatpush.msra.mxu0 0.0
  %2874 = vmatpush.msra.mxu0 0.0
  %2875 = vmatpush.msra.mxu0 0.0
  %2876 = vmatpush.msra.mxu0 %v2827
  %2877 = vmatmul.f32.gmra.mxu0 %v2839
  %v2878 = vpop.f32.mrf.mxu0
  %v2879 = vadd.f32 0.0, %v2878
  %2880 = vdwg.mxu0
  %2881 = vmatpush.msra.mxu0 0.0
  %2882 = vmatpush.msra.mxu0 0.0
  %2883 = vmatpush.msra.mxu0 0.0
  %2884 = vmatpush.msra.mxu0 0.0
  %2885 = vmatpush.msra.mxu0 0.0
  %2886 = vmatpush.msra.mxu0 0.0
  %2887 = vmatpush.msra.mxu0 0.0
  %2888 = vmatpush.msra.mxu0 0.0
  %2889 = vmatpush.msra.mxu0 0.0
  %2890 = vmatpush.msra.mxu0 0.0
  %2891 = vmatpush.msra.mxu0 0.0
  %2892 = vmatpush.msra.mxu0 0.0
  %2893 = vmatpush.msra.mxu0 0.0
  %2894 = vmatpush.msra.mxu0 0.0
  %2895 = vmatpush.msra.mxu0 0.0
  %2896 = vmatpush.msra.mxu0 %v2828
  %2897 = vmatmul.f32.gmra.mxu0 %v2839
  %v2898 = vpop.f32.mrf.mxu0
  %v2899 = vadd.f32 0.0, %v2898
  %2900 = vdwg.mxu0
  %2901 = vmatpush.msra.mxu0 0.0
  %2902 = vmatpush.msra.mxu0 0.0
  %2903 = vmatpush.msra.mxu0 0.0
  %2904 = vmatpush.msra.mxu0 0.0
  %2905 = vmatpush.msra.mxu0 0.0
  %2906 = vmatpush.msra.mxu0 0.0
  %2907 = vmatpush.msra.mxu0 0.0
  %2908 = vmatpush.msra.mxu0 0.0
  %2909 = vmatpush.msra.mxu0 0.0
  %2910 = vmatpush.msra.mxu0 0.0
  %2911 = vmatpush.msra.mxu0 0.0
  %2912 = vmatpush.msra.mxu0 0.0
  %2913 = vmatpush.msra.mxu0 0.0
  %2914 = vmatpush.msra.mxu0 0.0
  %2915 = vmatpush.msra.mxu0 0.0
  %2916 = vmatpush.msra.mxu0 %v2829
  %2917 = vmatmul.f32.gmra.mxu0 %v2839
  %v2918 = vpop.f32.mrf.mxu0
  %v2919 = vadd.f32 0.0, %v2918
  %2920 = vdwg.mxu0
  %2921 = vmatpush.msra.mxu0 0.0
  %2922 = vmatpush.msra.mxu0 0.0
  %2923 = vmatpush.msra.mxu0 0.0
  %2924 = vmatpush.msra.mxu0 0.0
  %2925 = vmatpush.msra.mxu0 0.0
  %2926 = vmatpush.msra.mxu0 0.0
  %2927 = vmatpush.msra.mxu0 0.0
  %2928 = vmatpush.msra.mxu0 0.0
  %2929 = vmatpush.msra.mxu0 0.0
  %2930 = vmatpush.msra.mxu0 0.0
  %2931 = vmatpush.msra.mxu0 0.0
  %2932 = vmatpush.msra.mxu0 0.0
  %2933 = vmatpush.msra.mxu0 0.0
  %2934 = vmatpush.msra.mxu0 0.0
  %2935 = vmatpush.msra.mxu0 0.0
  %2936 = vmatpush.msra.mxu0 %v2830
  %2937 = vmatmul.f32.gmra.mxu0 %v2839
  %v2938 = vpop.f32.mrf.mxu0
  %v2939 = vadd.f32 0.0, %v2938
  %2940 = vdwg.mxu0
  %2941 = vmatpush.msra.mxu0 0.0
  %2942 = vmatpush.msra.mxu0 0.0
  %2943 = vmatpush.msra.mxu0 0.0
  %2944 = vmatpush.msra.mxu0 0.0
  %2945 = vmatpush.msra.mxu0 0.0
  %2946 = vmatpush.msra.mxu0 0.0
  %2947 = vmatpush.msra.mxu0 0.0
  %2948 = vmatpush.msra.mxu0 0.0
  %2949 = vmatpush.msra.mxu0 0.0
  %2950 = vmatpush.msra.mxu0 0.0
  %2951 = vmatpush.msra.mxu0 0.0
  %2952 = vmatpush.msra.mxu0 0.0
  %2953 = vmatpush.msra.mxu0 0.0
  %2954 = vmatpush.msra.mxu0 0.0
  %2955 = vmatpush.msra.mxu0 0.0
  %2956 = vmatpush.msra.mxu0 %v2831
  %2957 = vmatmul.f32.gmra.mxu0 %v2839
  %v2958 = vpop.f32.mrf.mxu0
  %v2959 = vadd.f32 0.0, %v2958
  %2960 = vdwg.mxu0
  %v2961 = vadd.f32 %v2805, %v2859
  %v2962 = vadd.f32 %v2806, %v2879
  %v2963 = vadd.f32 %v2807, %v2899
  %v2964 = vadd.f32 %v2808, %v2919
  %v2965 = vadd.f32 %v2809, %v2939
  %v2966 = vadd.f32 %v2810, %v2959
  %v2967 = vmul.f32 %v2961, %v1459
  %v2968 = vmul.f32 %v2962, %v1460
  %v2969 = vmul.f32 %v2963, %v1461
  %v2970 = vmul.f32 %v2964, %v1462
  %v2971 = vmul.f32 %v2965, %v1463
  %v2972 = vmul.f32 %v2966, %v1464
  %v2973 = vadd.f32 %v2967, %v2968
  %v2974 = vadd.f32 %v2973, %v2969
  %v2975 = vadd.f32 %v2974, %v2970
  %v2976 = vadd.f32 %v2975, %v2971
  %v2977 = vadd.f32 %v2976, %v2972
  %2978 = vadd.xlane.f32.xlu0 %v2977
  %v2979 = vpop.xlane.xlu0 %2978
  %v2980 = vmul.f32 %v2961, %v2961
  %v2981 = vmul.f32 %v2962, %v2962
  %v2982 = vmul.f32 %v2963, %v2963
  %v2983 = vmul.f32 %v2964, %v2964
  %v2984 = vmul.f32 %v2965, %v2965
  %v2985 = vmul.f32 %v2966, %v2966
  %v2986 = vmul.f32 %v2980, %v1459
  %v2987 = vmul.f32 %v2981, %v1460
  %v2988 = vmul.f32 %v2982, %v1461
  %v2989 = vmul.f32 %v2983, %v1462
  %v2990 = vmul.f32 %v2984, %v1463
  %v2991 = vmul.f32 %v2985, %v1464
  %v2992 = vadd.f32 %v2986, %v2987
  %v2993 = vadd.f32 %v2992, %v2988
  %v2994 = vadd.f32 %v2993, %v2989
  %v2995 = vadd.f32 %v2994, %v2990
  %v2996 = vadd.f32 %v2995, %v2991
  %2997 = vadd.xlane.f32.xlu0 %v2996
  %v2998 = vpop.xlane.xlu0 %2997
  %v2999 = vmul.f32 %v2979, 0.001953125
  %v3000 = vmul.f32 %v2998, 0.001953125
  %v3001 = vmul.f32 %v2999, %v2999
  %v3002 = vsub.f32 %v3000, %v3001
  %v3003 = vmax.f32 %v3002, 0.0
  %v3004 = vsub.f32 %v2961, %v2999
  %v3005 = vsub.f32 %v2962, %v2999
  %v3006 = vsub.f32 %v2963, %v2999
  %v3007 = vsub.f32 %v2964, %v2999
  %v3008 = vsub.f32 %v2965, %v2999
  %v3009 = vsub.f32 %v2966, %v2999
  %v3010 = vadd.f32 %v3003, 1e-05
  %v3011 = vrsqrt.pop %v3010
  %v3012 = vmul.f32 %v3011, %v3010
  %v3013 = vmul.f32 %v3012, %v3011
  %v3014 = vmul.f32 0.5, %v3013
  %v3015 = vsub.f32 1.5, %v3014
  %v3016 = vmul.f32 %v3011, %v3015
  %vm3017 = vweird.f32 %v3010
  %vm3018 = vweird.f32 %v3011
  %vm3019 = vmor %vm3017, %vm3018
  %v3020 = vsel %vm3019, %v3011, %v3016
  %v3021 = vmul.f32 %v3004, %v3020
  %v3022 = vmul.f32 %v3005, %v3020
  %v3023 = vmul.f32 %v3006, %v3020
  %v3024 = vmul.f32 %v3007, %v3020
  %v3025 = vmul.f32 %v3008, %v3020
  %v3026 = vmul.f32 %v3009, %v3020
  %v3027 = vld [vmem:[%s6] sm:$0xff]
  %3029 = vset.pattern.permute.xlu0 0
  %3030 = vperm.xlu0 %3029, %v3027
  %v3031 = vpop.permute.xlu0 %3030
  %v3033 = vmul.f32 %v3021, %v3031
  %v3034 = vmul.f32 %v3022, %v3031
  %v3035 = vmul.f32 %v3023, %v3031
  %v3036 = vmul.f32 %v3024, %v3031
  %v3037 = vmul.f32 %v3025, %v3031
  %v3038 = vmul.f32 %v3026, %v3031
  %v3039 = vld [vmem:[%s7] sm:$0xff]
  %3041 = vset.pattern.permute.xlu0 0
  %3042 = vperm.xlu0 %3041, %v3039
  %v3043 = vpop.permute.xlu0 %3042
  %v3045 = vadd.f32 %v3033, %v3043
  %v3046 = vadd.f32 %v3034, %v3043
  %v3047 = vadd.f32 %v3035, %v3043
  %v3048 = vadd.f32 %v3036, %v3043
  %v3049 = vadd.f32 %v3037, %v3043
  %v3050 = vadd.f32 %v3038, %v3043
  %v3051 = vmax.f32 %v3045, 0.0
  %v3052 = vmax.f32 %v3046, 0.0
  %v3053 = vmax.f32 %v3047, 0.0
  %v3054 = vmax.f32 %v3048, 0.0
  %v3055 = vmax.f32 %v3049, 0.0
  %v3056 = vmax.f32 %v3050, 0.0
  %v3057 = vmul.f32 %v3051, %v1459
  %v3058 = vmul.f32 %v3052, %v1460
  %v3059 = vmul.f32 %v3053, %v1461
  %v3060 = vmul.f32 %v3054, %v1462
  %v3061 = vmul.f32 %v3055, %v1463
  %v3062 = vmul.f32 %v3056, %v1464
  %3063 = vst [vmem:[%s11 + $0x8] sm:$0xff] %v3057
  %3064 = vst [vmem:[%s11 + $0x10] sm:$0xff] %v3058
  %3065 = vst [vmem:[%s11 + $0x18] sm:$0xff] %v3059
  %3066 = vst [vmem:[%s11 + $0x20] sm:$0xff] %v3060
  %3067 = vst [vmem:[%s11 + $0x28] sm:$0xff] %v3061
  %3068 = vst [vmem:[%s11 + $0x30] sm:$0xff] %v3062
  %v3069 = vld [vmem:[%s11] sm:$0xff]
  %v3070 = vld [vmem:[%s11 + $0x8] sm:$0xff]
  %v3071 = vld [vmem:[%s11 + $0x10] sm:$0xff]
  %v3072 = vld [vmem:[%s11 + $0x18] sm:$0xff]
  %v3073 = vld [vmem:[%s11 + $0x20] sm:$0xff]
  %v3074 = vld [vmem:[%s11 + $0x28] sm:$0xff]
  %v3075 = vld [vmem:[%s11 + $0x30] sm:$0xff]
  %v3076 = vld [vmem:[%s8] sm:$0xff]
  %v3077 = vld [vmem:[%s8 + $0x8] sm:$0xff]
  %3085 = vrot.lane.b32.xlu0 %v3069, 18
  %v3086 = vpop.permute.xlu0 %3085
  %3087 = vrot.lane.b32.xlu0 %v3070, 18
  %v3088 = vpop.permute.xlu0 %3087
  %3089 = vrot.lane.b32.xlu0 %v3071, 18
  %v3090 = vpop.permute.xlu0 %3089
  %3091 = vrot.lane.b32.xlu0 %v3072, 18
  %v3092 = vpop.permute.xlu0 %3091
  %3093 = vrot.lane.b32.xlu0 %v3073, 18
  %v3094 = vpop.permute.xlu0 %3093
  %3095 = vrot.lane.b32.xlu0 %v3074, 18
  %v3096 = vpop.permute.xlu0 %3095
  %3097 = vrot.lane.b32.xlu0 %v3075, 18
  %v3098 = vpop.permute.xlu0 %3097
  %v3099 = vsel %vm85, %v3086, %v3088
  %v3100 = vsel %vm85, %v3088, %v3090
  %v3101 = vsel %vm85, %v3090, %v3092
  %v3102 = vsel %vm85, %v3092, %v3094
  %v3103 = vsel %vm85, %v3094, %v3096
  %v3104 = vsel %vm85, %v3096, %v3098
  %v3112 = vsel %vm98, %v3077, 0
  %3114 = vmatpush.msra.mxu0 0.0
  %3115 = vmatpush.msra.mxu0 0.0
  %3116 = vmatpush.msra.mxu0 0.0
  %3117 = vmatpush.msra.mxu0 0.0
  %3118 = vmatpush.msra.mxu0 0.0
  %3119 = vmatpush.msra.mxu0 0.0
  %3120 = vmatpush.msra.mxu0 0.0
  %3121 = vmatpush.msra.mxu0 0.0
  %3122 = vmatpush.msra.mxu0 0.0
  %3123 = vmatpush.msra.mxu0 0.0
  %3124 = vmatpush.msra.mxu0 0.0
  %3125 = vmatpush.msra.mxu0 0.0
  %3126 = vmatpush.msra.mxu0 0.0
  %3127 = vmatpush.msra.mxu0 0.0
  %3128 = vmatpush.msra.mxu0 0.0
  %3129 = vmatpush.msra.mxu0 %v3099
  %3130 = vmatmul.f32.gmra.mxu0 %v3112
  %v3131 = vpop.f32.mrf.mxu0
  %v3132 = vadd.f32 0.0, %v3131
  %3133 = vdwg.mxu0
  %3134 = vmatpush.msra.mxu0 0.0
  %3135 = vmatpush.msra.mxu0 0.0
  %3136 = vmatpush.msra.mxu0 0.0
  %3137 = vmatpush.msra.mxu0 0.0
  %3138 = vmatpush.msra.mxu0 0.0
  %3139 = vmatpush.msra.mxu0 0.0
  %3140 = vmatpush.msra.mxu0 0.0
  %3141 = vmatpush.msra.mxu0 0.0
  %3142 = vmatpush.msra.mxu0 0.0
  %3143 = vmatpush.msra.mxu0 0.0
  %3144 = vmatpush.msra.mxu0 0.0
  %3145 = vmatpush.msra.mxu0 0.0
  %3146 = vmatpush.msra.mxu0 0.0
  %3147 = vmatpush.msra.mxu0 0.0
  %3148 = vmatpush.msra.mxu0 0.0
  %3149 = vmatpush.msra.mxu0 %v3100
  %3150 = vmatmul.f32.gmra.mxu0 %v3112
  %v3151 = vpop.f32.mrf.mxu0
  %v3152 = vadd.f32 0.0, %v3151
  %3153 = vdwg.mxu0
  %3154 = vmatpush.msra.mxu0 0.0
  %3155 = vmatpush.msra.mxu0 0.0
  %3156 = vmatpush.msra.mxu0 0.0
  %3157 = vmatpush.msra.mxu0 0.0
  %3158 = vmatpush.msra.mxu0 0.0
  %3159 = vmatpush.msra.mxu0 0.0
  %3160 = vmatpush.msra.mxu0 0.0
  %3161 = vmatpush.msra.mxu0 0.0
  %3162 = vmatpush.msra.mxu0 0.0
  %3163 = vmatpush.msra.mxu0 0.0
  %3164 = vmatpush.msra.mxu0 0.0
  %3165 = vmatpush.msra.mxu0 0.0
  %3166 = vmatpush.msra.mxu0 0.0
  %3167 = vmatpush.msra.mxu0 0.0
  %3168 = vmatpush.msra.mxu0 0.0
  %3169 = vmatpush.msra.mxu0 %v3101
  %3170 = vmatmul.f32.gmra.mxu0 %v3112
  %v3171 = vpop.f32.mrf.mxu0
  %v3172 = vadd.f32 0.0, %v3171
  %3173 = vdwg.mxu0
  %3174 = vmatpush.msra.mxu0 0.0
  %3175 = vmatpush.msra.mxu0 0.0
  %3176 = vmatpush.msra.mxu0 0.0
  %3177 = vmatpush.msra.mxu0 0.0
  %3178 = vmatpush.msra.mxu0 0.0
  %3179 = vmatpush.msra.mxu0 0.0
  %3180 = vmatpush.msra.mxu0 0.0
  %3181 = vmatpush.msra.mxu0 0.0
  %3182 = vmatpush.msra.mxu0 0.0
  %3183 = vmatpush.msra.mxu0 0.0
  %3184 = vmatpush.msra.mxu0 0.0
  %3185 = vmatpush.msra.mxu0 0.0
  %3186 = vmatpush.msra.mxu0 0.0
  %3187 = vmatpush.msra.mxu0 0.0
  %3188 = vmatpush.msra.mxu0 0.0
  %3189 = vmatpush.msra.mxu0 %v3102
  %3190 = vmatmul.f32.gmra.mxu0 %v3112
  %v3191 = vpop.f32.mrf.mxu0
  %v3192 = vadd.f32 0.0, %v3191
  %3193 = vdwg.mxu0
  %3194 = vmatpush.msra.mxu0 0.0
  %3195 = vmatpush.msra.mxu0 0.0
  %3196 = vmatpush.msra.mxu0 0.0
  %3197 = vmatpush.msra.mxu0 0.0
  %3198 = vmatpush.msra.mxu0 0.0
  %3199 = vmatpush.msra.mxu0 0.0
  %3200 = vmatpush.msra.mxu0 0.0
  %3201 = vmatpush.msra.mxu0 0.0
  %3202 = vmatpush.msra.mxu0 0.0
  %3203 = vmatpush.msra.mxu0 0.0
  %3204 = vmatpush.msra.mxu0 0.0
  %3205 = vmatpush.msra.mxu0 0.0
  %3206 = vmatpush.msra.mxu0 0.0
  %3207 = vmatpush.msra.mxu0 0.0
  %3208 = vmatpush.msra.mxu0 0.0
  %3209 = vmatpush.msra.mxu0 %v3103
  %3210 = vmatmul.f32.gmra.mxu0 %v3112
  %v3211 = vpop.f32.mrf.mxu0
  %v3212 = vadd.f32 0.0, %v3211
  %3213 = vdwg.mxu0
  %3214 = vmatpush.msra.mxu0 0.0
  %3215 = vmatpush.msra.mxu0 0.0
  %3216 = vmatpush.msra.mxu0 0.0
  %3217 = vmatpush.msra.mxu0 0.0
  %3218 = vmatpush.msra.mxu0 0.0
  %3219 = vmatpush.msra.mxu0 0.0
  %3220 = vmatpush.msra.mxu0 0.0
  %3221 = vmatpush.msra.mxu0 0.0
  %3222 = vmatpush.msra.mxu0 0.0
  %3223 = vmatpush.msra.mxu0 0.0
  %3224 = vmatpush.msra.mxu0 0.0
  %3225 = vmatpush.msra.mxu0 0.0
  %3226 = vmatpush.msra.mxu0 0.0
  %3227 = vmatpush.msra.mxu0 0.0
  %3228 = vmatpush.msra.mxu0 0.0
  %3229 = vmatpush.msra.mxu0 %v3104
  %3230 = vmatmul.f32.gmra.mxu0 %v3112
  %v3231 = vpop.f32.mrf.mxu0
  %v3232 = vadd.f32 0.0, %v3231
  %3233 = vdwg.mxu0
  %3234 = vrot.lane.b32.xlu0 %v3069, 19
  %v3235 = vpop.permute.xlu0 %3234
  %3236 = vrot.lane.b32.xlu0 %v3070, 19
  %v3237 = vpop.permute.xlu0 %3236
  %3238 = vrot.lane.b32.xlu0 %v3071, 19
  %v3239 = vpop.permute.xlu0 %3238
  %3240 = vrot.lane.b32.xlu0 %v3072, 19
  %v3241 = vpop.permute.xlu0 %3240
  %3242 = vrot.lane.b32.xlu0 %v3073, 19
  %v3243 = vpop.permute.xlu0 %3242
  %3244 = vrot.lane.b32.xlu0 %v3074, 19
  %v3245 = vpop.permute.xlu0 %3244
  %3246 = vrot.lane.b32.xlu0 %v3075, 19
  %v3247 = vpop.permute.xlu0 %3246
  %v3248 = vsel %vm236, %v3235, %v3237
  %v3249 = vsel %vm236, %v3237, %v3239
  %v3250 = vsel %vm236, %v3239, %v3241
  %v3251 = vsel %vm236, %v3241, %v3243
  %v3252 = vsel %vm236, %v3243, %v3245
  %v3253 = vsel %vm236, %v3245, %v3247
  %v3261 = vsel %vm98, %v3076, 0
  %3263 = vmatpush.msra.mxu0 0.0
  %3264 = vmatpush.msra.mxu0 0.0
  %3265 = vmatpush.msra.mxu0 0.0
  %3266 = vmatpush.msra.mxu0 0.0
  %3267 = vmatpush.msra.mxu0 0.0
  %3268 = vmatpush.msra.mxu0 0.0
  %3269 = vmatpush.msra.mxu0 0.0
  %3270 = vmatpush.msra.mxu0 0.0
  %3271 = vmatpush.msra.mxu0 0.0
  %3272 = vmatpush.msra.mxu0 0.0
  %3273 = vmatpush.msra.mxu0 0.0
  %3274 = vmatpush.msra.mxu0 0.0
  %3275 = vmatpush.msra.mxu0 0.0
  %3276 = vmatpush.msra.mxu0 0.0
  %3277 = vmatpush.msra.mxu0 0.0
  %3278 = vmatpush.msra.mxu0 %v3248
  %3279 = vmatmul.f32.gmra.mxu0 %v3261
  %v3280 = vpop.f32.mrf.mxu0
  %v3281 = vadd.f32 %v3132, %v3280
  %3282 = vdwg.mxu0
  %3283 = vmatpush.msra.mxu0 0.0
  %3284 = vmatpush.msra.mxu0 0.0
  %3285 = vmatpush.msra.mxu0 0.0
  %3286 = vmatpush.msra.mxu0 0.0
  %3287 = vmatpush.msra.mxu0 0.0
  %3288 = vmatpush.msra.mxu0 0.0
  %3289 = vmatpush.msra.mxu0 0.0
  %3290 = vmatpush.msra.mxu0 0.0
  %3291 = vmatpush.msra.mxu0 0.0
  %3292 = vmatpush.msra.mxu0 0.0
  %3293 = vmatpush.msra.mxu0 0.0
  %3294 = vmatpush.msra.mxu0 0.0
  %3295 = vmatpush.msra.mxu0 0.0
  %3296 = vmatpush.msra.mxu0 0.0
  %3297 = vmatpush.msra.mxu0 0.0
  %3298 = vmatpush.msra.mxu0 %v3249
  %3299 = vmatmul.f32.gmra.mxu0 %v3261
  %v3300 = vpop.f32.mrf.mxu0
  %v3301 = vadd.f32 %v3152, %v3300
  %3302 = vdwg.mxu0
  %3303 = vmatpush.msra.mxu0 0.0
  %3304 = vmatpush.msra.mxu0 0.0
  %3305 = vmatpush.msra.mxu0 0.0
  %3306 = vmatpush.msra.mxu0 0.0
  %3307 = vmatpush.msra.mxu0 0.0
  %3308 = vmatpush.msra.mxu0 0.0
  %3309 = vmatpush.msra.mxu0 0.0
  %3310 = vmatpush.msra.mxu0 0.0
  %3311 = vmatpush.msra.mxu0 0.0
  %3312 = vmatpush.msra.mxu0 0.0
  %3313 = vmatpush.msra.mxu0 0.0
  %3314 = vmatpush.msra.mxu0 0.0
  %3315 = vmatpush.msra.mxu0 0.0
  %3316 = vmatpush.msra.mxu0 0.0
  %3317 = vmatpush.msra.mxu0 0.0
  %3318 = vmatpush.msra.mxu0 %v3250
  %3319 = vmatmul.f32.gmra.mxu0 %v3261
  %v3320 = vpop.f32.mrf.mxu0
  %v3321 = vadd.f32 %v3172, %v3320
  %3322 = vdwg.mxu0
  %3323 = vmatpush.msra.mxu0 0.0
  %3324 = vmatpush.msra.mxu0 0.0
  %3325 = vmatpush.msra.mxu0 0.0
  %3326 = vmatpush.msra.mxu0 0.0
  %3327 = vmatpush.msra.mxu0 0.0
  %3328 = vmatpush.msra.mxu0 0.0
  %3329 = vmatpush.msra.mxu0 0.0
  %3330 = vmatpush.msra.mxu0 0.0
  %3331 = vmatpush.msra.mxu0 0.0
  %3332 = vmatpush.msra.mxu0 0.0
  %3333 = vmatpush.msra.mxu0 0.0
  %3334 = vmatpush.msra.mxu0 0.0
  %3335 = vmatpush.msra.mxu0 0.0
  %3336 = vmatpush.msra.mxu0 0.0
  %3337 = vmatpush.msra.mxu0 0.0
  %3338 = vmatpush.msra.mxu0 %v3251
  %3339 = vmatmul.f32.gmra.mxu0 %v3261
  %v3340 = vpop.f32.mrf.mxu0
  %v3341 = vadd.f32 %v3192, %v3340
  %3342 = vdwg.mxu0
  %3343 = vmatpush.msra.mxu0 0.0
  %3344 = vmatpush.msra.mxu0 0.0
  %3345 = vmatpush.msra.mxu0 0.0
  %3346 = vmatpush.msra.mxu0 0.0
  %3347 = vmatpush.msra.mxu0 0.0
  %3348 = vmatpush.msra.mxu0 0.0
  %3349 = vmatpush.msra.mxu0 0.0
  %3350 = vmatpush.msra.mxu0 0.0
  %3351 = vmatpush.msra.mxu0 0.0
  %3352 = vmatpush.msra.mxu0 0.0
  %3353 = vmatpush.msra.mxu0 0.0
  %3354 = vmatpush.msra.mxu0 0.0
  %3355 = vmatpush.msra.mxu0 0.0
  %3356 = vmatpush.msra.mxu0 0.0
  %3357 = vmatpush.msra.mxu0 0.0
  %3358 = vmatpush.msra.mxu0 %v3252
  %3359 = vmatmul.f32.gmra.mxu0 %v3261
  %v3360 = vpop.f32.mrf.mxu0
  %v3361 = vadd.f32 %v3212, %v3360
  %3362 = vdwg.mxu0
  %3363 = vmatpush.msra.mxu0 0.0
  %3364 = vmatpush.msra.mxu0 0.0
  %3365 = vmatpush.msra.mxu0 0.0
  %3366 = vmatpush.msra.mxu0 0.0
  %3367 = vmatpush.msra.mxu0 0.0
  %3368 = vmatpush.msra.mxu0 0.0
  %3369 = vmatpush.msra.mxu0 0.0
  %3370 = vmatpush.msra.mxu0 0.0
  %3371 = vmatpush.msra.mxu0 0.0
  %3372 = vmatpush.msra.mxu0 0.0
  %3373 = vmatpush.msra.mxu0 0.0
  %3374 = vmatpush.msra.mxu0 0.0
  %3375 = vmatpush.msra.mxu0 0.0
  %3376 = vmatpush.msra.mxu0 0.0
  %3377 = vmatpush.msra.mxu0 0.0
  %3378 = vmatpush.msra.mxu0 %v3253
  %3379 = vmatmul.f32.gmra.mxu0 %v3261
  %v3380 = vpop.f32.mrf.mxu0
  %v3381 = vadd.f32 %v3232, %v3380
  %3382 = vdwg.mxu0
  %v3383 = vld [vmem:[%s8 + $0x10] sm:$0xff]
  %3384 = vrot.lane.b32.xlu0 %v3069, 17
  %v3385 = vpop.permute.xlu0 %3384
  %3386 = vrot.lane.b32.xlu0 %v3070, 17
  %v3387 = vpop.permute.xlu0 %3386
  %3388 = vrot.lane.b32.xlu0 %v3071, 17
  %v3389 = vpop.permute.xlu0 %3388
  %3390 = vrot.lane.b32.xlu0 %v3072, 17
  %v3391 = vpop.permute.xlu0 %3390
  %3392 = vrot.lane.b32.xlu0 %v3073, 17
  %v3393 = vpop.permute.xlu0 %3392
  %3394 = vrot.lane.b32.xlu0 %v3074, 17
  %v3395 = vpop.permute.xlu0 %3394
  %3396 = vrot.lane.b32.xlu0 %v3075, 17
  %v3397 = vpop.permute.xlu0 %3396
  %v3398 = vsel %vm387, %v3385, %v3387
  %v3399 = vsel %vm387, %v3387, %v3389
  %v3400 = vsel %vm387, %v3389, %v3391
  %v3401 = vsel %vm387, %v3391, %v3393
  %v3402 = vsel %vm387, %v3393, %v3395
  %v3403 = vsel %vm387, %v3395, %v3397
  %v3411 = vsel %vm98, %v3383, 0
  %3413 = vmatpush.msra.mxu0 0.0
  %3414 = vmatpush.msra.mxu0 0.0
  %3415 = vmatpush.msra.mxu0 0.0
  %3416 = vmatpush.msra.mxu0 0.0
  %3417 = vmatpush.msra.mxu0 0.0
  %3418 = vmatpush.msra.mxu0 0.0
  %3419 = vmatpush.msra.mxu0 0.0
  %3420 = vmatpush.msra.mxu0 0.0
  %3421 = vmatpush.msra.mxu0 0.0
  %3422 = vmatpush.msra.mxu0 0.0
  %3423 = vmatpush.msra.mxu0 0.0
  %3424 = vmatpush.msra.mxu0 0.0
  %3425 = vmatpush.msra.mxu0 0.0
  %3426 = vmatpush.msra.mxu0 0.0
  %3427 = vmatpush.msra.mxu0 0.0
  %3428 = vmatpush.msra.mxu0 %v3398
  %3429 = vmatmul.f32.gmra.mxu0 %v3411
  %v3430 = vpop.f32.mrf.mxu0
  %v3431 = vadd.f32 0.0, %v3430
  %3432 = vdwg.mxu0
  %3433 = vmatpush.msra.mxu0 0.0
  %3434 = vmatpush.msra.mxu0 0.0
  %3435 = vmatpush.msra.mxu0 0.0
  %3436 = vmatpush.msra.mxu0 0.0
  %3437 = vmatpush.msra.mxu0 0.0
  %3438 = vmatpush.msra.mxu0 0.0
  %3439 = vmatpush.msra.mxu0 0.0
  %3440 = vmatpush.msra.mxu0 0.0
  %3441 = vmatpush.msra.mxu0 0.0
  %3442 = vmatpush.msra.mxu0 0.0
  %3443 = vmatpush.msra.mxu0 0.0
  %3444 = vmatpush.msra.mxu0 0.0
  %3445 = vmatpush.msra.mxu0 0.0
  %3446 = vmatpush.msra.mxu0 0.0
  %3447 = vmatpush.msra.mxu0 0.0
  %3448 = vmatpush.msra.mxu0 %v3399
  %3449 = vmatmul.f32.gmra.mxu0 %v3411
  %v3450 = vpop.f32.mrf.mxu0
  %v3451 = vadd.f32 0.0, %v3450
  %3452 = vdwg.mxu0
  %3453 = vmatpush.msra.mxu0 0.0
  %3454 = vmatpush.msra.mxu0 0.0
  %3455 = vmatpush.msra.mxu0 0.0
  %3456 = vmatpush.msra.mxu0 0.0
  %3457 = vmatpush.msra.mxu0 0.0
  %3458 = vmatpush.msra.mxu0 0.0
  %3459 = vmatpush.msra.mxu0 0.0
  %3460 = vmatpush.msra.mxu0 0.0
  %3461 = vmatpush.msra.mxu0 0.0
  %3462 = vmatpush.msra.mxu0 0.0
  %3463 = vmatpush.msra.mxu0 0.0
  %3464 = vmatpush.msra.mxu0 0.0
  %3465 = vmatpush.msra.mxu0 0.0
  %3466 = vmatpush.msra.mxu0 0.0
  %3467 = vmatpush.msra.mxu0 0.0
  %3468 = vmatpush.msra.mxu0 %v3400
  %3469 = vmatmul.f32.gmra.mxu0 %v3411
  %v3470 = vpop.f32.mrf.mxu0
  %v3471 = vadd.f32 0.0, %v3470
  %3472 = vdwg.mxu0
  %3473 = vmatpush.msra.mxu0 0.0
  %3474 = vmatpush.msra.mxu0 0.0
  %3475 = vmatpush.msra.mxu0 0.0
  %3476 = vmatpush.msra.mxu0 0.0
  %3477 = vmatpush.msra.mxu0 0.0
  %3478 = vmatpush.msra.mxu0 0.0
  %3479 = vmatpush.msra.mxu0 0.0
  %3480 = vmatpush.msra.mxu0 0.0
  %3481 = vmatpush.msra.mxu0 0.0
  %3482 = vmatpush.msra.mxu0 0.0
  %3483 = vmatpush.msra.mxu0 0.0
  %3484 = vmatpush.msra.mxu0 0.0
  %3485 = vmatpush.msra.mxu0 0.0
  %3486 = vmatpush.msra.mxu0 0.0
  %3487 = vmatpush.msra.mxu0 0.0
  %3488 = vmatpush.msra.mxu0 %v3401
  %3489 = vmatmul.f32.gmra.mxu0 %v3411
  %v3490 = vpop.f32.mrf.mxu0
  %v3491 = vadd.f32 0.0, %v3490
  %3492 = vdwg.mxu0
  %3493 = vmatpush.msra.mxu0 0.0
  %3494 = vmatpush.msra.mxu0 0.0
  %3495 = vmatpush.msra.mxu0 0.0
  %3496 = vmatpush.msra.mxu0 0.0
  %3497 = vmatpush.msra.mxu0 0.0
  %3498 = vmatpush.msra.mxu0 0.0
  %3499 = vmatpush.msra.mxu0 0.0
  %3500 = vmatpush.msra.mxu0 0.0
  %3501 = vmatpush.msra.mxu0 0.0
  %3502 = vmatpush.msra.mxu0 0.0
  %3503 = vmatpush.msra.mxu0 0.0
  %3504 = vmatpush.msra.mxu0 0.0
  %3505 = vmatpush.msra.mxu0 0.0
  %3506 = vmatpush.msra.mxu0 0.0
  %3507 = vmatpush.msra.mxu0 0.0
  %3508 = vmatpush.msra.mxu0 %v3402
  %3509 = vmatmul.f32.gmra.mxu0 %v3411
  %v3510 = vpop.f32.mrf.mxu0
  %v3511 = vadd.f32 0.0, %v3510
  %3512 = vdwg.mxu0
  %3513 = vmatpush.msra.mxu0 0.0
  %3514 = vmatpush.msra.mxu0 0.0
  %3515 = vmatpush.msra.mxu0 0.0
  %3516 = vmatpush.msra.mxu0 0.0
  %3517 = vmatpush.msra.mxu0 0.0
  %3518 = vmatpush.msra.mxu0 0.0
  %3519 = vmatpush.msra.mxu0 0.0
  %3520 = vmatpush.msra.mxu0 0.0
  %3521 = vmatpush.msra.mxu0 0.0
  %3522 = vmatpush.msra.mxu0 0.0
  %3523 = vmatpush.msra.mxu0 0.0
  %3524 = vmatpush.msra.mxu0 0.0
  %3525 = vmatpush.msra.mxu0 0.0
  %3526 = vmatpush.msra.mxu0 0.0
  %3527 = vmatpush.msra.mxu0 0.0
  %3528 = vmatpush.msra.mxu0 %v3403
  %3529 = vmatmul.f32.gmra.mxu0 %v3411
  %v3530 = vpop.f32.mrf.mxu0
  %v3531 = vadd.f32 0.0, %v3530
  %3532 = vdwg.mxu0
  %v3533 = vadd.f32 %v3281, %v3431
  %v3534 = vadd.f32 %v3301, %v3451
  %v3535 = vadd.f32 %v3321, %v3471
  %v3536 = vadd.f32 %v3341, %v3491
  %v3537 = vadd.f32 %v3361, %v3511
  %v3538 = vadd.f32 %v3381, %v3531
  %v3539 = vld [vmem:[%s8 + $0x18] sm:$0xff]
  %3540 = vrot.lane.b32.xlu0 %v3069, 1
  %v3541 = vpop.permute.xlu0 %3540
  %3542 = vrot.lane.b32.xlu0 %v3070, 1
  %v3543 = vpop.permute.xlu0 %3542
  %3544 = vrot.lane.b32.xlu0 %v3071, 1
  %v3545 = vpop.permute.xlu0 %3544
  %3546 = vrot.lane.b32.xlu0 %v3072, 1
  %v3547 = vpop.permute.xlu0 %3546
  %3548 = vrot.lane.b32.xlu0 %v3073, 1
  %v3549 = vpop.permute.xlu0 %3548
  %3550 = vrot.lane.b32.xlu0 %v3074, 1
  %v3551 = vpop.permute.xlu0 %3550
  %3552 = vrot.lane.b32.xlu0 %v3075, 1
  %v3553 = vpop.permute.xlu0 %3552
  %v3554 = vsel %vm544, %v3541, %v3543
  %v3555 = vsel %vm544, %v3543, %v3545
  %v3556 = vsel %vm544, %v3545, %v3547
  %v3557 = vsel %vm544, %v3547, %v3549
  %v3558 = vsel %vm544, %v3549, %v3551
  %v3559 = vsel %vm544, %v3551, %v3553
  %v3567 = vsel %vm98, %v3539, 0
  %3569 = vmatpush.msra.mxu0 0.0
  %3570 = vmatpush.msra.mxu0 0.0
  %3571 = vmatpush.msra.mxu0 0.0
  %3572 = vmatpush.msra.mxu0 0.0
  %3573 = vmatpush.msra.mxu0 0.0
  %3574 = vmatpush.msra.mxu0 0.0
  %3575 = vmatpush.msra.mxu0 0.0
  %3576 = vmatpush.msra.mxu0 0.0
  %3577 = vmatpush.msra.mxu0 0.0
  %3578 = vmatpush.msra.mxu0 0.0
  %3579 = vmatpush.msra.mxu0 0.0
  %3580 = vmatpush.msra.mxu0 0.0
  %3581 = vmatpush.msra.mxu0 0.0
  %3582 = vmatpush.msra.mxu0 0.0
  %3583 = vmatpush.msra.mxu0 0.0
  %3584 = vmatpush.msra.mxu0 %v3554
  %3585 = vmatmul.f32.gmra.mxu0 %v3567
  %v3586 = vpop.f32.mrf.mxu0
  %v3587 = vadd.f32 0.0, %v3586
  %3588 = vdwg.mxu0
  %3589 = vmatpush.msra.mxu0 0.0
  %3590 = vmatpush.msra.mxu0 0.0
  %3591 = vmatpush.msra.mxu0 0.0
  %3592 = vmatpush.msra.mxu0 0.0
  %3593 = vmatpush.msra.mxu0 0.0
  %3594 = vmatpush.msra.mxu0 0.0
  %3595 = vmatpush.msra.mxu0 0.0
  %3596 = vmatpush.msra.mxu0 0.0
  %3597 = vmatpush.msra.mxu0 0.0
  %3598 = vmatpush.msra.mxu0 0.0
  %3599 = vmatpush.msra.mxu0 0.0
  %3600 = vmatpush.msra.mxu0 0.0
  %3601 = vmatpush.msra.mxu0 0.0
  %3602 = vmatpush.msra.mxu0 0.0
  %3603 = vmatpush.msra.mxu0 0.0
  %3604 = vmatpush.msra.mxu0 %v3555
  %3605 = vmatmul.f32.gmra.mxu0 %v3567
  %v3606 = vpop.f32.mrf.mxu0
  %v3607 = vadd.f32 0.0, %v3606
  %3608 = vdwg.mxu0
  %3609 = vmatpush.msra.mxu0 0.0
  %3610 = vmatpush.msra.mxu0 0.0
  %3611 = vmatpush.msra.mxu0 0.0
  %3612 = vmatpush.msra.mxu0 0.0
  %3613 = vmatpush.msra.mxu0 0.0
  %3614 = vmatpush.msra.mxu0 0.0
  %3615 = vmatpush.msra.mxu0 0.0
  %3616 = vmatpush.msra.mxu0 0.0
  %3617 = vmatpush.msra.mxu0 0.0
  %3618 = vmatpush.msra.mxu0 0.0
  %3619 = vmatpush.msra.mxu0 0.0
  %3620 = vmatpush.msra.mxu0 0.0
  %3621 = vmatpush.msra.mxu0 0.0
  %3622 = vmatpush.msra.mxu0 0.0
  %3623 = vmatpush.msra.mxu0 0.0
  %3624 = vmatpush.msra.mxu0 %v3556
  %3625 = vmatmul.f32.gmra.mxu0 %v3567
  %v3626 = vpop.f32.mrf.mxu0
  %v3627 = vadd.f32 0.0, %v3626
  %3628 = vdwg.mxu0
  %3629 = vmatpush.msra.mxu0 0.0
  %3630 = vmatpush.msra.mxu0 0.0
  %3631 = vmatpush.msra.mxu0 0.0
  %3632 = vmatpush.msra.mxu0 0.0
  %3633 = vmatpush.msra.mxu0 0.0
  %3634 = vmatpush.msra.mxu0 0.0
  %3635 = vmatpush.msra.mxu0 0.0
  %3636 = vmatpush.msra.mxu0 0.0
  %3637 = vmatpush.msra.mxu0 0.0
  %3638 = vmatpush.msra.mxu0 0.0
  %3639 = vmatpush.msra.mxu0 0.0
  %3640 = vmatpush.msra.mxu0 0.0
  %3641 = vmatpush.msra.mxu0 0.0
  %3642 = vmatpush.msra.mxu0 0.0
  %3643 = vmatpush.msra.mxu0 0.0
  %3644 = vmatpush.msra.mxu0 %v3557
  %3645 = vmatmul.f32.gmra.mxu0 %v3567
  %v3646 = vpop.f32.mrf.mxu0
  %v3647 = vadd.f32 0.0, %v3646
  %3648 = vdwg.mxu0
  %3649 = vmatpush.msra.mxu0 0.0
  %3650 = vmatpush.msra.mxu0 0.0
  %3651 = vmatpush.msra.mxu0 0.0
  %3652 = vmatpush.msra.mxu0 0.0
  %3653 = vmatpush.msra.mxu0 0.0
  %3654 = vmatpush.msra.mxu0 0.0
  %3655 = vmatpush.msra.mxu0 0.0
  %3656 = vmatpush.msra.mxu0 0.0
  %3657 = vmatpush.msra.mxu0 0.0
  %3658 = vmatpush.msra.mxu0 0.0
  %3659 = vmatpush.msra.mxu0 0.0
  %3660 = vmatpush.msra.mxu0 0.0
  %3661 = vmatpush.msra.mxu0 0.0
  %3662 = vmatpush.msra.mxu0 0.0
  %3663 = vmatpush.msra.mxu0 0.0
  %3664 = vmatpush.msra.mxu0 %v3558
  %3665 = vmatmul.f32.gmra.mxu0 %v3567
  %v3666 = vpop.f32.mrf.mxu0
  %v3667 = vadd.f32 0.0, %v3666
  %3668 = vdwg.mxu0
  %3669 = vmatpush.msra.mxu0 0.0
  %3670 = vmatpush.msra.mxu0 0.0
  %3671 = vmatpush.msra.mxu0 0.0
  %3672 = vmatpush.msra.mxu0 0.0
  %3673 = vmatpush.msra.mxu0 0.0
  %3674 = vmatpush.msra.mxu0 0.0
  %3675 = vmatpush.msra.mxu0 0.0
  %3676 = vmatpush.msra.mxu0 0.0
  %3677 = vmatpush.msra.mxu0 0.0
  %3678 = vmatpush.msra.mxu0 0.0
  %3679 = vmatpush.msra.mxu0 0.0
  %3680 = vmatpush.msra.mxu0 0.0
  %3681 = vmatpush.msra.mxu0 0.0
  %3682 = vmatpush.msra.mxu0 0.0
  %3683 = vmatpush.msra.mxu0 0.0
  %3684 = vmatpush.msra.mxu0 %v3559
  %3685 = vmatmul.f32.gmra.mxu0 %v3567
  %v3686 = vpop.f32.mrf.mxu0
  %v3687 = vadd.f32 0.0, %v3686
  %3688 = vdwg.mxu0
  %v3689 = vadd.f32 %v3533, %v3587
  %v3690 = vadd.f32 %v3534, %v3607
  %v3691 = vadd.f32 %v3535, %v3627
  %v3692 = vadd.f32 %v3536, %v3647
  %v3693 = vadd.f32 %v3537, %v3667
  %v3694 = vadd.f32 %v3538, %v3687
  %v3695 = vld [vmem:[%s8 + $0x20] sm:$0xff]
  %v3697 = vsel %vm98, %v3695, 0
  %3699 = vmatpush.msra.mxu0 0.0
  %3700 = vmatpush.msra.mxu0 0.0
  %3701 = vmatpush.msra.mxu0 0.0
  %3702 = vmatpush.msra.mxu0 0.0
  %3703 = vmatpush.msra.mxu0 0.0
  %3704 = vmatpush.msra.mxu0 0.0
  %3705 = vmatpush.msra.mxu0 0.0
  %3706 = vmatpush.msra.mxu0 0.0
  %3707 = vmatpush.msra.mxu0 0.0
  %3708 = vmatpush.msra.mxu0 0.0
  %3709 = vmatpush.msra.mxu0 0.0
  %3710 = vmatpush.msra.mxu0 0.0
  %3711 = vmatpush.msra.mxu0 0.0
  %3712 = vmatpush.msra.mxu0 0.0
  %3713 = vmatpush.msra.mxu0 0.0
  %3714 = vmatpush.msra.mxu0 %v3070
  %3715 = vmatmul.f32.gmra.mxu0 %v3697
  %v3716 = vpop.f32.mrf.mxu0
  %v3717 = vadd.f32 0.0, %v3716
  %3718 = vdwg.mxu0
  %3719 = vmatpush.msra.mxu0 0.0
  %3720 = vmatpush.msra.mxu0 0.0
  %3721 = vmatpush.msra.mxu0 0.0
  %3722 = vmatpush.msra.mxu0 0.0
  %3723 = vmatpush.msra.mxu0 0.0
  %3724 = vmatpush.msra.mxu0 0.0
  %3725 = vmatpush.msra.mxu0 0.0
  %3726 = vmatpush.msra.mxu0 0.0
  %3727 = vmatpush.msra.mxu0 0.0
  %3728 = vmatpush.msra.mxu0 0.0
  %3729 = vmatpush.msra.mxu0 0.0
  %3730 = vmatpush.msra.mxu0 0.0
  %3731 = vmatpush.msra.mxu0 0.0
  %3732 = vmatpush.msra.mxu0 0.0
  %3733 = vmatpush.msra.mxu0 0.0
  %3734 = vmatpush.msra.mxu0 %v3071
  %3735 = vmatmul.f32.gmra.mxu0 %v3697
  %v3736 = vpop.f32.mrf.mxu0
  %v3737 = vadd.f32 0.0, %v3736
  %3738 = vdwg.mxu0
  %3739 = vmatpush.msra.mxu0 0.0
  %3740 = vmatpush.msra.mxu0 0.0
  %3741 = vmatpush.msra.mxu0 0.0
  %3742 = vmatpush.msra.mxu0 0.0
  %3743 = vmatpush.msra.mxu0 0.0
  %3744 = vmatpush.msra.mxu0 0.0
  %3745 = vmatpush.msra.mxu0 0.0
  %3746 = vmatpush.msra.mxu0 0.0
  %3747 = vmatpush.msra.mxu0 0.0
  %3748 = vmatpush.msra.mxu0 0.0
  %3749 = vmatpush.msra.mxu0 0.0
  %3750 = vmatpush.msra.mxu0 0.0
  %3751 = vmatpush.msra.mxu0 0.0
  %3752 = vmatpush.msra.mxu0 0.0
  %3753 = vmatpush.msra.mxu0 0.0
  %3754 = vmatpush.msra.mxu0 %v3072
  %3755 = vmatmul.f32.gmra.mxu0 %v3697
  %v3756 = vpop.f32.mrf.mxu0
  %v3757 = vadd.f32 0.0, %v3756
  %3758 = vdwg.mxu0
  %3759 = vmatpush.msra.mxu0 0.0
  %3760 = vmatpush.msra.mxu0 0.0
  %3761 = vmatpush.msra.mxu0 0.0
  %3762 = vmatpush.msra.mxu0 0.0
  %3763 = vmatpush.msra.mxu0 0.0
  %3764 = vmatpush.msra.mxu0 0.0
  %3765 = vmatpush.msra.mxu0 0.0
  %3766 = vmatpush.msra.mxu0 0.0
  %3767 = vmatpush.msra.mxu0 0.0
  %3768 = vmatpush.msra.mxu0 0.0
  %3769 = vmatpush.msra.mxu0 0.0
  %3770 = vmatpush.msra.mxu0 0.0
  %3771 = vmatpush.msra.mxu0 0.0
  %3772 = vmatpush.msra.mxu0 0.0
  %3773 = vmatpush.msra.mxu0 0.0
  %3774 = vmatpush.msra.mxu0 %v3073
  %3775 = vmatmul.f32.gmra.mxu0 %v3697
  %v3776 = vpop.f32.mrf.mxu0
  %v3777 = vadd.f32 0.0, %v3776
  %3778 = vdwg.mxu0
  %3779 = vmatpush.msra.mxu0 0.0
  %3780 = vmatpush.msra.mxu0 0.0
  %3781 = vmatpush.msra.mxu0 0.0
  %3782 = vmatpush.msra.mxu0 0.0
  %3783 = vmatpush.msra.mxu0 0.0
  %3784 = vmatpush.msra.mxu0 0.0
  %3785 = vmatpush.msra.mxu0 0.0
  %3786 = vmatpush.msra.mxu0 0.0
  %3787 = vmatpush.msra.mxu0 0.0
  %3788 = vmatpush.msra.mxu0 0.0
  %3789 = vmatpush.msra.mxu0 0.0
  %3790 = vmatpush.msra.mxu0 0.0
  %3791 = vmatpush.msra.mxu0 0.0
  %3792 = vmatpush.msra.mxu0 0.0
  %3793 = vmatpush.msra.mxu0 0.0
  %3794 = vmatpush.msra.mxu0 %v3074
  %3795 = vmatmul.f32.gmra.mxu0 %v3697
  %v3796 = vpop.f32.mrf.mxu0
  %v3797 = vadd.f32 0.0, %v3796
  %3798 = vdwg.mxu0
  %3799 = vmatpush.msra.mxu0 0.0
  %3800 = vmatpush.msra.mxu0 0.0
  %3801 = vmatpush.msra.mxu0 0.0
  %3802 = vmatpush.msra.mxu0 0.0
  %3803 = vmatpush.msra.mxu0 0.0
  %3804 = vmatpush.msra.mxu0 0.0
  %3805 = vmatpush.msra.mxu0 0.0
  %3806 = vmatpush.msra.mxu0 0.0
  %3807 = vmatpush.msra.mxu0 0.0
  %3808 = vmatpush.msra.mxu0 0.0
  %3809 = vmatpush.msra.mxu0 0.0
  %3810 = vmatpush.msra.mxu0 0.0
  %3811 = vmatpush.msra.mxu0 0.0
  %3812 = vmatpush.msra.mxu0 0.0
  %3813 = vmatpush.msra.mxu0 0.0
  %3814 = vmatpush.msra.mxu0 %v3075
  %3815 = vmatmul.f32.gmra.mxu0 %v3697
  %v3816 = vpop.f32.mrf.mxu0
  %v3817 = vadd.f32 0.0, %v3816
  %3818 = vdwg.mxu0
  %v3819 = vadd.f32 %v3689, %v3717
  %v3820 = vadd.f32 %v3690, %v3737
  %v3821 = vadd.f32 %v3691, %v3757
  %v3822 = vadd.f32 %v3692, %v3777
  %v3823 = vadd.f32 %v3693, %v3797
  %v3824 = vadd.f32 %v3694, %v3817
  %v3825 = vld [vmem:[%s11 + $0x8] sm:$0xff]
  %v3826 = vld [vmem:[%s11 + $0x10] sm:$0xff]
  %v3827 = vld [vmem:[%s11 + $0x18] sm:$0xff]
  %v3828 = vld [vmem:[%s11 + $0x20] sm:$0xff]
  %v3829 = vld [vmem:[%s11 + $0x28] sm:$0xff]
  %v3830 = vld [vmem:[%s11 + $0x30] sm:$0xff]
  %v3831 = vld [vmem:[%s11 + $0x38] sm:$0xff]
  %v3832 = vld [vmem:[%s8 + $0x28] sm:$0xff]
  %3840 = vrot.lane.b32.xlu0 %v3825, 127
  %v3841 = vpop.permute.xlu0 %3840
  %3842 = vrot.lane.b32.xlu0 %v3826, 127
  %v3843 = vpop.permute.xlu0 %3842
  %3844 = vrot.lane.b32.xlu0 %v3827, 127
  %v3845 = vpop.permute.xlu0 %3844
  %3846 = vrot.lane.b32.xlu0 %v3828, 127
  %v3847 = vpop.permute.xlu0 %3846
  %3848 = vrot.lane.b32.xlu0 %v3829, 127
  %v3849 = vpop.permute.xlu0 %3848
  %3850 = vrot.lane.b32.xlu0 %v3830, 127
  %v3851 = vpop.permute.xlu0 %3850
  %3852 = vrot.lane.b32.xlu0 %v3831, 127
  %v3853 = vpop.permute.xlu0 %3852
  %v3854 = vsel %vm845, %v3841, %v3843
  %v3855 = vsel %vm845, %v3843, %v3845
  %v3856 = vsel %vm845, %v3845, %v3847
  %v3857 = vsel %vm845, %v3847, %v3849
  %v3858 = vsel %vm845, %v3849, %v3851
  %v3859 = vsel %vm845, %v3851, %v3853
  %v3867 = vsel %vm98, %v3832, 0
  %3869 = vmatpush.msra.mxu0 0.0
  %3870 = vmatpush.msra.mxu0 0.0
  %3871 = vmatpush.msra.mxu0 0.0
  %3872 = vmatpush.msra.mxu0 0.0
  %3873 = vmatpush.msra.mxu0 0.0
  %3874 = vmatpush.msra.mxu0 0.0
  %3875 = vmatpush.msra.mxu0 0.0
  %3876 = vmatpush.msra.mxu0 0.0
  %3877 = vmatpush.msra.mxu0 0.0
  %3878 = vmatpush.msra.mxu0 0.0
  %3879 = vmatpush.msra.mxu0 0.0
  %3880 = vmatpush.msra.mxu0 0.0
  %3881 = vmatpush.msra.mxu0 0.0
  %3882 = vmatpush.msra.mxu0 0.0
  %3883 = vmatpush.msra.mxu0 0.0
  %3884 = vmatpush.msra.mxu0 %v3854
  %3885 = vmatmul.f32.gmra.mxu0 %v3867
  %v3886 = vpop.f32.mrf.mxu0
  %v3887 = vadd.f32 0.0, %v3886
  %3888 = vdwg.mxu0
  %3889 = vmatpush.msra.mxu0 0.0
  %3890 = vmatpush.msra.mxu0 0.0
  %3891 = vmatpush.msra.mxu0 0.0
  %3892 = vmatpush.msra.mxu0 0.0
  %3893 = vmatpush.msra.mxu0 0.0
  %3894 = vmatpush.msra.mxu0 0.0
  %3895 = vmatpush.msra.mxu0 0.0
  %3896 = vmatpush.msra.mxu0 0.0
  %3897 = vmatpush.msra.mxu0 0.0
  %3898 = vmatpush.msra.mxu0 0.0
  %3899 = vmatpush.msra.mxu0 0.0
  %3900 = vmatpush.msra.mxu0 0.0
  %3901 = vmatpush.msra.mxu0 0.0
  %3902 = vmatpush.msra.mxu0 0.0
  %3903 = vmatpush.msra.mxu0 0.0
  %3904 = vmatpush.msra.mxu0 %v3855
  %3905 = vmatmul.f32.gmra.mxu0 %v3867
  %v3906 = vpop.f32.mrf.mxu0
  %v3907 = vadd.f32 0.0, %v3906
  %3908 = vdwg.mxu0
  %3909 = vmatpush.msra.mxu0 0.0
  %3910 = vmatpush.msra.mxu0 0.0
  %3911 = vmatpush.msra.mxu0 0.0
  %3912 = vmatpush.msra.mxu0 0.0
  %3913 = vmatpush.msra.mxu0 0.0
  %3914 = vmatpush.msra.mxu0 0.0
  %3915 = vmatpush.msra.mxu0 0.0
  %3916 = vmatpush.msra.mxu0 0.0
  %3917 = vmatpush.msra.mxu0 0.0
  %3918 = vmatpush.msra.mxu0 0.0
  %3919 = vmatpush.msra.mxu0 0.0
  %3920 = vmatpush.msra.mxu0 0.0
  %3921 = vmatpush.msra.mxu0 0.0
  %3922 = vmatpush.msra.mxu0 0.0
  %3923 = vmatpush.msra.mxu0 0.0
  %3924 = vmatpush.msra.mxu0 %v3856
  %3925 = vmatmul.f32.gmra.mxu0 %v3867
  %v3926 = vpop.f32.mrf.mxu0
  %v3927 = vadd.f32 0.0, %v3926
  %3928 = vdwg.mxu0
  %3929 = vmatpush.msra.mxu0 0.0
  %3930 = vmatpush.msra.mxu0 0.0
  %3931 = vmatpush.msra.mxu0 0.0
  %3932 = vmatpush.msra.mxu0 0.0
  %3933 = vmatpush.msra.mxu0 0.0
  %3934 = vmatpush.msra.mxu0 0.0
  %3935 = vmatpush.msra.mxu0 0.0
  %3936 = vmatpush.msra.mxu0 0.0
  %3937 = vmatpush.msra.mxu0 0.0
  %3938 = vmatpush.msra.mxu0 0.0
  %3939 = vmatpush.msra.mxu0 0.0
  %3940 = vmatpush.msra.mxu0 0.0
  %3941 = vmatpush.msra.mxu0 0.0
  %3942 = vmatpush.msra.mxu0 0.0
  %3943 = vmatpush.msra.mxu0 0.0
  %3944 = vmatpush.msra.mxu0 %v3857
  %3945 = vmatmul.f32.gmra.mxu0 %v3867
  %v3946 = vpop.f32.mrf.mxu0
  %v3947 = vadd.f32 0.0, %v3946
  %3948 = vdwg.mxu0
  %3949 = vmatpush.msra.mxu0 0.0
  %3950 = vmatpush.msra.mxu0 0.0
  %3951 = vmatpush.msra.mxu0 0.0
  %3952 = vmatpush.msra.mxu0 0.0
  %3953 = vmatpush.msra.mxu0 0.0
  %3954 = vmatpush.msra.mxu0 0.0
  %3955 = vmatpush.msra.mxu0 0.0
  %3956 = vmatpush.msra.mxu0 0.0
  %3957 = vmatpush.msra.mxu0 0.0
  %3958 = vmatpush.msra.mxu0 0.0
  %3959 = vmatpush.msra.mxu0 0.0
  %3960 = vmatpush.msra.mxu0 0.0
  %3961 = vmatpush.msra.mxu0 0.0
  %3962 = vmatpush.msra.mxu0 0.0
  %3963 = vmatpush.msra.mxu0 0.0
  %3964 = vmatpush.msra.mxu0 %v3858
  %3965 = vmatmul.f32.gmra.mxu0 %v3867
  %v3966 = vpop.f32.mrf.mxu0
  %v3967 = vadd.f32 0.0, %v3966
  %3968 = vdwg.mxu0
  %3969 = vmatpush.msra.mxu0 0.0
  %3970 = vmatpush.msra.mxu0 0.0
  %3971 = vmatpush.msra.mxu0 0.0
  %3972 = vmatpush.msra.mxu0 0.0
  %3973 = vmatpush.msra.mxu0 0.0
  %3974 = vmatpush.msra.mxu0 0.0
  %3975 = vmatpush.msra.mxu0 0.0
  %3976 = vmatpush.msra.mxu0 0.0
  %3977 = vmatpush.msra.mxu0 0.0
  %3978 = vmatpush.msra.mxu0 0.0
  %3979 = vmatpush.msra.mxu0 0.0
  %3980 = vmatpush.msra.mxu0 0.0
  %3981 = vmatpush.msra.mxu0 0.0
  %3982 = vmatpush.msra.mxu0 0.0
  %3983 = vmatpush.msra.mxu0 0.0
  %3984 = vmatpush.msra.mxu0 %v3859
  %3985 = vmatmul.f32.gmra.mxu0 %v3867
  %v3986 = vpop.f32.mrf.mxu0
  %v3987 = vadd.f32 0.0, %v3986
  %3988 = vdwg.mxu0
  %v3989 = vadd.f32 %v3819, %v3887
  %v3990 = vadd.f32 %v3820, %v3907
  %v3991 = vadd.f32 %v3821, %v3927
  %v3992 = vadd.f32 %v3822, %v3947
  %v3993 = vadd.f32 %v3823, %v3967
  %v3994 = vadd.f32 %v3824, %v3987
  %v3995 = vld [vmem:[%s8 + $0x30] sm:$0xff]
  %3996 = vrot.lane.b32.xlu0 %v3825, 111
  %v3997 = vpop.permute.xlu0 %3996
  %3998 = vrot.lane.b32.xlu0 %v3826, 111
  %v3999 = vpop.permute.xlu0 %3998
  %4000 = vrot.lane.b32.xlu0 %v3827, 111
  %v4001 = vpop.permute.xlu0 %4000
  %4002 = vrot.lane.b32.xlu0 %v3828, 111
  %v4003 = vpop.permute.xlu0 %4002
  %4004 = vrot.lane.b32.xlu0 %v3829, 111
  %v4005 = vpop.permute.xlu0 %4004
  %4006 = vrot.lane.b32.xlu0 %v3830, 111
  %v4007 = vpop.permute.xlu0 %4006
  %4008 = vrot.lane.b32.xlu0 %v3831, 111
  %v4009 = vpop.permute.xlu0 %4008
  %v4010 = vsel %vm1002, %v3997, %v3999
  %v4011 = vsel %vm1002, %v3999, %v4001
  %v4012 = vsel %vm1002, %v4001, %v4003
  %v4013 = vsel %vm1002, %v4003, %v4005
  %v4014 = vsel %vm1002, %v4005, %v4007
  %v4015 = vsel %vm1002, %v4007, %v4009
  %v4023 = vsel %vm98, %v3995, 0
  %4025 = vmatpush.msra.mxu0 0.0
  %4026 = vmatpush.msra.mxu0 0.0
  %4027 = vmatpush.msra.mxu0 0.0
  %4028 = vmatpush.msra.mxu0 0.0
  %4029 = vmatpush.msra.mxu0 0.0
  %4030 = vmatpush.msra.mxu0 0.0
  %4031 = vmatpush.msra.mxu0 0.0
  %4032 = vmatpush.msra.mxu0 0.0
  %4033 = vmatpush.msra.mxu0 0.0
  %4034 = vmatpush.msra.mxu0 0.0
  %4035 = vmatpush.msra.mxu0 0.0
  %4036 = vmatpush.msra.mxu0 0.0
  %4037 = vmatpush.msra.mxu0 0.0
  %4038 = vmatpush.msra.mxu0 0.0
  %4039 = vmatpush.msra.mxu0 0.0
  %4040 = vmatpush.msra.mxu0 %v4010
  %4041 = vmatmul.f32.gmra.mxu0 %v4023
  %v4042 = vpop.f32.mrf.mxu0
  %v4043 = vadd.f32 0.0, %v4042
  %4044 = vdwg.mxu0
  %4045 = vmatpush.msra.mxu0 0.0
  %4046 = vmatpush.msra.mxu0 0.0
  %4047 = vmatpush.msra.mxu0 0.0
  %4048 = vmatpush.msra.mxu0 0.0
  %4049 = vmatpush.msra.mxu0 0.0
  %4050 = vmatpush.msra.mxu0 0.0
  %4051 = vmatpush.msra.mxu0 0.0
  %4052 = vmatpush.msra.mxu0 0.0
  %4053 = vmatpush.msra.mxu0 0.0
  %4054 = vmatpush.msra.mxu0 0.0
  %4055 = vmatpush.msra.mxu0 0.0
  %4056 = vmatpush.msra.mxu0 0.0
  %4057 = vmatpush.msra.mxu0 0.0
  %4058 = vmatpush.msra.mxu0 0.0
  %4059 = vmatpush.msra.mxu0 0.0
  %4060 = vmatpush.msra.mxu0 %v4011
  %4061 = vmatmul.f32.gmra.mxu0 %v4023
  %v4062 = vpop.f32.mrf.mxu0
  %v4063 = vadd.f32 0.0, %v4062
  %4064 = vdwg.mxu0
  %4065 = vmatpush.msra.mxu0 0.0
  %4066 = vmatpush.msra.mxu0 0.0
  %4067 = vmatpush.msra.mxu0 0.0
  %4068 = vmatpush.msra.mxu0 0.0
  %4069 = vmatpush.msra.mxu0 0.0
  %4070 = vmatpush.msra.mxu0 0.0
  %4071 = vmatpush.msra.mxu0 0.0
  %4072 = vmatpush.msra.mxu0 0.0
  %4073 = vmatpush.msra.mxu0 0.0
  %4074 = vmatpush.msra.mxu0 0.0
  %4075 = vmatpush.msra.mxu0 0.0
  %4076 = vmatpush.msra.mxu0 0.0
  %4077 = vmatpush.msra.mxu0 0.0
  %4078 = vmatpush.msra.mxu0 0.0
  %4079 = vmatpush.msra.mxu0 0.0
  %4080 = vmatpush.msra.mxu0 %v4012
  %4081 = vmatmul.f32.gmra.mxu0 %v4023
  %v4082 = vpop.f32.mrf.mxu0
  %v4083 = vadd.f32 0.0, %v4082
  %4084 = vdwg.mxu0
  %4085 = vmatpush.msra.mxu0 0.0
  %4086 = vmatpush.msra.mxu0 0.0
  %4087 = vmatpush.msra.mxu0 0.0
  %4088 = vmatpush.msra.mxu0 0.0
  %4089 = vmatpush.msra.mxu0 0.0
  %4090 = vmatpush.msra.mxu0 0.0
  %4091 = vmatpush.msra.mxu0 0.0
  %4092 = vmatpush.msra.mxu0 0.0
  %4093 = vmatpush.msra.mxu0 0.0
  %4094 = vmatpush.msra.mxu0 0.0
  %4095 = vmatpush.msra.mxu0 0.0
  %4096 = vmatpush.msra.mxu0 0.0
  %4097 = vmatpush.msra.mxu0 0.0
  %4098 = vmatpush.msra.mxu0 0.0
  %4099 = vmatpush.msra.mxu0 0.0
  %4100 = vmatpush.msra.mxu0 %v4013
  %4101 = vmatmul.f32.gmra.mxu0 %v4023
  %v4102 = vpop.f32.mrf.mxu0
  %v4103 = vadd.f32 0.0, %v4102
  %4104 = vdwg.mxu0
  %4105 = vmatpush.msra.mxu0 0.0
  %4106 = vmatpush.msra.mxu0 0.0
  %4107 = vmatpush.msra.mxu0 0.0
  %4108 = vmatpush.msra.mxu0 0.0
  %4109 = vmatpush.msra.mxu0 0.0
  %4110 = vmatpush.msra.mxu0 0.0
  %4111 = vmatpush.msra.mxu0 0.0
  %4112 = vmatpush.msra.mxu0 0.0
  %4113 = vmatpush.msra.mxu0 0.0
  %4114 = vmatpush.msra.mxu0 0.0
  %4115 = vmatpush.msra.mxu0 0.0
  %4116 = vmatpush.msra.mxu0 0.0
  %4117 = vmatpush.msra.mxu0 0.0
  %4118 = vmatpush.msra.mxu0 0.0
  %4119 = vmatpush.msra.mxu0 0.0
  %4120 = vmatpush.msra.mxu0 %v4014
  %4121 = vmatmul.f32.gmra.mxu0 %v4023
  %v4122 = vpop.f32.mrf.mxu0
  %v4123 = vadd.f32 0.0, %v4122
  %4124 = vdwg.mxu0
  %4125 = vmatpush.msra.mxu0 0.0
  %4126 = vmatpush.msra.mxu0 0.0
  %4127 = vmatpush.msra.mxu0 0.0
  %4128 = vmatpush.msra.mxu0 0.0
  %4129 = vmatpush.msra.mxu0 0.0
  %4130 = vmatpush.msra.mxu0 0.0
  %4131 = vmatpush.msra.mxu0 0.0
  %4132 = vmatpush.msra.mxu0 0.0
  %4133 = vmatpush.msra.mxu0 0.0
  %4134 = vmatpush.msra.mxu0 0.0
  %4135 = vmatpush.msra.mxu0 0.0
  %4136 = vmatpush.msra.mxu0 0.0
  %4137 = vmatpush.msra.mxu0 0.0
  %4138 = vmatpush.msra.mxu0 0.0
  %4139 = vmatpush.msra.mxu0 0.0
  %4140 = vmatpush.msra.mxu0 %v4015
  %4141 = vmatmul.f32.gmra.mxu0 %v4023
  %v4142 = vpop.f32.mrf.mxu0
  %v4143 = vadd.f32 0.0, %v4142
  %4144 = vdwg.mxu0
  %v4145 = vadd.f32 %v3989, %v4043
  %v4146 = vadd.f32 %v3990, %v4063
  %v4147 = vadd.f32 %v3991, %v4083
  %v4148 = vadd.f32 %v3992, %v4103
  %v4149 = vadd.f32 %v3993, %v4123
  %v4150 = vadd.f32 %v3994, %v4143
  %v4151 = vld [vmem:[%s8 + $0x38] sm:$0xff]
  %4152 = vrot.lane.b32.xlu0 %v3825, 110
  %v4153 = vpop.permute.xlu0 %4152
  %4154 = vrot.lane.b32.xlu0 %v3826, 110
  %v4155 = vpop.permute.xlu0 %4154
  %4156 = vrot.lane.b32.xlu0 %v3827, 110
  %v4157 = vpop.permute.xlu0 %4156
  %4158 = vrot.lane.b32.xlu0 %v3828, 110
  %v4159 = vpop.permute.xlu0 %4158
  %4160 = vrot.lane.b32.xlu0 %v3829, 110
  %v4161 = vpop.permute.xlu0 %4160
  %4162 = vrot.lane.b32.xlu0 %v3830, 110
  %v4163 = vpop.permute.xlu0 %4162
  %4164 = vrot.lane.b32.xlu0 %v3831, 110
  %v4165 = vpop.permute.xlu0 %4164
  %v4166 = vsel %vm1159, %v4153, %v4155
  %v4167 = vsel %vm1159, %v4155, %v4157
  %v4168 = vsel %vm1159, %v4157, %v4159
  %v4169 = vsel %vm1159, %v4159, %v4161
  %v4170 = vsel %vm1159, %v4161, %v4163
  %v4171 = vsel %vm1159, %v4163, %v4165
  %v4179 = vsel %vm98, %v4151, 0
  %4181 = vmatpush.msra.mxu0 0.0
  %4182 = vmatpush.msra.mxu0 0.0
  %4183 = vmatpush.msra.mxu0 0.0
  %4184 = vmatpush.msra.mxu0 0.0
  %4185 = vmatpush.msra.mxu0 0.0
  %4186 = vmatpush.msra.mxu0 0.0
  %4187 = vmatpush.msra.mxu0 0.0
  %4188 = vmatpush.msra.mxu0 0.0
  %4189 = vmatpush.msra.mxu0 0.0
  %4190 = vmatpush.msra.mxu0 0.0
  %4191 = vmatpush.msra.mxu0 0.0
  %4192 = vmatpush.msra.mxu0 0.0
  %4193 = vmatpush.msra.mxu0 0.0
  %4194 = vmatpush.msra.mxu0 0.0
  %4195 = vmatpush.msra.mxu0 0.0
  %4196 = vmatpush.msra.mxu0 %v4166
  %4197 = vmatmul.f32.gmra.mxu0 %v4179
  %v4198 = vpop.f32.mrf.mxu0
  %v4199 = vadd.f32 0.0, %v4198
  %4200 = vdwg.mxu0
  %4201 = vmatpush.msra.mxu0 0.0
  %4202 = vmatpush.msra.mxu0 0.0
  %4203 = vmatpush.msra.mxu0 0.0
  %4204 = vmatpush.msra.mxu0 0.0
  %4205 = vmatpush.msra.mxu0 0.0
  %4206 = vmatpush.msra.mxu0 0.0
  %4207 = vmatpush.msra.mxu0 0.0
  %4208 = vmatpush.msra.mxu0 0.0
  %4209 = vmatpush.msra.mxu0 0.0
  %4210 = vmatpush.msra.mxu0 0.0
  %4211 = vmatpush.msra.mxu0 0.0
  %4212 = vmatpush.msra.mxu0 0.0
  %4213 = vmatpush.msra.mxu0 0.0
  %4214 = vmatpush.msra.mxu0 0.0
  %4215 = vmatpush.msra.mxu0 0.0
  %4216 = vmatpush.msra.mxu0 %v4167
  %4217 = vmatmul.f32.gmra.mxu0 %v4179
  %v4218 = vpop.f32.mrf.mxu0
  %v4219 = vadd.f32 0.0, %v4218
  %4220 = vdwg.mxu0
  %4221 = vmatpush.msra.mxu0 0.0
  %4222 = vmatpush.msra.mxu0 0.0
  %4223 = vmatpush.msra.mxu0 0.0
  %4224 = vmatpush.msra.mxu0 0.0
  %4225 = vmatpush.msra.mxu0 0.0
  %4226 = vmatpush.msra.mxu0 0.0
  %4227 = vmatpush.msra.mxu0 0.0
  %4228 = vmatpush.msra.mxu0 0.0
  %4229 = vmatpush.msra.mxu0 0.0
  %4230 = vmatpush.msra.mxu0 0.0
  %4231 = vmatpush.msra.mxu0 0.0
  %4232 = vmatpush.msra.mxu0 0.0
  %4233 = vmatpush.msra.mxu0 0.0
  %4234 = vmatpush.msra.mxu0 0.0
  %4235 = vmatpush.msra.mxu0 0.0
  %4236 = vmatpush.msra.mxu0 %v4168
  %4237 = vmatmul.f32.gmra.mxu0 %v4179
  %v4238 = vpop.f32.mrf.mxu0
  %v4239 = vadd.f32 0.0, %v4238
  %4240 = vdwg.mxu0
  %4241 = vmatpush.msra.mxu0 0.0
  %4242 = vmatpush.msra.mxu0 0.0
  %4243 = vmatpush.msra.mxu0 0.0
  %4244 = vmatpush.msra.mxu0 0.0
  %4245 = vmatpush.msra.mxu0 0.0
  %4246 = vmatpush.msra.mxu0 0.0
  %4247 = vmatpush.msra.mxu0 0.0
  %4248 = vmatpush.msra.mxu0 0.0
  %4249 = vmatpush.msra.mxu0 0.0
  %4250 = vmatpush.msra.mxu0 0.0
  %4251 = vmatpush.msra.mxu0 0.0
  %4252 = vmatpush.msra.mxu0 0.0
  %4253 = vmatpush.msra.mxu0 0.0
  %4254 = vmatpush.msra.mxu0 0.0
  %4255 = vmatpush.msra.mxu0 0.0
  %4256 = vmatpush.msra.mxu0 %v4169
  %4257 = vmatmul.f32.gmra.mxu0 %v4179
  %v4258 = vpop.f32.mrf.mxu0
  %v4259 = vadd.f32 0.0, %v4258
  %4260 = vdwg.mxu0
  %4261 = vmatpush.msra.mxu0 0.0
  %4262 = vmatpush.msra.mxu0 0.0
  %4263 = vmatpush.msra.mxu0 0.0
  %4264 = vmatpush.msra.mxu0 0.0
  %4265 = vmatpush.msra.mxu0 0.0
  %4266 = vmatpush.msra.mxu0 0.0
  %4267 = vmatpush.msra.mxu0 0.0
  %4268 = vmatpush.msra.mxu0 0.0
  %4269 = vmatpush.msra.mxu0 0.0
  %4270 = vmatpush.msra.mxu0 0.0
  %4271 = vmatpush.msra.mxu0 0.0
  %4272 = vmatpush.msra.mxu0 0.0
  %4273 = vmatpush.msra.mxu0 0.0
  %4274 = vmatpush.msra.mxu0 0.0
  %4275 = vmatpush.msra.mxu0 0.0
  %4276 = vmatpush.msra.mxu0 %v4170
  %4277 = vmatmul.f32.gmra.mxu0 %v4179
  %v4278 = vpop.f32.mrf.mxu0
  %v4279 = vadd.f32 0.0, %v4278
  %4280 = vdwg.mxu0
  %4281 = vmatpush.msra.mxu0 0.0
  %4282 = vmatpush.msra.mxu0 0.0
  %4283 = vmatpush.msra.mxu0 0.0
  %4284 = vmatpush.msra.mxu0 0.0
  %4285 = vmatpush.msra.mxu0 0.0
  %4286 = vmatpush.msra.mxu0 0.0
  %4287 = vmatpush.msra.mxu0 0.0
  %4288 = vmatpush.msra.mxu0 0.0
  %4289 = vmatpush.msra.mxu0 0.0
  %4290 = vmatpush.msra.mxu0 0.0
  %4291 = vmatpush.msra.mxu0 0.0
  %4292 = vmatpush.msra.mxu0 0.0
  %4293 = vmatpush.msra.mxu0 0.0
  %4294 = vmatpush.msra.mxu0 0.0
  %4295 = vmatpush.msra.mxu0 0.0
  %4296 = vmatpush.msra.mxu0 %v4171
  %4297 = vmatmul.f32.gmra.mxu0 %v4179
  %v4298 = vpop.f32.mrf.mxu0
  %v4299 = vadd.f32 0.0, %v4298
  %4300 = vdwg.mxu0
  %v4301 = vadd.f32 %v4145, %v4199
  %v4302 = vadd.f32 %v4146, %v4219
  %v4303 = vadd.f32 %v4147, %v4239
  %v4304 = vadd.f32 %v4148, %v4259
  %v4305 = vadd.f32 %v4149, %v4279
  %v4306 = vadd.f32 %v4150, %v4299
  %v4307 = vld [vmem:[%s8 + $0x40] sm:$0xff]
  %4308 = vrot.lane.b32.xlu0 %v3825, 109
  %v4309 = vpop.permute.xlu0 %4308
  %4310 = vrot.lane.b32.xlu0 %v3826, 109
  %v4311 = vpop.permute.xlu0 %4310
  %4312 = vrot.lane.b32.xlu0 %v3827, 109
  %v4313 = vpop.permute.xlu0 %4312
  %4314 = vrot.lane.b32.xlu0 %v3828, 109
  %v4315 = vpop.permute.xlu0 %4314
  %4316 = vrot.lane.b32.xlu0 %v3829, 109
  %v4317 = vpop.permute.xlu0 %4316
  %4318 = vrot.lane.b32.xlu0 %v3830, 109
  %v4319 = vpop.permute.xlu0 %4318
  %4320 = vrot.lane.b32.xlu0 %v3831, 109
  %v4321 = vpop.permute.xlu0 %4320
  %v4322 = vsel %vm1316, %v4309, %v4311
  %v4323 = vsel %vm1316, %v4311, %v4313
  %v4324 = vsel %vm1316, %v4313, %v4315
  %v4325 = vsel %vm1316, %v4315, %v4317
  %v4326 = vsel %vm1316, %v4317, %v4319
  %v4327 = vsel %vm1316, %v4319, %v4321
  %v4335 = vsel %vm98, %v4307, 0
  %4337 = vmatpush.msra.mxu0 0.0
  %4338 = vmatpush.msra.mxu0 0.0
  %4339 = vmatpush.msra.mxu0 0.0
  %4340 = vmatpush.msra.mxu0 0.0
  %4341 = vmatpush.msra.mxu0 0.0
  %4342 = vmatpush.msra.mxu0 0.0
  %4343 = vmatpush.msra.mxu0 0.0
  %4344 = vmatpush.msra.mxu0 0.0
  %4345 = vmatpush.msra.mxu0 0.0
  %4346 = vmatpush.msra.mxu0 0.0
  %4347 = vmatpush.msra.mxu0 0.0
  %4348 = vmatpush.msra.mxu0 0.0
  %4349 = vmatpush.msra.mxu0 0.0
  %4350 = vmatpush.msra.mxu0 0.0
  %4351 = vmatpush.msra.mxu0 0.0
  %4352 = vmatpush.msra.mxu0 %v4322
  %4353 = vmatmul.f32.gmra.mxu0 %v4335
  %v4354 = vpop.f32.mrf.mxu0
  %v4355 = vadd.f32 0.0, %v4354
  %4356 = vdwg.mxu0
  %4357 = vmatpush.msra.mxu0 0.0
  %4358 = vmatpush.msra.mxu0 0.0
  %4359 = vmatpush.msra.mxu0 0.0
  %4360 = vmatpush.msra.mxu0 0.0
  %4361 = vmatpush.msra.mxu0 0.0
  %4362 = vmatpush.msra.mxu0 0.0
  %4363 = vmatpush.msra.mxu0 0.0
  %4364 = vmatpush.msra.mxu0 0.0
  %4365 = vmatpush.msra.mxu0 0.0
  %4366 = vmatpush.msra.mxu0 0.0
  %4367 = vmatpush.msra.mxu0 0.0
  %4368 = vmatpush.msra.mxu0 0.0
  %4369 = vmatpush.msra.mxu0 0.0
  %4370 = vmatpush.msra.mxu0 0.0
  %4371 = vmatpush.msra.mxu0 0.0
  %4372 = vmatpush.msra.mxu0 %v4323
  %4373 = vmatmul.f32.gmra.mxu0 %v4335
  %v4374 = vpop.f32.mrf.mxu0
  %v4375 = vadd.f32 0.0, %v4374
  %4376 = vdwg.mxu0
  %4377 = vmatpush.msra.mxu0 0.0
  %4378 = vmatpush.msra.mxu0 0.0
  %4379 = vmatpush.msra.mxu0 0.0
  %4380 = vmatpush.msra.mxu0 0.0
  %4381 = vmatpush.msra.mxu0 0.0
  %4382 = vmatpush.msra.mxu0 0.0
  %4383 = vmatpush.msra.mxu0 0.0
  %4384 = vmatpush.msra.mxu0 0.0
  %4385 = vmatpush.msra.mxu0 0.0
  %4386 = vmatpush.msra.mxu0 0.0
  %4387 = vmatpush.msra.mxu0 0.0
  %4388 = vmatpush.msra.mxu0 0.0
  %4389 = vmatpush.msra.mxu0 0.0
  %4390 = vmatpush.msra.mxu0 0.0
  %4391 = vmatpush.msra.mxu0 0.0
  %4392 = vmatpush.msra.mxu0 %v4324
  %4393 = vmatmul.f32.gmra.mxu0 %v4335
  %v4394 = vpop.f32.mrf.mxu0
  %v4395 = vadd.f32 0.0, %v4394
  %4396 = vdwg.mxu0
  %4397 = vmatpush.msra.mxu0 0.0
  %4398 = vmatpush.msra.mxu0 0.0
  %4399 = vmatpush.msra.mxu0 0.0
  %4400 = vmatpush.msra.mxu0 0.0
  %4401 = vmatpush.msra.mxu0 0.0
  %4402 = vmatpush.msra.mxu0 0.0
  %4403 = vmatpush.msra.mxu0 0.0
  %4404 = vmatpush.msra.mxu0 0.0
  %4405 = vmatpush.msra.mxu0 0.0
  %4406 = vmatpush.msra.mxu0 0.0
  %4407 = vmatpush.msra.mxu0 0.0
  %4408 = vmatpush.msra.mxu0 0.0
  %4409 = vmatpush.msra.mxu0 0.0
  %4410 = vmatpush.msra.mxu0 0.0
  %4411 = vmatpush.msra.mxu0 0.0
  %4412 = vmatpush.msra.mxu0 %v4325
  %4413 = vmatmul.f32.gmra.mxu0 %v4335
  %v4414 = vpop.f32.mrf.mxu0
  %v4415 = vadd.f32 0.0, %v4414
  %4416 = vdwg.mxu0
  %4417 = vmatpush.msra.mxu0 0.0
  %4418 = vmatpush.msra.mxu0 0.0
  %4419 = vmatpush.msra.mxu0 0.0
  %4420 = vmatpush.msra.mxu0 0.0
  %4421 = vmatpush.msra.mxu0 0.0
  %4422 = vmatpush.msra.mxu0 0.0
  %4423 = vmatpush.msra.mxu0 0.0
  %4424 = vmatpush.msra.mxu0 0.0
  %4425 = vmatpush.msra.mxu0 0.0
  %4426 = vmatpush.msra.mxu0 0.0
  %4427 = vmatpush.msra.mxu0 0.0
  %4428 = vmatpush.msra.mxu0 0.0
  %4429 = vmatpush.msra.mxu0 0.0
  %4430 = vmatpush.msra.mxu0 0.0
  %4431 = vmatpush.msra.mxu0 0.0
  %4432 = vmatpush.msra.mxu0 %v4326
  %4433 = vmatmul.f32.gmra.mxu0 %v4335
  %v4434 = vpop.f32.mrf.mxu0
  %v4435 = vadd.f32 0.0, %v4434
  %4436 = vdwg.mxu0
  %4437 = vmatpush.msra.mxu0 0.0
  %4438 = vmatpush.msra.mxu0 0.0
  %4439 = vmatpush.msra.mxu0 0.0
  %4440 = vmatpush.msra.mxu0 0.0
  %4441 = vmatpush.msra.mxu0 0.0
  %4442 = vmatpush.msra.mxu0 0.0
  %4443 = vmatpush.msra.mxu0 0.0
  %4444 = vmatpush.msra.mxu0 0.0
  %4445 = vmatpush.msra.mxu0 0.0
  %4446 = vmatpush.msra.mxu0 0.0
  %4447 = vmatpush.msra.mxu0 0.0
  %4448 = vmatpush.msra.mxu0 0.0
  %4449 = vmatpush.msra.mxu0 0.0
  %4450 = vmatpush.msra.mxu0 0.0
  %4451 = vmatpush.msra.mxu0 0.0
  %4452 = vmatpush.msra.mxu0 %v4327
  %4453 = vmatmul.f32.gmra.mxu0 %v4335
  %v4454 = vpop.f32.mrf.mxu0
  %v4455 = vadd.f32 0.0, %v4454
  %4456 = vdwg.mxu0
  %v4457 = vadd.f32 %v4301, %v4355
  %v4458 = vadd.f32 %v4302, %v4375
  %v4459 = vadd.f32 %v4303, %v4395
  %v4460 = vadd.f32 %v4304, %v4415
  %v4461 = vadd.f32 %v4305, %v4435
  %v4462 = vadd.f32 %v4306, %v4455
  %v4463 = vmul.f32 %v4457, %v1459
  %v4464 = vmul.f32 %v4458, %v1460
  %v4465 = vmul.f32 %v4459, %v1461
  %v4466 = vmul.f32 %v4460, %v1462
  %v4467 = vmul.f32 %v4461, %v1463
  %v4468 = vmul.f32 %v4462, %v1464
  %v4469 = vadd.f32 %v4463, %v4464
  %v4470 = vadd.f32 %v4469, %v4465
  %v4471 = vadd.f32 %v4470, %v4466
  %v4472 = vadd.f32 %v4471, %v4467
  %v4473 = vadd.f32 %v4472, %v4468
  %4474 = vadd.xlane.f32.xlu0 %v4473
  %v4475 = vpop.xlane.xlu0 %4474
  %v4476 = vmul.f32 %v4457, %v4457
  %v4477 = vmul.f32 %v4458, %v4458
  %v4478 = vmul.f32 %v4459, %v4459
  %v4479 = vmul.f32 %v4460, %v4460
  %v4480 = vmul.f32 %v4461, %v4461
  %v4481 = vmul.f32 %v4462, %v4462
  %v4482 = vmul.f32 %v4476, %v1459
  %v4483 = vmul.f32 %v4477, %v1460
  %v4484 = vmul.f32 %v4478, %v1461
  %v4485 = vmul.f32 %v4479, %v1462
  %v4486 = vmul.f32 %v4480, %v1463
  %v4487 = vmul.f32 %v4481, %v1464
  %v4488 = vadd.f32 %v4482, %v4483
  %v4489 = vadd.f32 %v4488, %v4484
  %v4490 = vadd.f32 %v4489, %v4485
  %v4491 = vadd.f32 %v4490, %v4486
  %v4492 = vadd.f32 %v4491, %v4487
  %4493 = vadd.xlane.f32.xlu0 %v4492
  %v4494 = vpop.xlane.xlu0 %4493
  %v4495 = vmul.f32 %v4475, 0.001953125
  %v4496 = vmul.f32 %v4494, 0.001953125
  %v4497 = vmul.f32 %v4495, %v4495
  %v4498 = vsub.f32 %v4496, %v4497
  %v4499 = vmax.f32 %v4498, 0.0
  %v4500 = vsub.f32 %v4457, %v4495
  %v4501 = vsub.f32 %v4458, %v4495
  %v4502 = vsub.f32 %v4459, %v4495
  %v4503 = vsub.f32 %v4460, %v4495
  %v4504 = vsub.f32 %v4461, %v4495
  %v4505 = vsub.f32 %v4462, %v4495
  %v4506 = vadd.f32 %v4499, 1e-05
  %v4507 = vrsqrt.pop %v4506
  %v4508 = vmul.f32 %v4507, %v4506
  %v4509 = vmul.f32 %v4508, %v4507
  %v4510 = vmul.f32 0.5, %v4509
  %v4511 = vsub.f32 1.5, %v4510
  %v4512 = vmul.f32 %v4507, %v4511
  %vm4513 = vweird.f32 %v4506
  %vm4514 = vweird.f32 %v4507
  %vm4515 = vmor %vm4513, %vm4514
  %v4516 = vsel %vm4515, %v4507, %v4512
  %v4517 = vmul.f32 %v4500, %v4516
  %v4518 = vmul.f32 %v4501, %v4516
  %v4519 = vmul.f32 %v4502, %v4516
  %v4520 = vmul.f32 %v4503, %v4516
  %v4521 = vmul.f32 %v4504, %v4516
  %v4522 = vmul.f32 %v4505, %v4516
  %v4523 = vld [vmem:[%s9] sm:$0xff]
  %4525 = vset.pattern.permute.xlu0 0
  %4526 = vperm.xlu0 %4525, %v4523
  %v4527 = vpop.permute.xlu0 %4526
  %v4529 = vmul.f32 %v4517, %v4527
  %v4530 = vmul.f32 %v4518, %v4527
  %v4531 = vmul.f32 %v4519, %v4527
  %v4532 = vmul.f32 %v4520, %v4527
  %v4533 = vmul.f32 %v4521, %v4527
  %v4534 = vmul.f32 %v4522, %v4527
  %v4535 = vld [vmem:[%s10] sm:$0xff]
  %4537 = vset.pattern.permute.xlu0 0
  %4538 = vperm.xlu0 %4537, %v4535
  %v4539 = vpop.permute.xlu0 %4538
  %v4541 = vadd.f32 %v4529, %v4539
  %v4542 = vadd.f32 %v4530, %v4539
  %v4543 = vadd.f32 %v4531, %v4539
  %v4544 = vadd.f32 %v4532, %v4539
  %v4545 = vadd.f32 %v4533, %v4539
  %v4546 = vadd.f32 %v4534, %v4539
  %v4547 = vsub.f32 0.0, %v4541
  %v4548 = vsub.f32 0.0, %v4542
  %v4549 = vsub.f32 0.0, %v4543
  %v4550 = vsub.f32 0.0, %v4544
  %v4551 = vsub.f32 0.0, %v4545
  %v4552 = vsub.f32 0.0, %v4546
  %v4553 = vmul.f32 %v4547, 1.442695
  %v4554 = vpow.pop %v4553
  %v4555 = vmul.f32 %v4548, 1.442695
  %v4556 = vpow.pop %v4555
  %v4557 = vmul.f32 %v4549, 1.442695
  %v4558 = vpow.pop %v4557
  %v4559 = vmul.f32 %v4550, 1.442695
  %v4560 = vpow.pop %v4559
  %v4561 = vmul.f32 %v4551, 1.442695
  %v4562 = vpow.pop %v4561
  %v4563 = vmul.f32 %v4552, 1.442695
  %v4564 = vpow.pop %v4563
  %v4565 = vadd.f32 %v4554, 1.0
  %v4566 = vadd.f32 %v4556, 1.0
  %v4567 = vadd.f32 %v4558, 1.0
  %v4568 = vadd.f32 %v4560, 1.0
  %v4569 = vadd.f32 %v4562, 1.0
  %v4570 = vadd.f32 %v4564, 1.0
  %v4571 = vrcp.pop %v4565
  %v4572 = vrcp.pop %v4566
  %v4573 = vrcp.pop %v4567
  %v4574 = vrcp.pop %v4568
  %v4575 = vrcp.pop %v4569
  %v4576 = vrcp.pop %v4570
  %v4577 = vmul.f32 %v4571, %v1459
  %v4578 = vmul.f32 %v4572, %v1460
  %v4579 = vmul.f32 %v4573, %v1461
  %v4580 = vmul.f32 %v4574, %v1462
  %v4581 = vmul.f32 %v4575, %v1463
  %v4582 = vmul.f32 %v4576, %v1464
  %4583 = vst [vmem:[%s11 + $0x8] sm:$0xff] %v4577
  %4584 = vst [vmem:[%s11 + $0x10] sm:$0xff] %v4578
  %4585 = vst [vmem:[%s11 + $0x18] sm:$0xff] %v4579
  %4586 = vst [vmem:[%s11 + $0x20] sm:$0xff] %v4580
  %4587 = vst [vmem:[%s11 + $0x28] sm:$0xff] %v4581
  %4588 = vst [vmem:[%s11 + $0x30] sm:$0xff] %v4582
  // Predicated region
  $region46: #{same_decoder_forward.3} parent=0 // pred_check
    _
  $region47: #{same_decoder_forward.3} parent=0 // pred_check_branch
    %4590 = sbr.rel (0) target = $region49
  $region48: #{same_decoder_forward.3} parent=0 // pred_region
    _
  $region49: #{same_decoder_forward.3} parent=0 // pred_fallthru
    _
  // Predicated region
  $region50: #{same_decoder_forward.3} parent=0 // pred_check
    _
  $region51: #{same_decoder_forward.3} parent=0 // pred_check_branch
    %4592 = sbr.rel (0) target = $region53
  $region52: #{same_decoder_forward.3} parent=0 // pred_region
    _
  $region53: #{same_decoder_forward.3} parent=0 // pred_fallthru
    _

</llo_original>
